<compile_context>
chip_gen: v6e
topology: v6e:2x2x1
jax: 0.10.0
libtpu: 0.0.40
codegen_flags: <defaults>
</compile_context>

<pallas_src>
import functools
import math

import jax
import jax.numpy as jnp
from jax import lax
from jax.experimental import pallas as pl
from jax.experimental.pallas import tpu as pltpu

_TWO_PI = 2.0 * math.pi


# ----------------------------------------------------------------------------
# Pallas kernel: fused upsampling + oscillator bank with streaming phase carry
# ----------------------------------------------------------------------------
def _osc_bank_kernel(freq_ctrl_ref, amp_ctrl_ref, w_ref, wcum_ref, out_ref,
                     carry_ref, *, sample_rate, block_sub):
    # freq_ctrl_ref : (1, Ks, F)   frame-rate harmonic frequencies (Hz)
    # amp_ctrl_ref  : (1, Ks, F)   frame-rate harmonic amplitudes
    # w_ref         : (1, F, T)    per-chunk linear-interp weights
    # wcum_ref      : (1, F, T)    cumsum(w, lanes) * 2*pi/sr  (phase weights)
    # out_ref       : (1, 1, 1, T) audio chunk (partial sum for this harmonic split)
    # carry_ref     : (Ks, 1)      running phase carry, wrapped mod 2*pi
    t = pl.program_id(2)
    T = out_ref.shape[-1]
    n_sub = T // block_sub
    nyquist = sample_rate * 0.5

    @pl.when(t == 0)
    def _():
        carry_ref[...] = jnp.zeros(carry_ref.shape, jnp.float32)

    fc = freq_ctrl_ref[0]          # (Ks, F)
    ac = amp_ctrl_ref[0]           # (Ks, F)
    carry = carry_ref[...]         # (Ks, 1)

    # Sub-tile the sin/mask/mul/sum tail so live (Ks, block_t) f32 temporaries
    # stay well under the 64-vreg budget even at large block_t.
    def body(s, c):
        start = pl.multiple_of(s * block_sub, block_sub)
        w_s = w_ref[0, :, pl.ds(start, block_sub)]        # (F, Ts)
        wc_s = wcum_ref[0, :, pl.ds(start, block_sub)]    # (F, Ts)

        # Tiny (Ks,F)@(F,Ts) matmuls — ~64x less MXU work than the old (T,T) tri.
        freq = jnp.dot(fc, w_s, preferred_element_type=jnp.float32)    # (Ks, Ts) Hz
        amp = jnp.dot(ac, w_s, preferred_element_type=jnp.float32)     # (Ks, Ts)
        phase = jnp.dot(fc, wc_s, preferred_element_type=jnp.float32) + carry

        amp = jnp.where(freq < nyquist, amp, 0.0)          # anti-alias mask
        out_ref[0, 0, 0, pl.ds(start, block_sub)] = jnp.sum(
            amp * jnp.sin(phase), axis=0)

        # Last sub-tile's last column = total chunk phase advance + carry.
        # Wrap mod 2*pi so f32 keeps its mantissa over long signals.
        # (On the final, padded chunk this carry includes the clamped tail; it
        #  is never consumed, so it is harmless — do not reuse across calls.)
        @pl.when(s == n_sub - 1)
        def _():
            last = phase[:, block_sub - 1:block_sub]
            carry_ref[...] = last - _TWO_PI * jnp.floor(last / _TWO_PI)

        return c

    lax.fori_loop(0, n_sub, body, 0, unroll=True)


# ----------------------------------------------------------------------------
# Host-side (plain JAX) precompute of per-chunk interpolation weights
# ----------------------------------------------------------------------------
def _make_interp_weights(n_frames, n_samples, block_t, n_chunks, sample_rate):
    """Returns (w, wcum): each (n_chunks, n_frames, block_t) f32.

    w    : linear-interp weights frame->sample for each chunk's samples.
    wcum : per-chunk cumulative sum of w along the sample axis, pre-scaled by
           2*pi/sr, so phase-within-chunk = freq_ctrl @ wcum (exact f32 cumsum
           lives here, not on the MXU)."""
    n_padded = n_chunks * block_t
    j = jnp.arange(n_padded, dtype=jnp.float32)
    scale = (n_frames - 1.0) / float(max(n_samples - 1, 1))
    src = jnp.minimum(j * scale, n_frames - 1.0)           # clamp padded tail
    lo = jnp.floor(src)
    frac = src - lo
    lo_i = lo.astype(jnp.int32)
    f_idx = jnp.arange(n_frames, dtype=jnp.int32)[:, None]  # (F, 1)
    w = (jnp.where(f_idx == lo_i[None, :], 1.0 - frac[None, :], 0.0)
         + jnp.where(f_idx == lo_i[None, :] + 1, frac[None, :], 0.0))  # (F, Np)
    w3 = w.reshape(n_frames, n_chunks, block_t)
    w_chunks = jnp.transpose(w3, (1, 0, 2))
    wcum_chunks = jnp.transpose(
        jnp.cumsum(w3, axis=-1) * (_TWO_PI / float(sample_rate)), (1, 0, 2))
    return w_chunks.astype(jnp.float32), wcum_chunks.astype(jnp.float32)


def oscillator_bank(freq_ctrl, amp_ctrl, n_samples, sample_rate,
                    block_t=1024, block_sub=512, k_splits=1):
    """freq_ctrl, amp_ctrl: (B, K, frames) frame-rate controls -> audio (B, n_samples).

    k_splits > 1 splits harmonics across a leading "parallel" grid axis so a
    small batch can still occupy both TensorCores on v7x (partials summed in JAX).
    """
    B, K, F = freq_ctrl.shape
    if K % k_splits:
        raise ValueError("k_splits must divide the number of harmonics")
    K_sub = K // k_splits
    block_sub = min(block_sub, block_t)
    assert block_t % block_sub == 0, "block_t must be a multiple of block_sub"
    n_chunks = pl.cdiv(n_samples, block_t)
    n_padded = n_chunks * block_t

    w_chunks, wcum_chunks = _make_interp_weights(
        F, n_samples, block_t, n_chunks, sample_rate)

    kernel = functools.partial(_osc_bank_kernel,
                               sample_rate=float(sample_rate),
                               block_sub=int(block_sub))
    partial_audio = pl.pallas_call(
        kernel,
        out_shape=jax.ShapeDtypeStruct((k_splits, B, 1, n_padded), jnp.float32),
        grid_spec=pltpu.PrefetchScalarGridSpec(
            num_scalar_prefetch=0,
            grid=(k_splits, B, n_chunks),                 # time innermost (carry)
            in_specs=[
                pl.BlockSpec((1, K_sub, F), lambda s, b, t: (b, s, 0)),
                pl.BlockSpec((1, K_sub, F), lambda s, b, t: (b, s, 0)),
                pl.BlockSpec((1, F, block_t), lambda s, b, t: (t, 0, 0)),  # w
                pl.BlockSpec((1, F, block_t), lambda s, b, t: (t, 0, 0)),  # wcum
            ],
            out_specs=pl.BlockSpec((1, 1, 1, block_t), lambda s, b, t: (s, b, 0, t)),
            scratch_shapes=[pltpu.VMEM((K_sub, 1), jnp.float32)],   # phase carry
        ),
        compiler_params=pltpu.CompilerParams(
            dimension_semantics=("parallel", "parallel", "arbitrary")),
    )(freq_ctrl, amp_ctrl, w_chunks, wcum_chunks)

    audio = jnp.sum(partial_audio, axis=0)    # combine harmonic splits (exact)
    return audio[:, 0, :n_samples]


# ----------------------------------------------------------------------------
# Glue (plain JAX): control prep (frame rate only — tiny)
# ----------------------------------------------------------------------------
def get_inharmonic_freq(f0_hz, inharm_coef, n_harmonics):
    """JAX port of ddsp_piano.get_inharmonic_freq (frame-rate, tiny)."""
    f0_hz = f0_hz.astype(jnp.float32)
    k = jnp.linspace(1.0, float(n_harmonics), int(n_harmonics))[None, None, :]
    inharm_factor = jnp.sqrt(k ** 2 * inharm_coef + 1.0)
    return f0_hz * k * inharm_factor, inharm_factor - 1.0


def inharmonic_forward(amplitudes, harmonic_distribution, harmonic_shifts,
                       f0_hz, *, n_samples, sample_rate,
                       block_t=1024, block_sub=512, k_splits=1):
    """InHarmonic.forward: synthesize audio from controls. Returns (B, n_samples)."""
    amplitudes = amplitudes.astype(jnp.float32)
    harmonic_distribution = harmonic_distribution.astype(jnp.float32)
    harmonic_shifts = harmonic_shifts.astype(jnp.float32)
    f0_hz = f0_hz.astype(jnp.float32)

    K = harmonic_distribution.shape[-1]
    ratios = jnp.arange(1, K + 1, dtype=jnp.float32)[None, None, :]   # (1,1,K)
    harmonic_freqs = f0_hz * ratios * (1.0 + harmonic_shifts)          # (B,F,K) Hz
    harmonic_amps = amplitudes * harmonic_distribution                 # (B,F,K)

    # Channels-first frame-rate layout (B, K, frames): harmonics on sublanes,
    # time on lanes inside the kernel. Only these tiny tensors (plus small
    # per-chunk weight slabs) hit HBM — the frame->sample upsampling and the
    # phase cumsum both happen inside the kernel via precomputed weights.
    freq_ctrl = jnp.transpose(harmonic_freqs, (0, 2, 1))
    amp_ctrl = jnp.transpose(harmonic_amps, (0, 2, 1))

    # TODO(synk): DDSP uses overlapping-Hann-window resampling for amplitude
    # envelopes; linear interpolation is used here for both envelopes.
    # TODO(synk): inference-mode angular cumsum (per-frame phase wrap) not implemented.
    return oscillator_bank(freq_ctrl, amp_ctrl, n_samples, sample_rate,
                           block_t=block_t, block_sub=block_sub,
                           k_splits=k_splits)


# ----------------------------------------------------------------------------
# Pure-JAX reference (upsample + cumsum + sin-sum) for the sanity check
# ----------------------------------------------------------------------------
def _linear_upsample(x, n_samples):
    """x: (B, frames, K) -> (B, n_samples, K) by linear interpolation."""
    B, F, K = x.shape
    src = jnp.linspace(0.0, F - 1.0, n_samples)
    lo = jnp.floor(src).astype(jnp.int32)
    hi = jnp.minimum(lo + 1, F - 1)
    w = (src - lo.astype(jnp.float32))[None, :, None]
    return x[:, lo, :] * (1.0 - w) + x[:, hi, :] * w


def _oscillator_bank_ref(freq_env, amp_env, sample_rate):
    nyquist = sample_rate / 2.0
    amp = jnp.where(freq_env < nyquist, amp_env, 0.0)
    omega = freq_env * (2.0 * math.pi / sample_rate)
    phase = jnp.cumsum(omega, axis=1)
    return jnp.sum(amp * jnp.sin(phase), axis=-1)


if __name__ == "__main__":
    B, FRAMES, K = 2, 8, 16
    N_SAMPLES, SAMPLE_RATE = 2000, 16000   # deliberately NOT a multiple of block_t

    key = jax.random.PRNGKey(0)
    k1, k2, k3, k4 = jax.random.split(key, 4)

    amplitudes = jax.random.uniform(k1, (B, FRAMES, 1), minval=0.1, maxval=0.8)
    hd = jax.random.uniform(k2, (B, FRAMES, K), minval=0.0, maxval=1.0)
    harmonic_distribution = hd / jnp.sum(hd, axis=-1, keepdims=True)
    harmonic_shifts = 0.01 * jax.random.normal(k3, (B, FRAMES, K))
    f0_hz = jax.random.uniform(k4, (B, FRAMES, 1), minval=100.0, maxval=300.0)

    # Pure-JAX reference.
    ratios = jnp.arange(1, K + 1, dtype=jnp.float32)[None, None, :]
    freq_env = _linear_upsample(f0_hz * ratios * (1.0 + harmonic_shifts), N_SAMPLES)
    amp_env = _linear_upsample(amplitudes * harmonic_distribution, N_SAMPLES)
    ref = _oscillator_bank_ref(freq_env, amp_env, SAMPLE_RATE)

    # Default path (batch parallel, harmonics together).
    audio = inharmonic_forward(
        amplitudes, harmonic_distribution, harmonic_shifts, f0_hz,
        n_samples=N_SAMPLES, sample_rate=SAMPLE_RATE,
        block_t=1024, block_sub=512)
    audio = jax.block_until_ready(audio)
    assert audio.shape == (B, N_SAMPLES) and audio.dtype == jnp.float32
    err = float(jnp.max(jnp.abs(audio - ref)))
    assert err < 2e-2, f"max abs error {err}"

    # v7x small-batch path: harmonics split across a parallel grid axis.
    audio2 = inharmonic_forward(
        amplitudes, harmonic_distribution, harmonic_shifts, f0_hz,
        n_samples=N_SAMPLES, sample_rate=SAMPLE_RATE,
        block_t=1024, block_sub=512, k_splits=2)
    audio2 = jax.block_until_ready(audio2)
    err2 = float(jnp.max(jnp.abs(audio2 - ref)))
    assert err2 < 2e-2, f"k_splits=2 max abs error {err2}"

    print("KERNEL_OK")
</pallas_src>

<mosaic_0001>
module attributes {stable_mosaic.version = 11 : i64} {
  func.func @_osc_bank_kernel(%arg0: i32, %arg1: i32, %arg2: i32, %arg3: memref<1x16x8xf32, #tpu.memory_space<vmem>>, %arg4: memref<1x16x8xf32, #tpu.memory_space<vmem>>, %arg5: memref<1x8x1024xf32, #tpu.memory_space<vmem>>, %arg6: memref<1x8x1024xf32, #tpu.memory_space<vmem>>, %arg7: memref<1x1x1x1024xf32, #tpu.memory_space<vmem>>, %arg8: memref<16x1xf32, #tpu.memory_space<vmem>>) attributes {dimension_semantics = [#tpu.dimension_semantics<parallel>, #tpu.dimension_semantics<parallel>, #tpu.dimension_semantics<arbitrary>], iteration_bounds = array<i64: 1, 2, 2>, scalar_prefetch = 0 : i64, scratch_operands = 1 : i64, tpu.core_type = #tpu.core_type<tc>, window_params = [{transform_indices = @transform_0, window_bounds = array<i64: 1, 16, 8>}, {transform_indices = @transform_1, window_bounds = array<i64: 1, 16, 8>}, {transform_indices = @transform_2, window_bounds = array<i64: 1, 8, 1024>}, {transform_indices = @transform_3, window_bounds = array<i64: 1, 8, 1024>}, {transform_indices = @transform_4, window_bounds = array<i64: 1, 1, 1, 1024>}]} {
    %c0_i32 = arith.constant 0 : i32
    %0 = arith.cmpi eq, %arg2, %c0_i32 : i32
    %1 = arith.extui %0 : i1 to i32
    %c0_i32_0 = arith.constant 0 : i32
    %2 = arith.cmpi ne, %1, %c0_i32_0 : i32
    scf.if %2 {
      %cst_39 = arith.constant 0.000000e+00 : f32
      %62 = vector.broadcast %cst_39 : f32 to vector<16x1xf32>
      %c0_40 = arith.constant 0 : index
      %c0_41 = arith.constant 0 : index
      %63 = vector.load %arg8[%c0_40, %c0_41] : memref<16x1xf32, #tpu.memory_space<vmem>>, vector<16x1xf32>
      tpu.vector_store %arg8[%c0_40, %c0_41], %62 {strides = array<i32>} : memref<16x1xf32, #tpu.memory_space<vmem>>, vector<16x1xf32>,
    } else {
    }
    %c0 = arith.constant 0 : index
    %c0_1 = arith.constant 0 : index
    %c0_2 = arith.constant 0 : index
    %3 = vector.load %arg3[%c0, %c0_1, %c0_2] : memref<1x16x8xf32, #tpu.memory_space<vmem>>, vector<1x16x8xf32>
    %4 = vector.shape_cast %3 : vector<1x16x8xf32> to vector<16x8xf32>
    %c0_3 = arith.constant 0 : index
    %c0_4 = arith.constant 0 : index
    %c0_5 = arith.constant 0 : index
    %5 = vector.load %arg4[%c0_3, %c0_4, %c0_5] : memref<1x16x8xf32, #tpu.memory_space<vmem>>, vector<1x16x8xf32>
    %6 = vector.shape_cast %5 : vector<1x16x8xf32> to vector<16x8xf32>
    %c0_6 = arith.constant 0 : index
    %c0_7 = arith.constant 0 : index
    %7 = vector.load %arg8[%c0_6, %c0_7] : memref<16x1xf32, #tpu.memory_space<vmem>>, vector<16x1xf32>
    %c0_i32_8 = arith.constant 0 : i32
    %c512_i32 = arith.constant 512 : i32
    %8 = arith.muli %c0_i32_8, %c512_i32 : i32
    %9 = tpu.assume_multiple %8, 512 : i32
    %c0_9 = arith.constant 0 : index
    %c0_10 = arith.constant 0 : index
    %10 = arith.index_cast %9 : i32 to index
    %11 = vector.load %arg5[%c0_9, %c0_10, %10] : memref<1x8x1024xf32, #tpu.memory_space<vmem>>, vector<1x8x512xf32>
    %12 = vector.shape_cast %11 : vector<1x8x512xf32> to vector<8x512xf32>
    %c0_11 = arith.constant 0 : index
    %c0_12 = arith.constant 0 : index
    %13 = arith.index_cast %9 : i32 to index
    %14 = vector.load %arg6[%c0_11, %c0_12, %13] : memref<1x8x1024xf32, #tpu.memory_space<vmem>>, vector<1x8x512xf32>
    %15 = vector.shape_cast %14 : vector<1x8x512xf32> to vector<8x512xf32>
    %cst = arith.constant dense<0.000000e+00> : vector<16x512xf32>
    %16 = tpu.matmul %4, %12, %cst {dimension_numbers = #tpu.dot_dimension_numbers<[1], [0], [0], [1], [0, 0, 1, 1], [], []>} : vector<16x8xf32>, vector<8x512xf32>, vector<16x512xf32> -> vector<16x512xf32>
    %cst_13 = arith.constant dense<0.000000e+00> : vector<16x512xf32>
    %17 = tpu.matmul %6, %12, %cst_13 {dimension_numbers = #tpu.dot_dimension_numbers<[1], [0], [0], [1], [0, 0, 1, 1], [], []>} : vector<16x8xf32>, vector<8x512xf32>, vector<16x512xf32> -> vector<16x512xf32>
    %cst_14 = arith.constant dense<0.000000e+00> : vector<16x512xf32>
    %18 = tpu.matmul %4, %15, %cst_14 {dimension_numbers = #tpu.dot_dimension_numbers<[1], [0], [0], [1], [0, 0, 1, 1], [], []>} : vector<16x8xf32>, vector<8x512xf32>, vector<16x512xf32> -> vector<16x512xf32>
    %19 = vector.broadcast %7 : vector<16x1xf32> to vector<16x512xf32>
    %20 = arith.addf %18, %19 : vector<16x512xf32>
    %cst_15 = arith.constant 8.000000e+03 : f32
    %21 = vector.broadcast %cst_15 : f32 to vector<16x512xf32>
    %22 = arith.cmpf olt, %16, %21 : vector<16x512xf32>
    %cst_16 = arith.constant 0.000000e+00 : f32
    %23 = vector.broadcast %cst_16 : f32 to vector<16x512xf32>
    %24 = arith.select %22, %17, %23 : vector<16x512xi1>, vector<16x512xf32>
    %25 = math.sin %20 : vector<16x512xf32>
    %26 = arith.mulf %24, %25 : vector<16x512xf32>
    %cst_17 = arith.constant dense<0.000000e+00> : vector<512xf32>
    %27 = vector.multi_reduction <add>, %26, %cst_17 [0] : vector<16x512xf32> to vector<512xf32>
    %c0_18 = arith.constant 0 : index
    %c0_19 = arith.constant 0 : index
    %c0_20 = arith.constant 0 : index
    %28 = arith.index_cast %9 : i32 to index
    %29 = vector.load %arg7[%c0_18, %c0_19, %c0_20, %28] : memref<1x1x1x1024xf32, #tpu.memory_space<vmem>>, vector<1x1x1x512xf32>
    %30 = vector.shape_cast %29 : vector<1x1x1x512xf32> to vector<512xf32>
    %31 = vector.shape_cast %27 : vector<512xf32> to vector<1x1x1x512xf32>
    tpu.vector_store %arg7[%c0_18, %c0_19, %c0_20, %28], %31 {strides = array<i32>} : memref<1x1x1x1024xf32, #tpu.memory_space<vmem>>, vector<1x1x1x512xf32>,
    %c1_i32 = arith.constant 1 : i32
    %32 = arith.cmpi eq, %c0_i32_8, %c1_i32 : i32
    %33 = arith.extui %32 : i1 to i32
    %c0_i32_21 = arith.constant 0 : i32
    %34 = arith.cmpi ne, %33, %c0_i32_21 : i32
    scf.if %34 {
      %62 = vector.extract_strided_slice %20 {offsets = [0, 511], sizes = [16, 1], strides = [1, 1]} : vector<16x512xf32> to vector<16x1xf32>
      %cst_39 = arith.constant 6.28318548 : f32
      %63 = vector.broadcast %cst_39 : f32 to vector<16x1xf32>
      %64 = arith.divf %62, %63 : vector<16x1xf32>
      %65 = math.floor %64 : vector<16x1xf32>
      %cst_40 = arith.constant 6.28318548 : f32
      %66 = vector.broadcast %cst_40 : f32 to vector<16x1xf32>
      %67 = arith.mulf %66, %65 : vector<16x1xf32>
      %68 = arith.subf %62, %67 : vector<16x1xf32>
      %c0_41 = arith.constant 0 : index
      %c0_42 = arith.constant 0 : index
      %69 = vector.load %arg8[%c0_41, %c0_42] : memref<16x1xf32, #tpu.memory_space<vmem>>, vector<16x1xf32>
      tpu.vector_store %arg8[%c0_41, %c0_42], %68 {strides = array<i32>} : memref<16x1xf32, #tpu.memory_space<vmem>>, vector<16x1xf32>,
    } else {
    }
    %c1_i32_22 = arith.constant 1 : i32
    %c512_i32_23 = arith.constant 512 : i32
    %35 = arith.muli %c1_i32_22, %c512_i32_23 : i32
    %36 = tpu.assume_multiple %35, 512 : i32
    %c0_24 = arith.constant 0 : index
    %c0_25 = arith.constant 0 : index
    %37 = arith.index_cast %36 : i32 to index
    %38 = vector.load %arg5[%c0_24, %c0_25, %37] : memref<1x8x1024xf32, #tpu.memory_space<vmem>>, vector<1x8x512xf32>
    %39 = vector.shape_cast %38 : vector<1x8x512xf32> to vector<8x512xf32>
    %c0_26 = arith.constant 0 : index
    %c0_27 = arith.constant 0 : index
    %40 = arith.index_cast %36 : i32 to index
    %41 = vector.load %arg6[%c0_26, %c0_27, %40] : memref<1x8x1024xf32, #tpu.memory_space<vmem>>, vector<1x8x512xf32>
    %42 = vector.shape_cast %41 : vector<1x8x512xf32> to vector<8x512xf32>
    %cst_28 = arith.constant dense<0.000000e+00> : vector<16x512xf32>
    %43 = tpu.matmul %4, %39, %cst_28 {dimension_numbers = #tpu.dot_dimension_numbers<[1], [0], [0], [1], [0, 0, 1, 1], [], []>} : vector<16x8xf32>, vector<8x512xf32>, vector<16x512xf32> -> vector<16x512xf32>
    %cst_29 = arith.constant dense<0.000000e+00> : vector<16x512xf32>
    %44 = tpu.matmul %6, %39, %cst_29 {dimension_numbers = #tpu.dot_dimension_numbers<[1], [0], [0], [1], [0, 0, 1, 1], [], []>} : vector<16x8xf32>, vector<8x512xf32>, vector<16x512xf32> -> vector<16x512xf32>
    %cst_30 = arith.constant dense<0.000000e+00> : vector<16x512xf32>
    %45 = tpu.matmul %4, %42, %cst_30 {dimension_numbers = #tpu.dot_dimension_numbers<[1], [0], [0], [1], [0, 0, 1, 1], [], []>} : vector<16x8xf32>, vector<8x512xf32>, vector<16x512xf32> -> vector<16x512xf32>
    %46 = vector.broadcast %7 : vector<16x1xf32> to vector<16x512xf32>
    %47 = arith.addf %45, %46 : vector<16x512xf32>
    %cst_31 = arith.constant 8.000000e+03 : f32
    %48 = vector.broadcast %cst_31 : f32 to vector<16x512xf32>
    %49 = arith.cmpf olt, %43, %48 : vector<16x512xf32>
    %cst_32 = arith.constant 0.000000e+00 : f32
    %50 = vector.broadcast %cst_32 : f32 to vector<16x512xf32>
    %51 = arith.select %49, %44, %50 : vector<16x512xi1>, vector<16x512xf32>
    %52 = math.sin %47 : vector<16x512xf32>
    %53 = arith.mulf %51, %52 : vector<16x512xf32>
    %cst_33 = arith.constant dense<0.000000e+00> : vector<512xf32>
    %54 = vector.multi_reduction <add>, %53, %cst_33 [0] : vector<16x512xf32> to vector<512xf32>
    %c0_34 = arith.constant 0 : index
    %c0_35 = arith.constant 0 : index
    %c0_36 = arith.constant 0 : index
    %55 = arith.index_cast %36 : i32 to index
    %56 = vector.load %arg7[%c0_34, %c0_35, %c0_36, %55] : memref<1x1x1x1024xf32, #tpu.memory_space<vmem>>, vector<1x1x1x512xf32>
    %57 = vector.shape_cast %56 : vector<1x1x1x512xf32> to vector<512xf32>
    %58 = vector.shape_cast %54 : vector<512xf32> to vector<1x1x1x512xf32>
    tpu.vector_store %arg7[%c0_34, %c0_35, %c0_36, %55], %58 {strides = array<i32>} : memref<1x1x1x1024xf32, #tpu.memory_space<vmem>>, vector<1x1x1x512xf32>,
    %c1_i32_37 = arith.constant 1 : i32
    %59 = arith.cmpi eq, %c1_i32_22, %c1_i32_37 : i32
    %60 = arith.extui %59 : i1 to i32
    %c0_i32_38 = arith.constant 0 : i32
    %61 = arith.cmpi ne, %60, %c0_i32_38 : i32
    scf.if %61 {
      %62 = vector.extract_strided_slice %47 {offsets = [0, 511], sizes = [16, 1], strides = [1, 1]} : vector<16x512xf32> to vector<16x1xf32>
      %cst_39 = arith.constant 6.28318548 : f32
      %63 = vector.broadcast %cst_39 : f32 to vector<16x1xf32>
      %64 = arith.divf %62, %63 : vector<16x1xf32>
      %65 = math.floor %64 : vector<16x1xf32>
      %cst_40 = arith.constant 6.28318548 : f32
      %66 = vector.broadcast %cst_40 : f32 to vector<16x1xf32>
      %67 = arith.mulf %66, %65 : vector<16x1xf32>
      %68 = arith.subf %62, %67 : vector<16x1xf32>
      %c0_41 = arith.constant 0 : index
      %c0_42 = arith.constant 0 : index
      %69 = vector.load %arg8[%c0_41, %c0_42] : memref<16x1xf32, #tpu.memory_space<vmem>>, vector<16x1xf32>
      tpu.vector_store %arg8[%c0_41, %c0_42], %68 {strides = array<i32>} : memref<16x1xf32, #tpu.memory_space<vmem>>, vector<16x1xf32>,
    } else {
    }
    %c2_i32 = arith.constant 2 : i32
    return
  }
  func.func @transform_0(%arg0: i32, %arg1: i32, %arg2: i32) -> (i32, i32, i32) {
    %c0_i32 = arith.constant 0 : i32
    %c0_i32_0 = arith.constant 0 : i32
    return %arg1, %arg0, %c0_i32 : i32, i32, i32
  }
  func.func @transform_1(%arg0: i32, %arg1: i32, %arg2: i32) -> (i32, i32, i32) {
    %c0_i32 = arith.constant 0 : i32
    %c0_i32_0 = arith.constant 0 : i32
    return %arg1, %arg0, %c0_i32 : i32, i32, i32
  }
  func.func @transform_2(%arg0: i32, %arg1: i32, %arg2: i32) -> (i32, i32, i32) {
    %c0_i32 = arith.constant 0 : i32
    %c0_i32_0 = arith.constant 0 : i32
    %c0_i32_1 = arith.constant 0 : i32
    return %arg2, %c0_i32, %c0_i32_0 : i32, i32, i32
  }
  func.func @transform_3(%arg0: i32, %arg1: i32, %arg2: i32) -> (i32, i32, i32) {
    %c0_i32 = arith.constant 0 : i32
    %c0_i32_0 = arith.constant 0 : i32
    %c0_i32_1 = arith.constant 0 : i32
    return %arg2, %c0_i32, %c0_i32_0 : i32, i32, i32
  }
  func.func @transform_4(%arg0: i32, %arg1: i32, %arg2: i32) -> (i32, i32, i32, i32) {
    %c0_i32 = arith.constant 0 : i32
    %c0_i32_0 = arith.constant 0 : i32
    return %arg0, %arg1, %c0_i32, %arg2 : i32, i32, i32, i32
  }
}

</mosaic_0001>

<llo_original>
// kernel: tpu_custom_call.1
$region0: #{tpu_custom_call.1}
  #allocation0 [shape = 'u32[]', space=smem, size = 0x4, offset = 0x4, fixed_abs, tag = 'smem constant byte address 0x4 - core index']
  #allocation1 [shape = 'u32[144,128]{1,0:T(1,128)}', space=vmem, size = 0x12000, scoped, tag = 'internal scratch']
  #allocation2 [shape = 'f32[16,1]{1,0:T(8,128)}', space=vmem, size = 0x2000, scoped, tag = 'scratch operand']
  %s0 = inlined_call_operand.vmem [shape: f32[2,16,8], index: 0, kind: input, shape index: {}]
  %s1 = inlined_call_operand.vmem [shape: f32[2,16,8], index: 1, kind: input, shape index: {}]
  %s2 = inlined_call_operand.hbm [shape: f32[2,8,1024], index: 2, kind: input, shape index: {}]
  %s3 = inlined_call_operand.hbm [shape: f32[2,8,1024], index: 3, kind: input, shape index: {}]
  %s4 = inlined_call_operand.hbm [shape: f32[1,2,1,2048], index: 4, kind: output, shape index: {}]
  %s5 = sld [smem:[#allocation0]]
  $region61: #{tpu_custom_call.1} parent=0
    _
  %s7 = ssub.s32 1, %s5
  %s8 = scalar_select 0, %s7, %s5
  $region1: #{tpu_custom_call.1} parent=0
    #allocation3 [shape = 'u8[65536]{0}', space=vmem, size = 0x10000, scoped, tag = 'input window, operand 2']
    #allocation4 [shape = 's32[2]{0}', space=sflag, size = 0x8, scoped, tag = 'scoped memory for tpu_custom_call.1']
    #allocation5 [shape = 's32[2]{0}', space=sflag, size = 0x8, scoped, tag = 'scoped memory for tpu_custom_call.1']
    #allocation6 [shape = 'u8[65536]{0}', space=vmem, size = 0x10000, scoped, tag = 'input window, operand 3']
    #allocation7 [shape = 's32[2]{0}', space=sflag, size = 0x8, scoped, tag = 'scoped memory for tpu_custom_call.1']
    #allocation8 [shape = 'u8[8192]{0}', space=vmem, size = 0x2000, scoped, tag = 'output window, operand 0']
    %9 = vsyncpa [#allocation4], 0
    %s10 = scalar_lea.sflag [#allocation4], 1
    %11 = vsyncpa %s10, 0
    %12 = vsyncpa [#allocation7], 0
    %s13 = scalar_lea.sflag [#allocation7], 1
    %14 = vsyncpa %s13, 0
    %15 = vsyncpa [#allocation5], 0
    %s16 = scalar_lea.sflag [#allocation5], 1
    %17 = vsyncpa %s16, 0
    loop: start=0, step=1, limit=6
    $region2: #{tpu_custom_call.1} parent=1 // loop_pre_header
      _
    $region3: #{tpu_custom_call.1} parent=1 // loop_header
      %s19 = sphi 0, %s23
      %p20 = scmp.ge.s32.totalorder %s19, 6
      %s26 = sphi 0, %s45
      %s27 = sphi 0, %s41
      %s28 = sphi 0, %s37
      %s29 = sphi 0, %s26
      %s30 = sphi 0, %s27
      %s31 = sphi 0, %s28
      %s32 = sphi 0, %s29
      %s33 = sphi 0, %s30
      %s34 = sphi 0, %s31
      %s50 = sphi 0, %s52
      %s53 = sphi 0, %s50
      %s54 = sphi 0, %s53
      %s70 = sphi 0, %s54
      %s78 = sphi 0, %s80
      %s81 = sphi 0, %s78
      %s82 = sphi 0, %s81
      %s98 = sphi 0, %s82
      %s104 = sphi 0, %s106
      %s107 = sphi 0, %s104
      %s108 = sphi 0, %s107
      %s124 = sphi 0, %s108
      %s130 = sphi 0, %s132
      %s133 = sphi 0, %s130
      %s134 = sphi 0, %s133
      %s150 = sphi 0, %s134
      %s160 = sphi 0, %s162
      %s163 = sphi 0, %s160
      %s164 = sphi 0, %s163
      %s180 = sphi 0, %s164
    $region4: #{tpu_custom_call.1} parent=1 // loop_header_branch
      %22 = sbr.rel (%p20) target = $region8
    $region5: #{tpu_custom_call.1} parent=1 // loop_body
      %s24 = ssub.s32 %s19, 1
      %s25 = ssub.s32 %s19, 2
      %s35 = sadd.s32 1, %s28
      %p36 = scmp.ge.s32.totalorder %s35, 2
      %s37 = scalar_select %p36, 0, %s35
      %s38 = sadd.s32 1, %s27
      %s39 = scalar_select %p36, %s38, %s27
      %p40 = scmp.ge.s32.totalorder %s39, 2
      %s41 = scalar_select %p40, 0, %s39
      %s42 = sadd.s32 1, %s26
      %s43 = scalar_select %p40, %s42, %s26
      %p44 = scmp.ge.s32.totalorder %s43, 1
      %s45 = scalar_select %p44, 0, %s43
      %s46 = ssub.s32 %s27, %s41
      %s47 = ssub.s32 %s26, %s45
      %s48 = sor.u32 %s46, %s47
      %p49 = scmp.eq.s32.totalorder %s48, 0
      %s51 = sadd.s32 %s50, 1
      %s52 = scalar_select %p49, %s50, %s51
      %p55 = pneg %p49
      %p56 = scmp.eq.s32.totalorder %s19, 3
      %p57 = por %p55, %p56
      %p58 = scmp.ne.s32.totalorder %s50, %s53
      %p59 = scmp.eq.s32.totalorder %s19, 0
      %p60 = por %p58, %p59
      %p61 = scmp.ne.s32.totalorder %s50, %s53
      %p62 = scmp.eq.s32.totalorder %s24, 3
      %p63 = por %p61, %p62
      %p64 = scmp.ne.s32.totalorder %s53, %s54
      %p65 = scmp.eq.s32.totalorder %s24, 0
      %p66 = por %p64, %p65
      %p67 = scmp.ne.s32.totalorder %s53, %s54
      %p68 = scmp.eq.s32.totalorder %s25, 3
      %p69 = por %p67, %p68
      %p71 = scmp.ne.s32.totalorder %s54, %s70
      %p72 = scmp.eq.s32.totalorder %s25, 0
      %p73 = por %p71, %p72
      %s74 = ssub.s32 %s27, %s41
      %s75 = ssub.s32 %s26, %s45
      %s76 = sor.u32 %s74, %s75
      %p77 = scmp.eq.s32.totalorder %s76, 0
      %s79 = sadd.s32 %s78, 1
      %s80 = scalar_select %p77, %s78, %s79
      %p83 = pneg %p77
      %p84 = scmp.eq.s32.totalorder %s19, 3
      %p85 = por %p83, %p84
      %p86 = scmp.ne.s32.totalorder %s78, %s81
      %p87 = scmp.eq.s32.totalorder %s19, 0
      %p88 = por %p86, %p87
      %p89 = scmp.ne.s32.totalorder %s78, %s81
      %p90 = scmp.eq.s32.totalorder %s24, 3
      %p91 = por %p89, %p90
      %p92 = scmp.ne.s32.totalorder %s81, %s82
      %p93 = scmp.eq.s32.totalorder %s24, 0
      %p94 = por %p92, %p93
      %p95 = scmp.ne.s32.totalorder %s81, %s82
      %p96 = scmp.eq.s32.totalorder %s25, 3
      %p97 = por %p95, %p96
      %p99 = scmp.ne.s32.totalorder %s82, %s98
      %p100 = scmp.eq.s32.totalorder %s25, 0
      %p101 = por %p99, %p100
      %s102 = ssub.s32 %s28, %s37
      %p103 = scmp.eq.s32.totalorder %s102, 0
      %s105 = sadd.s32 %s104, 1
      %s106 = scalar_select %p103, %s104, %s105
      %p109 = pneg %p103
      %p110 = scmp.eq.s32.totalorder %s19, 3
      %p111 = por %p109, %p110
      %p112 = scmp.ne.s32.totalorder %s104, %s107
      %p113 = scmp.eq.s32.totalorder %s19, 0
      %p114 = por %p112, %p113
      %p115 = scmp.ne.s32.totalorder %s104, %s107
      %p116 = scmp.eq.s32.totalorder %s24, 3
      %p117 = por %p115, %p116
      %p118 = scmp.ne.s32.totalorder %s107, %s108
      %p119 = scmp.eq.s32.totalorder %s24, 0
      %p120 = por %p118, %p119
      %p121 = scmp.ne.s32.totalorder %s107, %s108
      %p122 = scmp.eq.s32.totalorder %s25, 3
      %p123 = por %p121, %p122
      %p125 = scmp.ne.s32.totalorder %s108, %s124
      %p126 = scmp.eq.s32.totalorder %s25, 0
      %p127 = por %p125, %p126
      %s128 = ssub.s32 %s28, %s37
      %p129 = scmp.eq.s32.totalorder %s128, 0
      %s131 = sadd.s32 %s130, 1
      %s132 = scalar_select %p129, %s130, %s131
      %p135 = pneg %p129
      %p136 = scmp.eq.s32.totalorder %s19, 3
      %p137 = por %p135, %p136
      %p138 = scmp.ne.s32.totalorder %s130, %s133
      %p139 = scmp.eq.s32.totalorder %s19, 0
      %p140 = por %p138, %p139
      %p141 = scmp.ne.s32.totalorder %s130, %s133
      %p142 = scmp.eq.s32.totalorder %s24, 3
      %p143 = por %p141, %p142
      %p144 = scmp.ne.s32.totalorder %s133, %s134
      %p145 = scmp.eq.s32.totalorder %s24, 0
      %p146 = por %p144, %p145
      %p147 = scmp.ne.s32.totalorder %s133, %s134
      %p148 = scmp.eq.s32.totalorder %s25, 3
      %p149 = por %p147, %p148
      %p151 = scmp.ne.s32.totalorder %s134, %s150
      %p152 = scmp.eq.s32.totalorder %s25, 0
      %p153 = por %p151, %p152
      %s154 = ssub.s32 %s26, %s45
      %s155 = ssub.s32 %s27, %s41
      %s156 = sor.u32 %s154, %s155
      %s157 = ssub.s32 %s28, %s37
      %s158 = sor.u32 %s156, %s157
      %p159 = scmp.eq.s32.totalorder %s158, 0
      %s161 = sadd.s32 %s160, 1
      %s162 = scalar_select %p159, %s160, %s161
      %p165 = pneg %p159
      %p166 = scmp.eq.s32.totalorder %s19, 3
      %p167 = por %p165, %p166
      %p168 = scmp.ne.s32.totalorder %s160, %s163
      %p169 = scmp.eq.s32.totalorder %s19, 0
      %p170 = por %p168, %p169
      %p171 = scmp.ne.s32.totalorder %s160, %s163
      %p172 = scmp.eq.s32.totalorder %s24, 3
      %p173 = por %p171, %p172
      %p174 = scmp.ne.s32.totalorder %s163, %s164
      %p175 = scmp.eq.s32.totalorder %s24, 0
      %p176 = por %p174, %p175
      %p177 = scmp.ne.s32.totalorder %s163, %s164
      %p178 = scmp.eq.s32.totalorder %s25, 3
      %p179 = por %p177, %p178
      %p181 = scmp.ne.s32.totalorder %s164, %s180
      %p182 = scmp.eq.s32.totalorder %s25, 0
      %p183 = por %p181, %p182
      %p184 = scmp.le.s32.totalorder 1, %s19
      %p185 = scmp.lt.s32.totalorder %s19, 5
      %p186 = pnand %p184, %p185
      %p187 = pneg %p186
      // Predicated region
      $region9: #{tpu_custom_call.1} parent=5 // pred_check
        _
      $region10: #{tpu_custom_call.1} parent=5 // pred_check_branch
        %189 = sbr.rel (%p186) target = $region12
      $region11: #{tpu_custom_call.1} parent=5 // pred_region
        %s190 = ssub.s32 %s19, 1
      $region12: #{tpu_custom_call.1} parent=5 // pred_fallthru
        _
      %p191 = scmp.lt.s32.totalorder %s19, 4
      // Predicated region
      $region13: #{tpu_custom_call.1} parent=5 // pred_check
        %p192 = pneg %p191
      $region14: #{tpu_custom_call.1} parent=5 // pred_check_branch
        %194 = sbr.rel (%p192) target = $region16
      $region15: #{tpu_custom_call.1} parent=5 // pred_region
        // Predicated region
        $region17: #{tpu_custom_call.1} parent=15 // pred_check
          %p195 = pneg %p60
        $region18: #{tpu_custom_call.1} parent=15 // pred_check_branch
          %197 = sbr.rel (%p195) target = $region20
        $region19: #{tpu_custom_call.1} parent=15 // pred_region
          %s198 = smul.u32 2, %s26
          %p199 = scmp.lt.s32.totalorder %s27, 1
          %s200 = scalar_select %p199, %s27, 1
          %p201 = scmp.lt.s32.totalorder %s198, 1
          %s202 = scalar_select %p201, %s198, 1
          %s203 = smul.addr %s200, 2
          %s204 = sadd.s32 %s202, %s203
          %s205 = smul.addr %s204, 8
          %s206 = scalar_lea.vmem %s0, %s205
          %s207 = smul.u32 2, %s26
        $region20: #{tpu_custom_call.1} parent=15 // pred_fallthru
          _
        // Predicated region
        $region21: #{tpu_custom_call.1} parent=15 // pred_check
          %p208 = pneg %p88
        $region22: #{tpu_custom_call.1} parent=15 // pred_check_branch
          %210 = sbr.rel (%p208) target = $region24
        $region23: #{tpu_custom_call.1} parent=15 // pred_region
          %s211 = smul.u32 2, %s26
          %p212 = scmp.lt.s32.totalorder %s27, 1
          %s213 = scalar_select %p212, %s27, 1
          %p214 = scmp.lt.s32.totalorder %s211, 1
          %s215 = scalar_select %p214, %s211, 1
          %s216 = smul.addr %s213, 2
          %s217 = sadd.s32 %s215, %s216
          %s218 = smul.addr %s217, 8
          %s219 = scalar_lea.vmem %s1, %s218
          %s220 = smul.u32 2, %s26
        $region24: #{tpu_custom_call.1} parent=15 // pred_fallthru
          _
        // Predicated region
        $region25: #{tpu_custom_call.1} parent=15 // pred_check
          %p221 = pneg %p114
        $region26: #{tpu_custom_call.1} parent=15 // pred_check_branch
          %223 = sbr.rel (%p221) target = $region28
        $region27: #{tpu_custom_call.1} parent=15 // pred_region
          %s224 = sand.u32 %s104, 1
          %s225 = scalar_lea.sflag [#allocation4], %s224
          %s226 = sand.u32 %s104, 1
          %s227 = smul.addr %s226, 64
          %s228 = scalar_lea.vmem [#allocation3], %s227
          %s230 = ssub.s32 1024, 1024
          %231 = vsyncadd %s225, %s230
          %s232 = smul.addr %s28, 8
          %s233 = smul.addr %s232, 128
          %s234 = scalar_lea.hbm %s2, %s233
          %s236 = sshll.u32 %s228, 4
          %s237 = int_to_ptr.vmem [resolvable:$true] %s236
          %239 = dma.hbm_to_vmem [thread:$0]  %s234, 1024, %s237, %s225
        $region28: #{tpu_custom_call.1} parent=15 // pred_fallthru
          _
        // Predicated region
        $region29: #{tpu_custom_call.1} parent=15 // pred_check
          %p240 = pneg %p140
        $region30: #{tpu_custom_call.1} parent=15 // pred_check_branch
          %242 = sbr.rel (%p240) target = $region32
        $region31: #{tpu_custom_call.1} parent=15 // pred_region
          %s243 = sand.u32 %s130, 1
          %s244 = scalar_lea.sflag [#allocation7], %s243
          %s245 = sand.u32 %s130, 1
          %s246 = smul.addr %s245, 64
          %s247 = scalar_lea.vmem [#allocation6], %s246
          %s249 = ssub.s32 1024, 1024
          %250 = vsyncadd %s244, %s249
          %s251 = smul.addr %s28, 8
          %s252 = smul.addr %s251, 128
          %s253 = scalar_lea.hbm %s3, %s252
          %s255 = sshll.u32 %s247, 4
          %s256 = int_to_ptr.vmem [resolvable:$true] %s255
          %258 = dma.hbm_to_vmem [thread:$0]  %s253, 1024, %s256, %s244
        $region32: #{tpu_custom_call.1} parent=15 // pred_fallthru
          _
      $region16: #{tpu_custom_call.1} parent=5 // pred_fallthru
        _
      %p259 = scmp.le.s32.totalorder 1, %s19
      %p260 = scmp.lt.s32.totalorder %s19, 5
      %p261 = pnand %p259, %p260
      %p262 = pneg %p261
      // Predicated region
      $region33: #{tpu_custom_call.1} parent=5 // pred_check
        _
      $region34: #{tpu_custom_call.1} parent=5 // pred_check_branch
        %264 = sbr.rel (%p261) target = $region36
      $region35: #{tpu_custom_call.1} parent=5 // pred_region
        %s265 = ssub.s32 %s19, 1
        %s266 = sand.u32 %s107, 1
        %s267 = scalar_lea.sflag [#allocation4], %s266
        %s268 = sand.u32 %s107, 1
        %s269 = smul.addr %s268, 64
        %s270 = scalar_lea.vmem [#allocation3], %s269
        // Predicated region
        $region37: #{tpu_custom_call.1} parent=35 // pred_check
          %p271 = pneg %p120
        $region38: #{tpu_custom_call.1} parent=35 // pred_check_branch
          %273 = sbr.rel (%p271) target = $region40
        $region39: #{tpu_custom_call.1} parent=35 // pred_region
          %274 = dma.done %s267, 1024
        $region40: #{tpu_custom_call.1} parent=35 // pred_fallthru
          _
        %s275 = sand.u32 %s133, 1
        %s276 = scalar_lea.sflag [#allocation7], %s275
        %s277 = sand.u32 %s133, 1
        %s278 = smul.addr %s277, 64
        %s279 = scalar_lea.vmem [#allocation6], %s278
        // Predicated region
        $region41: #{tpu_custom_call.1} parent=35 // pred_check
          %p280 = pneg %p146
        $region42: #{tpu_custom_call.1} parent=35 // pred_check_branch
          %282 = sbr.rel (%p280) target = $region44
        $region43: #{tpu_custom_call.1} parent=35 // pred_region
          %283 = dma.done %s276, 1024
        $region44: #{tpu_custom_call.1} parent=35 // pred_fallthru
          _
        %s284 = smul.u32 2, %s29
        %p285 = scmp.lt.s32.totalorder %s30, 1
        %s286 = scalar_select %p285, %s30, 1
        %p287 = scmp.lt.s32.totalorder %s284, 1
        %s288 = scalar_select %p287, %s284, 1
        %s289 = smul.addr %s286, 2
        %s290 = sadd.s32 %s288, %s289
        %s291 = smul.addr %s290, 8
        %s292 = scalar_lea.vmem %s0, %s291
        %p293 = pneg %p66
        %p294 = pneg %p63
        %s295 = smul.u32 2, %s29
        %p296 = scmp.lt.s32.totalorder %s30, 1
        %s297 = scalar_select %p296, %s30, 1
        %p298 = scmp.lt.s32.totalorder %s295, 1
        %s299 = scalar_select %p298, %s295, 1
        %s300 = smul.addr %s297, 2
        %s301 = sadd.s32 %s299, %s300
        %s302 = smul.addr %s301, 8
        %s303 = scalar_lea.vmem %s1, %s302
        %p304 = pneg %p94
        %p305 = pneg %p91
        %s306 = sand.u32 %s107, 1
        %s307 = scalar_lea.sflag [#allocation4], %s306
        %s308 = sand.u32 %s107, 1
        %s309 = smul.addr %s308, 64
        %s310 = scalar_lea.vmem [#allocation3], %s309
        %p311 = pneg %p120
        %p312 = pneg %p117
        %s313 = sand.u32 %s133, 1
        %s314 = scalar_lea.sflag [#allocation7], %s313
        %s315 = sand.u32 %s133, 1
        %s316 = smul.addr %s315, 64
        %s317 = scalar_lea.vmem [#allocation6], %s316
        %p318 = pneg %p146
        %p319 = pneg %p143
        %p320 = pneg %p176
        %p321 = pneg %p173
        %s322 = sand.u32 %s163, 1
        %s323 = scalar_lea.sflag [#allocation5], %s322
        %s324 = sand.u32 %s163, 1
        %s325 = smul.addr %s324, 8
        %s326 = scalar_lea.vmem [#allocation8], %s325
        %s327 = smul.u32 2, %s29
        %p328 = scmp.lt.s32.totalorder %s30, 1
        %s329 = scalar_select %p328, %s30, 1
        %p330 = scmp.lt.s32.totalorder %s327, 1
        %s331 = scalar_select %p330, %s327, 1
        %s332 = smul.addr %s329, 2
        %s333 = sadd.s32 %s331, %s332
        %s334 = smul.addr %s333, 8
        %s335 = scalar_lea.vmem %s0, %s334
        %s336 = smul.u32 2, %s29
        %s337 = smul.u32 2, %s29
        %p338 = scmp.lt.s32.totalorder %s30, 1
        %s339 = scalar_select %p338, %s30, 1
        %p340 = scmp.lt.s32.totalorder %s337, 1
        %s341 = scalar_select %p340, %s337, 1
        %s342 = smul.addr %s339, 2
        %s343 = sadd.s32 %s341, %s342
        %s344 = smul.addr %s343, 8
        %s345 = scalar_lea.vmem %s1, %s344
        %s346 = smul.u32 2, %s29
        %s347 = smul.u32 8, %s31
        %p348 = scmp.eq.s32.totalorder %s31, 0
        // Predicated region
        $region45: #{tpu_custom_call.1} parent=35 // pred_check
          %p349 = pneg %p348
        $region46: #{tpu_custom_call.1} parent=35 // pred_check_branch
          %351 = sbr.rel (%p349) target = $region48
        $region47: #{tpu_custom_call.1} parent=35 // pred_region
          %vm352 = vcmask 7168
          %353 = vst.msk [vmem:[#allocation2] sm:$0xff] %vm352, 0.0
          %354 = vst.msk [vmem:[#allocation2 + $0x8] sm:$0xff] %vm352, 0.0
        $region48: #{tpu_custom_call.1} parent=35 // pred_fallthru
          _
        %v355 = vld [vmem:[%s335] sm:$0xff]
        %v356 = vld [vmem:[%s335 + $0x8] sm:$0xff]
        %v357 = vld [vmem:[%s345] sm:$0xff]
        %v358 = vld [vmem:[%s345 + $0x8] sm:$0xff]
        %v359 = vld [vmem:[#allocation2] sm:$0xff]
        %v360 = vld [vmem:[#allocation2 + $0x8] sm:$0xff]
        %v361 = vld [vmem:[%s270] sm:$0xff]
        %v362 = vld [vmem:[%s270 + $0x8] sm:$0xff]
        %v363 = vld [vmem:[%s270 + $0x10] sm:$0xff]
        %v364 = vld [vmem:[%s270 + $0x18] sm:$0xff]
        %v365 = vld [vmem:[%s279] sm:$0xff]
        %v366 = vld [vmem:[%s279 + $0x8] sm:$0xff]
        %v367 = vld [vmem:[%s279 + $0x10] sm:$0xff]
        %v368 = vld [vmem:[%s279 + $0x18] sm:$0xff]
        %vm369 = vcmask 64512
        %v371 = vsel %vm369, %v355, 0
        %v374 = vsel %vm369, %v356, 0
        %376 = vmatprep.subr.mxu0 0.0
        %377 = vmatpush1.msra.mxu0 0.0
        %378 = vmatprep.subr.mxu0 0.0
        %379 = vmatpush1.msra.mxu0 0.0
        %380 = vmatprep.subr.mxu0 0.0
        %381 = vmatpush1.msra.mxu0 0.0
        %382 = vmatprep.subr.mxu0 0.0
        %383 = vmatpush1.msra.mxu0 0.0
        %384 = vmatprep.subr.mxu0 0.0
        %385 = vmatpush1.msra.mxu0 0.0
        %386 = vmatprep.subr.mxu0 0.0
        %387 = vmatpush1.msra.mxu0 0.0
        %388 = vmatprep.subr.mxu0 0.0
        %389 = vmatpush1.msra.mxu0 0.0
        %390 = vmatprep.subr.mxu0 0.0
        %391 = vmatpush1.msra.mxu0 0.0
        %392 = vmatprep.subr.mxu0 0.0
        %393 = vmatpush1.msra.mxu0 0.0
        %394 = vmatprep.subr.mxu0 0.0
        %395 = vmatpush1.msra.mxu0 0.0
        %396 = vmatprep.subr.mxu0 0.0
        %397 = vmatpush1.msra.mxu0 0.0
        %398 = vmatprep.subr.mxu0 0.0
        %399 = vmatpush1.msra.mxu0 0.0
        %400 = vmatprep.subr.mxu0 0.0
        %401 = vmatpush1.msra.mxu0 0.0
        %402 = vmatprep.subr.mxu0 0.0
        %403 = vmatpush1.msra.mxu0 0.0
        %404 = vmatprep.subr.mxu0 0.0
        %405 = vmatpush1.msra.mxu0 0.0
        %406 = vmatprep.subr.mxu0 %v362
        %407 = vmatpush1.msra.mxu0 %v361
        %408 = vmatprep.subr.mxu0 0.0
        %409 = vmatpush2.msra.mxu0 0.0
        %410 = vmatprep.subr.mxu0 0.0
        %411 = vmatpush2.msra.mxu0 0.0
        %412 = vmatprep.subr.mxu0 0.0
        %413 = vmatpush2.msra.mxu0 0.0
        %414 = vmatprep.subr.mxu0 0.0
        %415 = vmatpush2.msra.mxu0 0.0
        %416 = vmatprep.subr.mxu0 0.0
        %417 = vmatpush2.msra.mxu0 0.0
        %418 = vmatprep.subr.mxu0 0.0
        %419 = vmatpush2.msra.mxu0 0.0
        %420 = vmatprep.subr.mxu0 0.0
        %421 = vmatpush2.msra.mxu0 0.0
        %422 = vmatprep.subr.mxu0 0.0
        %423 = vmatpush2.msra.mxu0 0.0
        %424 = vmatprep.subr.mxu0 0.0
        %425 = vmatpush2.msra.mxu0 0.0
        %426 = vmatprep.subr.mxu0 0.0
        %427 = vmatpush2.msra.mxu0 0.0
        %428 = vmatprep.subr.mxu0 0.0
        %429 = vmatpush2.msra.mxu0 0.0
        %430 = vmatprep.subr.mxu0 0.0
        %431 = vmatpush2.msra.mxu0 0.0
        %432 = vmatprep.subr.mxu0 0.0
        %433 = vmatpush2.msra.mxu0 0.0
        %434 = vmatprep.subr.mxu0 0.0
        %435 = vmatpush2.msra.mxu0 0.0
        %436 = vmatprep.subr.mxu0 0.0
        %437 = vmatpush2.msra.mxu0 0.0
        %438 = vmatprep.subr.mxu0 0.0
        %439 = vmatpush2.msra.mxu0 0.0
        %440 = vmatprep.mubr.f32.mxu0 0.0
        %441 = vmatmul.mubr.f32.gmra.mxu0 %v371
        %v442 = vpop.f32.mrf.mxu0
        %v443 = vadd.f32 0.0, %v442
        %v444 = vpop.f32.mrf.mxu0
        %v445 = vadd.f32 0.0, %v444
        %446 = vmatprep.mubr.f32.mxu0 0.0
        %447 = vmatmul.mubr.f32.gmra.mxu0 %v374
        %v448 = vpop.f32.mrf.mxu0
        %v449 = vadd.f32 0.0, %v448
        %v450 = vpop.f32.mrf.mxu0
        %v451 = vadd.f32 0.0, %v450
        %452 = vdwg.mxu0
        %453 = vmatprep.subr.mxu0 0.0
        %454 = vmatpush1.msra.mxu0 0.0
        %455 = vmatprep.subr.mxu0 0.0
        %456 = vmatpush1.msra.mxu0 0.0
        %457 = vmatprep.subr.mxu0 0.0
        %458 = vmatpush1.msra.mxu0 0.0
        %459 = vmatprep.subr.mxu0 0.0
        %460 = vmatpush1.msra.mxu0 0.0
        %461 = vmatprep.subr.mxu0 0.0
        %462 = vmatpush1.msra.mxu0 0.0
        %463 = vmatprep.subr.mxu0 0.0
        %464 = vmatpush1.msra.mxu0 0.0
        %465 = vmatprep.subr.mxu0 0.0
        %466 = vmatpush1.msra.mxu0 0.0
        %467 = vmatprep.subr.mxu0 0.0
        %468 = vmatpush1.msra.mxu0 0.0
        %469 = vmatprep.subr.mxu0 0.0
        %470 = vmatpush1.msra.mxu0 0.0
        %471 = vmatprep.subr.mxu0 0.0
        %472 = vmatpush1.msra.mxu0 0.0
        %473 = vmatprep.subr.mxu0 0.0
        %474 = vmatpush1.msra.mxu0 0.0
        %475 = vmatprep.subr.mxu0 0.0
        %476 = vmatpush1.msra.mxu0 0.0
        %477 = vmatprep.subr.mxu0 0.0
        %478 = vmatpush1.msra.mxu0 0.0
        %479 = vmatprep.subr.mxu0 0.0
        %480 = vmatpush1.msra.mxu0 0.0
        %481 = vmatprep.subr.mxu0 0.0
        %482 = vmatpush1.msra.mxu0 0.0
        %483 = vmatprep.subr.mxu0 %v364
        %484 = vmatpush1.msra.mxu0 %v363
        %485 = vmatprep.subr.mxu0 0.0
        %486 = vmatpush2.msra.mxu0 0.0
        %487 = vmatprep.subr.mxu0 0.0
        %488 = vmatpush2.msra.mxu0 0.0
        %489 = vmatprep.subr.mxu0 0.0
        %490 = vmatpush2.msra.mxu0 0.0
        %491 = vmatprep.subr.mxu0 0.0
        %492 = vmatpush2.msra.mxu0 0.0
        %493 = vmatprep.subr.mxu0 0.0
        %494 = vmatpush2.msra.mxu0 0.0
        %495 = vmatprep.subr.mxu0 0.0
        %496 = vmatpush2.msra.mxu0 0.0
        %497 = vmatprep.subr.mxu0 0.0
        %498 = vmatpush2.msra.mxu0 0.0
        %499 = vmatprep.subr.mxu0 0.0
        %500 = vmatpush2.msra.mxu0 0.0
        %501 = vmatprep.subr.mxu0 0.0
        %502 = vmatpush2.msra.mxu0 0.0
        %503 = vmatprep.subr.mxu0 0.0
        %504 = vmatpush2.msra.mxu0 0.0
        %505 = vmatprep.subr.mxu0 0.0
        %506 = vmatpush2.msra.mxu0 0.0
        %507 = vmatprep.subr.mxu0 0.0
        %508 = vmatpush2.msra.mxu0 0.0
        %509 = vmatprep.subr.mxu0 0.0
        %510 = vmatpush2.msra.mxu0 0.0
        %511 = vmatprep.subr.mxu0 0.0
        %512 = vmatpush2.msra.mxu0 0.0
        %513 = vmatprep.subr.mxu0 0.0
        %514 = vmatpush2.msra.mxu0 0.0
        %515 = vmatprep.subr.mxu0 0.0
        %516 = vmatpush2.msra.mxu0 0.0
        %517 = vmatprep.mubr.f32.mxu0 0.0
        %518 = vmatmul.mubr.f32.gmra.mxu0 %v371
        %v519 = vpop.f32.mrf.mxu0
        %v520 = vadd.f32 0.0, %v519
        %v521 = vpop.f32.mrf.mxu0
        %v522 = vadd.f32 0.0, %v521
        %523 = vmatprep.mubr.f32.mxu0 0.0
        %524 = vmatmul.mubr.f32.gmra.mxu0 %v374
        %v525 = vpop.f32.mrf.mxu0
        %v526 = vadd.f32 0.0, %v525
        %v527 = vpop.f32.mrf.mxu0
        %v528 = vadd.f32 0.0, %v527
        %529 = vdwg.mxu0
        %v531 = vsel %vm369, %v357, 0
        %v534 = vsel %vm369, %v358, 0
        %536 = vmatprep.subr.mxu0 0.0
        %537 = vmatpush1.msra.mxu0 0.0
        %538 = vmatprep.subr.mxu0 0.0
        %539 = vmatpush1.msra.mxu0 0.0
        %540 = vmatprep.subr.mxu0 0.0
        %541 = vmatpush1.msra.mxu0 0.0
        %542 = vmatprep.subr.mxu0 0.0
        %543 = vmatpush1.msra.mxu0 0.0
        %544 = vmatprep.subr.mxu0 0.0
        %545 = vmatpush1.msra.mxu0 0.0
        %546 = vmatprep.subr.mxu0 0.0
        %547 = vmatpush1.msra.mxu0 0.0
        %548 = vmatprep.subr.mxu0 0.0
        %549 = vmatpush1.msra.mxu0 0.0
        %550 = vmatprep.subr.mxu0 0.0
        %551 = vmatpush1.msra.mxu0 0.0
        %552 = vmatprep.subr.mxu0 0.0
        %553 = vmatpush1.msra.mxu0 0.0
        %554 = vmatprep.subr.mxu0 0.0
        %555 = vmatpush1.msra.mxu0 0.0
        %556 = vmatprep.subr.mxu0 0.0
        %557 = vmatpush1.msra.mxu0 0.0
        %558 = vmatprep.subr.mxu0 0.0
        %559 = vmatpush1.msra.mxu0 0.0
        %560 = vmatprep.subr.mxu0 0.0
        %561 = vmatpush1.msra.mxu0 0.0
        %562 = vmatprep.subr.mxu0 0.0
        %563 = vmatpush1.msra.mxu0 0.0
        %564 = vmatprep.subr.mxu0 0.0
        %565 = vmatpush1.msra.mxu0 0.0
        %566 = vmatprep.subr.mxu0 %v362
        %567 = vmatpush1.msra.mxu0 %v361
        %568 = vmatprep.subr.mxu0 0.0
        %569 = vmatpush2.msra.mxu0 0.0
        %570 = vmatprep.subr.mxu0 0.0
        %571 = vmatpush2.msra.mxu0 0.0
        %572 = vmatprep.subr.mxu0 0.0
        %573 = vmatpush2.msra.mxu0 0.0
        %574 = vmatprep.subr.mxu0 0.0
        %575 = vmatpush2.msra.mxu0 0.0
        %576 = vmatprep.subr.mxu0 0.0
        %577 = vmatpush2.msra.mxu0 0.0
        %578 = vmatprep.subr.mxu0 0.0
        %579 = vmatpush2.msra.mxu0 0.0
        %580 = vmatprep.subr.mxu0 0.0
        %581 = vmatpush2.msra.mxu0 0.0
        %582 = vmatprep.subr.mxu0 0.0
        %583 = vmatpush2.msra.mxu0 0.0
        %584 = vmatprep.subr.mxu0 0.0
        %585 = vmatpush2.msra.mxu0 0.0
        %586 = vmatprep.subr.mxu0 0.0
        %587 = vmatpush2.msra.mxu0 0.0
        %588 = vmatprep.subr.mxu0 0.0
        %589 = vmatpush2.msra.mxu0 0.0
        %590 = vmatprep.subr.mxu0 0.0
        %591 = vmatpush2.msra.mxu0 0.0
        %592 = vmatprep.subr.mxu0 0.0
        %593 = vmatpush2.msra.mxu0 0.0
        %594 = vmatprep.subr.mxu0 0.0
        %595 = vmatpush2.msra.mxu0 0.0
        %596 = vmatprep.subr.mxu0 0.0
        %597 = vmatpush2.msra.mxu0 0.0
        %598 = vmatprep.subr.mxu0 0.0
        %599 = vmatpush2.msra.mxu0 0.0
        %600 = vmatprep.mubr.f32.mxu0 0.0
        %601 = vmatmul.mubr.f32.gmra.mxu0 %v531
        %v602 = vpop.f32.mrf.mxu0
        %v603 = vadd.f32 0.0, %v602
        %v604 = vpop.f32.mrf.mxu0
        %v605 = vadd.f32 0.0, %v604
        %606 = vmatprep.mubr.f32.mxu0 0.0
        %607 = vmatmul.mubr.f32.gmra.mxu0 %v534
        %v608 = vpop.f32.mrf.mxu0
        %v609 = vadd.f32 0.0, %v608
        %v610 = vpop.f32.mrf.mxu0
        %v611 = vadd.f32 0.0, %v610
        %612 = vdwg.mxu0
        %613 = vmatprep.subr.mxu0 0.0
        %614 = vmatpush1.msra.mxu0 0.0
        %615 = vmatprep.subr.mxu0 0.0
        %616 = vmatpush1.msra.mxu0 0.0
        %617 = vmatprep.subr.mxu0 0.0
        %618 = vmatpush1.msra.mxu0 0.0
        %619 = vmatprep.subr.mxu0 0.0
        %620 = vmatpush1.msra.mxu0 0.0
        %621 = vmatprep.subr.mxu0 0.0
        %622 = vmatpush1.msra.mxu0 0.0
        %623 = vmatprep.subr.mxu0 0.0
        %624 = vmatpush1.msra.mxu0 0.0
        %625 = vmatprep.subr.mxu0 0.0
        %626 = vmatpush1.msra.mxu0 0.0
        %627 = vmatprep.subr.mxu0 0.0
        %628 = vmatpush1.msra.mxu0 0.0
        %629 = vmatprep.subr.mxu0 0.0
        %630 = vmatpush1.msra.mxu0 0.0
        %631 = vmatprep.subr.mxu0 0.0
        %632 = vmatpush1.msra.mxu0 0.0
        %633 = vmatprep.subr.mxu0 0.0
        %634 = vmatpush1.msra.mxu0 0.0
        %635 = vmatprep.subr.mxu0 0.0
        %636 = vmatpush1.msra.mxu0 0.0
        %637 = vmatprep.subr.mxu0 0.0
        %638 = vmatpush1.msra.mxu0 0.0
        %639 = vmatprep.subr.mxu0 0.0
        %640 = vmatpush1.msra.mxu0 0.0
        %641 = vmatprep.subr.mxu0 0.0
        %642 = vmatpush1.msra.mxu0 0.0
        %643 = vmatprep.subr.mxu0 %v364
        %644 = vmatpush1.msra.mxu0 %v363
        %645 = vmatprep.subr.mxu0 0.0
        %646 = vmatpush2.msra.mxu0 0.0
        %647 = vmatprep.subr.mxu0 0.0
        %648 = vmatpush2.msra.mxu0 0.0
        %649 = vmatprep.subr.mxu0 0.0
        %650 = vmatpush2.msra.mxu0 0.0
        %651 = vmatprep.subr.mxu0 0.0
        %652 = vmatpush2.msra.mxu0 0.0
        %653 = vmatprep.subr.mxu0 0.0
        %654 = vmatpush2.msra.mxu0 0.0
        %655 = vmatprep.subr.mxu0 0.0
        %656 = vmatpush2.msra.mxu0 0.0
        %657 = vmatprep.subr.mxu0 0.0
        %658 = vmatpush2.msra.mxu0 0.0
        %659 = vmatprep.subr.mxu0 0.0
        %660 = vmatpush2.msra.mxu0 0.0
        %661 = vmatprep.subr.mxu0 0.0
        %662 = vmatpush2.msra.mxu0 0.0
        %663 = vmatprep.subr.mxu0 0.0
        %664 = vmatpush2.msra.mxu0 0.0
        %665 = vmatprep.subr.mxu0 0.0
        %666 = vmatpush2.msra.mxu0 0.0
        %667 = vmatprep.subr.mxu0 0.0
        %668 = vmatpush2.msra.mxu0 0.0
        %669 = vmatprep.subr.mxu0 0.0
        %670 = vmatpush2.msra.mxu0 0.0
        %671 = vmatprep.subr.mxu0 0.0
        %672 = vmatpush2.msra.mxu0 0.0
        %673 = vmatprep.subr.mxu0 0.0
        %674 = vmatpush2.msra.mxu0 0.0
        %675 = vmatprep.subr.mxu0 0.0
        %676 = vmatpush2.msra.mxu0 0.0
        %677 = vmatprep.mubr.f32.mxu0 0.0
        %678 = vmatmul.mubr.f32.gmra.mxu0 %v531
        %v679 = vpop.f32.mrf.mxu0
        %v680 = vadd.f32 0.0, %v679
        %v681 = vpop.f32.mrf.mxu0
        %v682 = vadd.f32 0.0, %v681
        %683 = vmatprep.mubr.f32.mxu0 0.0
        %684 = vmatmul.mubr.f32.gmra.mxu0 %v534
        %v685 = vpop.f32.mrf.mxu0
        %v686 = vadd.f32 0.0, %v685
        %v687 = vpop.f32.mrf.mxu0
        %v688 = vadd.f32 0.0, %v687
        %689 = vdwg.mxu0
        %691 = vset.pattern.permute.xlu0 0
        %692 = vperm.xlu0 %691, %v359
        %v693 = vpop.permute.xlu0 %692
        %696 = vset.pattern.permute.xlu0 0
        %697 = vperm.xlu0 %696, %v360
        %v698 = vpop.permute.xlu0 %697
        %700 = vmatprep.subr.mxu0 0.0
        %701 = vmatpush1.msra.mxu0 0.0
        %702 = vmatprep.subr.mxu0 0.0
        %703 = vmatpush1.msra.mxu0 0.0
        %704 = vmatprep.subr.mxu0 0.0
        %705 = vmatpush1.msra.mxu0 0.0
        %706 = vmatprep.subr.mxu0 0.0
        %707 = vmatpush1.msra.mxu0 0.0
        %708 = vmatprep.subr.mxu0 0.0
        %709 = vmatpush1.msra.mxu0 0.0
        %710 = vmatprep.subr.mxu0 0.0
        %711 = vmatpush1.msra.mxu0 0.0
        %712 = vmatprep.subr.mxu0 0.0
        %713 = vmatpush1.msra.mxu0 0.0
        %714 = vmatprep.subr.mxu0 0.0
        %715 = vmatpush1.msra.mxu0 0.0
        %716 = vmatprep.subr.mxu0 0.0
        %717 = vmatpush1.msra.mxu0 0.0
        %718 = vmatprep.subr.mxu0 0.0
        %719 = vmatpush1.msra.mxu0 0.0
        %720 = vmatprep.subr.mxu0 0.0
        %721 = vmatpush1.msra.mxu0 0.0
        %722 = vmatprep.subr.mxu0 0.0
        %723 = vmatpush1.msra.mxu0 0.0
        %724 = vmatprep.subr.mxu0 0.0
        %725 = vmatpush1.msra.mxu0 0.0
        %726 = vmatprep.subr.mxu0 0.0
        %727 = vmatpush1.msra.mxu0 0.0
        %728 = vmatprep.subr.mxu0 0.0
        %729 = vmatpush1.msra.mxu0 0.0
        %730 = vmatprep.subr.mxu0 %v366
        %731 = vmatpush1.msra.mxu0 %v365
        %732 = vmatprep.subr.mxu0 0.0
        %733 = vmatpush2.msra.mxu0 0.0
        %734 = vmatprep.subr.mxu0 0.0
        %735 = vmatpush2.msra.mxu0 0.0
        %736 = vmatprep.subr.mxu0 0.0
        %737 = vmatpush2.msra.mxu0 0.0
        %738 = vmatprep.subr.mxu0 0.0
        %739 = vmatpush2.msra.mxu0 0.0
        %740 = vmatprep.subr.mxu0 0.0
        %741 = vmatpush2.msra.mxu0 0.0
        %742 = vmatprep.subr.mxu0 0.0
        %743 = vmatpush2.msra.mxu0 0.0
        %744 = vmatprep.subr.mxu0 0.0
        %745 = vmatpush2.msra.mxu0 0.0
        %746 = vmatprep.subr.mxu0 0.0
        %747 = vmatpush2.msra.mxu0 0.0
        %748 = vmatprep.subr.mxu0 0.0
        %749 = vmatpush2.msra.mxu0 0.0
        %750 = vmatprep.subr.mxu0 0.0
        %751 = vmatpush2.msra.mxu0 0.0
        %752 = vmatprep.subr.mxu0 0.0
        %753 = vmatpush2.msra.mxu0 0.0
        %754 = vmatprep.subr.mxu0 0.0
        %755 = vmatpush2.msra.mxu0 0.0
        %756 = vmatprep.subr.mxu0 0.0
        %757 = vmatpush2.msra.mxu0 0.0
        %758 = vmatprep.subr.mxu0 0.0
        %759 = vmatpush2.msra.mxu0 0.0
        %760 = vmatprep.subr.mxu0 0.0
        %761 = vmatpush2.msra.mxu0 0.0
        %762 = vmatprep.subr.mxu0 0.0
        %763 = vmatpush2.msra.mxu0 0.0
        %764 = vmatprep.mubr.f32.mxu0 0.0
        %765 = vmatmul.mubr.f32.gmra.mxu0 %v371
        %v766 = vpop.f32.mrf.mxu0
        %v767 = vadd.f32 %v693, %v766
        %v768 = vpop.f32.mrf.mxu0
        %v769 = vadd.f32 %v693, %v768
        %770 = vmatprep.mubr.f32.mxu0 0.0
        %771 = vmatmul.mubr.f32.gmra.mxu0 %v374
        %v772 = vpop.f32.mrf.mxu0
        %v773 = vadd.f32 %v698, %v772
        %v774 = vpop.f32.mrf.mxu0
        %v775 = vadd.f32 %v698, %v774
        %776 = vdwg.mxu0
        %777 = vmatprep.subr.mxu0 0.0
        %778 = vmatpush1.msra.mxu0 0.0
        %779 = vmatprep.subr.mxu0 0.0
        %780 = vmatpush1.msra.mxu0 0.0
        %781 = vmatprep.subr.mxu0 0.0
        %782 = vmatpush1.msra.mxu0 0.0
        %783 = vmatprep.subr.mxu0 0.0
        %784 = vmatpush1.msra.mxu0 0.0
        %785 = vmatprep.subr.mxu0 0.0
        %786 = vmatpush1.msra.mxu0 0.0
        %787 = vmatprep.subr.mxu0 0.0
        %788 = vmatpush1.msra.mxu0 0.0
        %789 = vmatprep.subr.mxu0 0.0
        %790 = vmatpush1.msra.mxu0 0.0
        %791 = vmatprep.subr.mxu0 0.0
        %792 = vmatpush1.msra.mxu0 0.0
        %793 = vmatprep.subr.mxu0 0.0
        %794 = vmatpush1.msra.mxu0 0.0
        %795 = vmatprep.subr.mxu0 0.0
        %796 = vmatpush1.msra.mxu0 0.0
        %797 = vmatprep.subr.mxu0 0.0
        %798 = vmatpush1.msra.mxu0 0.0
        %799 = vmatprep.subr.mxu0 0.0
        %800 = vmatpush1.msra.mxu0 0.0
        %801 = vmatprep.subr.mxu0 0.0
        %802 = vmatpush1.msra.mxu0 0.0
        %803 = vmatprep.subr.mxu0 0.0
        %804 = vmatpush1.msra.mxu0 0.0
        %805 = vmatprep.subr.mxu0 0.0
        %806 = vmatpush1.msra.mxu0 0.0
        %807 = vmatprep.subr.mxu0 %v368
        %808 = vmatpush1.msra.mxu0 %v367
        %809 = vmatprep.subr.mxu0 0.0
        %810 = vmatpush2.msra.mxu0 0.0
        %811 = vmatprep.subr.mxu0 0.0
        %812 = vmatpush2.msra.mxu0 0.0
        %813 = vmatprep.subr.mxu0 0.0
        %814 = vmatpush2.msra.mxu0 0.0
        %815 = vmatprep.subr.mxu0 0.0
        %816 = vmatpush2.msra.mxu0 0.0
        %817 = vmatprep.subr.mxu0 0.0
        %818 = vmatpush2.msra.mxu0 0.0
        %819 = vmatprep.subr.mxu0 0.0
        %820 = vmatpush2.msra.mxu0 0.0
        %821 = vmatprep.subr.mxu0 0.0
        %822 = vmatpush2.msra.mxu0 0.0
        %823 = vmatprep.subr.mxu0 0.0
        %824 = vmatpush2.msra.mxu0 0.0
        %825 = vmatprep.subr.mxu0 0.0
        %826 = vmatpush2.msra.mxu0 0.0
        %827 = vmatprep.subr.mxu0 0.0
        %828 = vmatpush2.msra.mxu0 0.0
        %829 = vmatprep.subr.mxu0 0.0
        %830 = vmatpush2.msra.mxu0 0.0
        %831 = vmatprep.subr.mxu0 0.0
        %832 = vmatpush2.msra.mxu0 0.0
        %833 = vmatprep.subr.mxu0 0.0
        %834 = vmatpush2.msra.mxu0 0.0
        %835 = vmatprep.subr.mxu0 0.0
        %836 = vmatpush2.msra.mxu0 0.0
        %837 = vmatprep.subr.mxu0 0.0
        %838 = vmatpush2.msra.mxu0 0.0
        %839 = vmatprep.subr.mxu0 0.0
        %840 = vmatpush2.msra.mxu0 0.0
        %841 = vmatprep.mubr.f32.mxu0 0.0
        %842 = vmatmul.mubr.f32.gmra.mxu0 %v371
        %v843 = vpop.f32.mrf.mxu0
        %v844 = vadd.f32 %v693, %v843
        %v845 = vpop.f32.mrf.mxu0
        %v846 = vadd.f32 %v693, %v845
        %847 = vmatprep.mubr.f32.mxu0 0.0
        %848 = vmatmul.mubr.f32.gmra.mxu0 %v374
        %v849 = vpop.f32.mrf.mxu0
        %v850 = vadd.f32 %v698, %v849
        %v851 = vpop.f32.mrf.mxu0
        %v852 = vadd.f32 %v698, %v851
        %853 = vdwg.mxu0
        %vm854 = vcmp.lt.f32.partialorder %v443, 8000.0
        %vm855 = vcmp.lt.f32.partialorder %v445, 8000.0
        %vm856 = vcmp.lt.f32.partialorder %v520, 8000.0
        %vm857 = vcmp.lt.f32.partialorder %v522, 8000.0
        %vm858 = vcmp.lt.f32.partialorder %v449, 8000.0
        %vm859 = vcmp.lt.f32.partialorder %v451, 8000.0
        %vm860 = vcmp.lt.f32.partialorder %v526, 8000.0
        %vm861 = vcmp.lt.f32.partialorder %v528, 8000.0
        %v862 = vsel %vm854, %v603, 0.0
        %v863 = vsel %vm855, %v605, 0.0
        %v864 = vsel %vm856, %v680, 0.0
        %v865 = vsel %vm857, %v682, 0.0
        %v866 = vsel %vm858, %v609, 0.0
        %v867 = vsel %vm859, %v611, 0.0
        %v868 = vsel %vm860, %v686, 0.0
        %v869 = vsel %vm861, %v688, 0.0
        %v870 = vand.u32 2147483647, %v767
        %vm871 = vcmp.le.f32.partialorder %v870, 0.7853982
        %vm872 = vcmp.lt.s32.totalorder %v767, 0
        %v873 = vand.u32 %v767, 2139095040
        %v874 = vshrl.u32 %v873, 23
        %v875 = vsub.s32 %v874, 127
        %v876 = vand.u32 2147483647, %v767
        %v877 = vand.u32 %v876, 8388607
        %v878 = vor.u32 %v877, 8388608
        %v879 = vsub.s32 0, %v878
        %v880 = vadd.s32 %v875, 1
        %vm881 = vcmp.gt.s32.totalorder %v880, 0
        %v882 = vsel %vm881, %v880, 0
        %v883 = vshrl.u32 %v882, 5
        %v884 = vand.u32 %v882, 31
        %v885 = vsub.s32 32, %v884
        %v886 = vshrl.u32 683565275, %v885
        %v887 = vshll.u32 683565275, %v884
        %v888 = vshrl.u32 2475754826, %v885
        %v889 = vor.u32 %v887, %v888
        %v890 = vshll.u32 2475754826, %v884
        %v891 = vshrl.u32 2131351028, %v885
        %v892 = vor.u32 %v890, %v891
        %v893 = vshll.u32 2131351028, %v884
        %v894 = vshrl.u32 2102212464, %v885
        %v895 = vor.u32 %v893, %v894
        %v896 = vshll.u32 2102212464, %v884
        %v897 = vshrl.u32 920167782, %v885
        %v898 = vor.u32 %v896, %v897
        %v899 = vshll.u32 920167782, %v884
        %v900 = vshrl.u32 1326507024, %v885
        %v901 = vor.u32 %v899, %v900
        %vm902 = vcmp.lt.s32.totalorder %v883, 1
        %vm903 = vcmp.lt.s32.totalorder %v883, 2
        %vm904 = vcmp.lt.s32.totalorder %v883, 3
        %vm905 = vcmp.lt.s32.totalorder %v883, 4
        %v906 = vsel %vm902, %v886, %v889
        %v907 = vsel %vm905, %v895, 2102212464
        %v908 = vsel %vm904, %v892, %v907
        %v909 = vsel %vm903, %v906, %v908
        %v910 = vsel %vm902, %v889, %v892
        %v911 = vsel %vm905, %v898, 920167782
        %v912 = vsel %vm904, %v895, %v911
        %v913 = vsel %vm903, %v910, %v912
        %v914 = vsel %vm902, %v892, %v895
        %v915 = vsel %vm905, %v901, 1326507024
        %v916 = vsel %vm904, %v898, %v915
        %v917 = vsel %vm903, %v914, %v916
        %v918 = vshll.u32 %v878, 8
        %v919 = vmul.u32.u64.compose %v918, %v917
        %v920 = vextract.low.u32 %v919
        %v921 = vextract.high.u32 %v919
        %v922 = vmul.u32.u64.compose %v918, %v913
        %v923 = vextract.low.u32 %v922
        %v924 = vextract.high.u32 %v922
        %v925 = vmul.u32 %v918, %v909
        %v926 = vadd.s32 %v921, %v923
        %vm927 = vc.u32 %v921, %v923
        %v928 = vadd.s32 %v924, 1
        %v929 = vsel %vm927, %v928, %v924
        %v930 = vadd.s32 %v925, %v929
        %v931 = vadd.s32 %v930, 536870912
        %v932 = vshrl.u32 %v931, 30
        %v933 = vshll.u32 %v932, 30
        %v934 = vsub.s32 %v930, %v933
        %vm935 = vcmp.lt.s32.totalorder %v934, 0
        %v936 = vsub.s32 0, %v934
        %v937 = vsel %vm935, %v936, %v934
        %v938 = vclz %v937
        %v939 = vsub.s32 %v938, 2
        %vm940 = vcmp.gt.s32.totalorder 0, %v939
        %v941 = vsel %vm940, 0, %v939
        %v942 = vsub.s32 32, %v941
        %v943 = vshll.u32 %v934, %v941
        %v944 = vshrl.u32 %v926, %v942
        %v945 = vor.u32 %v943, %v944
        %v946 = vsub.s32 4294967266, %v941
        %v947 = vadd.s32 %v946, 127
        %v948 = vshll.u32 %v947, 23
        %v949 = vor.u32 4788187, %v948
        %v950 = vand.u32 2147483647, %v949
        %v952 = vcvt.s32.f32 %v945
        %v953 = vmul.f32 %v952, %v950
        %v954 = vxor.u32 %v953, 2147483648
        %v955 = vsel %vm872, %v954, %v953
        %v956 = vsub.s32 4, %v932
        %v957 = vsel %vm872, %v956, %v932
        %v958 = vsel %vm871, %v767, %v955
        %v959 = vsel %vm871, 0, %v957
        %v960 = vcosq.f32.pop %v958
        %v961 = vsinq.f32.pop %v958
        %vm962 = vweird.f32 %v767
        %v963 = vadd.s32 %v959, 3
        %v964 = vand.u32 %v963, 3
        %vm965 = vcmp.lt.s32.totalorder %v964, 2
        %vm966 = vcmp.eq.s32.totalorder %v964, 0
        %v967 = vxor.u32 %v961, 2147483648
        %v968 = vsel %vm966, %v960, %v967
        %vm969 = vcmp.eq.s32.totalorder %v964, 2
        %v970 = vxor.u32 %v960, 2147483648
        %v971 = vsel %vm969, %v970, %v961
        %v972 = vsel %vm965, %v968, %v971
        %v973 = vsel %vm962, nan, %v972
        %v974 = vand.u32 2147483647, %v769
        %vm975 = vcmp.le.f32.partialorder %v974, 0.7853982
        %vm976 = vcmp.lt.s32.totalorder %v769, 0
        %v977 = vand.u32 %v769, 2139095040
        %v978 = vshrl.u32 %v977, 23
        %v979 = vsub.s32 %v978, 127
        %v980 = vand.u32 2147483647, %v769
        %v981 = vand.u32 %v980, 8388607
        %v982 = vor.u32 %v981, 8388608
        %v983 = vsub.s32 0, %v982
        %v984 = vadd.s32 %v979, 1
        %vm985 = vcmp.gt.s32.totalorder %v984, 0
        %v986 = vsel %vm985, %v984, 0
        %v987 = vshrl.u32 %v986, 5
        %v988 = vand.u32 %v986, 31
        %v989 = vsub.s32 32, %v988
        %v990 = vshrl.u32 683565275, %v989
        %v991 = vshll.u32 683565275, %v988
        %v992 = vshrl.u32 2475754826, %v989
        %v993 = vor.u32 %v991, %v992
        %v994 = vshll.u32 2475754826, %v988
        %v995 = vshrl.u32 2131351028, %v989
        %v996 = vor.u32 %v994, %v995
        %v997 = vshll.u32 2131351028, %v988
        %v998 = vshrl.u32 2102212464, %v989
        %v999 = vor.u32 %v997, %v998
        %v1000 = vshll.u32 2102212464, %v988
        %v1001 = vshrl.u32 920167782, %v989
        %v1002 = vor.u32 %v1000, %v1001
        %v1003 = vshll.u32 920167782, %v988
        %v1004 = vshrl.u32 1326507024, %v989
        %v1005 = vor.u32 %v1003, %v1004
        %vm1006 = vcmp.lt.s32.totalorder %v987, 1
        %vm1007 = vcmp.lt.s32.totalorder %v987, 2
        %vm1008 = vcmp.lt.s32.totalorder %v987, 3
        %vm1009 = vcmp.lt.s32.totalorder %v987, 4
        %v1010 = vsel %vm1006, %v990, %v993
        %v1011 = vsel %vm1009, %v999, 2102212464
        %v1012 = vsel %vm1008, %v996, %v1011
        %v1013 = vsel %vm1007, %v1010, %v1012
        %v1014 = vsel %vm1006, %v993, %v996
        %v1015 = vsel %vm1009, %v1002, 920167782
        %v1016 = vsel %vm1008, %v999, %v1015
        %v1017 = vsel %vm1007, %v1014, %v1016
        %v1018 = vsel %vm1006, %v996, %v999
        %v1019 = vsel %vm1009, %v1005, 1326507024
        %v1020 = vsel %vm1008, %v1002, %v1019
        %v1021 = vsel %vm1007, %v1018, %v1020
        %v1022 = vshll.u32 %v982, 8
        %v1023 = vmul.u32.u64.compose %v1022, %v1021
        %v1024 = vextract.low.u32 %v1023
        %v1025 = vextract.high.u32 %v1023
        %v1026 = vmul.u32.u64.compose %v1022, %v1017
        %v1027 = vextract.low.u32 %v1026
        %v1028 = vextract.high.u32 %v1026
        %v1029 = vmul.u32 %v1022, %v1013
        %v1030 = vadd.s32 %v1025, %v1027
        %vm1031 = vc.u32 %v1025, %v1027
        %v1032 = vadd.s32 %v1028, 1
        %v1033 = vsel %vm1031, %v1032, %v1028
        %v1034 = vadd.s32 %v1029, %v1033
        %v1035 = vadd.s32 %v1034, 536870912
        %v1036 = vshrl.u32 %v1035, 30
        %v1037 = vshll.u32 %v1036, 30
        %v1038 = vsub.s32 %v1034, %v1037
        %vm1039 = vcmp.lt.s32.totalorder %v1038, 0
        %v1040 = vsub.s32 0, %v1038
        %v1041 = vsel %vm1039, %v1040, %v1038
        %v1042 = vclz %v1041
        %v1043 = vsub.s32 %v1042, 2
        %vm1044 = vcmp.gt.s32.totalorder 0, %v1043
        %v1045 = vsel %vm1044, 0, %v1043
        %v1046 = vsub.s32 32, %v1045
        %v1047 = vshll.u32 %v1038, %v1045
        %v1048 = vshrl.u32 %v1030, %v1046
        %v1049 = vor.u32 %v1047, %v1048
        %v1050 = vsub.s32 4294967266, %v1045
        %v1051 = vadd.s32 %v1050, 127
        %v1052 = vshll.u32 %v1051, 23
        %v1053 = vor.u32 4788187, %v1052
        %v1054 = vand.u32 2147483647, %v1053
        %v1056 = vcvt.s32.f32 %v1049
        %v1057 = vmul.f32 %v1056, %v1054
        %v1058 = vxor.u32 %v1057, 2147483648
        %v1059 = vsel %vm976, %v1058, %v1057
        %v1060 = vsub.s32 4, %v1036
        %v1061 = vsel %vm976, %v1060, %v1036
        %v1062 = vsel %vm975, %v769, %v1059
        %v1063 = vsel %vm975, 0, %v1061
        %v1064 = vcosq.f32.pop %v1062
        %v1065 = vsinq.f32.pop %v1062
        %vm1066 = vweird.f32 %v769
        %v1067 = vadd.s32 %v1063, 3
        %v1068 = vand.u32 %v1067, 3
        %vm1069 = vcmp.lt.s32.totalorder %v1068, 2
        %vm1070 = vcmp.eq.s32.totalorder %v1068, 0
        %v1071 = vxor.u32 %v1065, 2147483648
        %v1072 = vsel %vm1070, %v1064, %v1071
        %vm1073 = vcmp.eq.s32.totalorder %v1068, 2
        %v1074 = vxor.u32 %v1064, 2147483648
        %v1075 = vsel %vm1073, %v1074, %v1065
        %v1076 = vsel %vm1069, %v1072, %v1075
        %v1077 = vsel %vm1066, nan, %v1076
        %v1078 = vand.u32 2147483647, %v844
        %vm1079 = vcmp.le.f32.partialorder %v1078, 0.7853982
        %vm1080 = vcmp.lt.s32.totalorder %v844, 0
        %v1081 = vand.u32 %v844, 2139095040
        %v1082 = vshrl.u32 %v1081, 23
        %v1083 = vsub.s32 %v1082, 127
        %v1084 = vand.u32 2147483647, %v844
        %v1085 = vand.u32 %v1084, 8388607
        %v1086 = vor.u32 %v1085, 8388608
        %v1087 = vsub.s32 0, %v1086
        %v1088 = vadd.s32 %v1083, 1
        %vm1089 = vcmp.gt.s32.totalorder %v1088, 0
        %v1090 = vsel %vm1089, %v1088, 0
        %v1091 = vshrl.u32 %v1090, 5
        %v1092 = vand.u32 %v1090, 31
        %v1093 = vsub.s32 32, %v1092
        %v1094 = vshrl.u32 683565275, %v1093
        %v1095 = vshll.u32 683565275, %v1092
        %v1096 = vshrl.u32 2475754826, %v1093
        %v1097 = vor.u32 %v1095, %v1096
        %v1098 = vshll.u32 2475754826, %v1092
        %v1099 = vshrl.u32 2131351028, %v1093
        %v1100 = vor.u32 %v1098, %v1099
        %v1101 = vshll.u32 2131351028, %v1092
        %v1102 = vshrl.u32 2102212464, %v1093
        %v1103 = vor.u32 %v1101, %v1102
        %v1104 = vshll.u32 2102212464, %v1092
        %v1105 = vshrl.u32 920167782, %v1093
        %v1106 = vor.u32 %v1104, %v1105
        %v1107 = vshll.u32 920167782, %v1092
        %v1108 = vshrl.u32 1326507024, %v1093
        %v1109 = vor.u32 %v1107, %v1108
        %vm1110 = vcmp.lt.s32.totalorder %v1091, 1
        %vm1111 = vcmp.lt.s32.totalorder %v1091, 2
        %vm1112 = vcmp.lt.s32.totalorder %v1091, 3
        %vm1113 = vcmp.lt.s32.totalorder %v1091, 4
        %v1114 = vsel %vm1110, %v1094, %v1097
        %v1115 = vsel %vm1113, %v1103, 2102212464
        %v1116 = vsel %vm1112, %v1100, %v1115
        %v1117 = vsel %vm1111, %v1114, %v1116
        %v1118 = vsel %vm1110, %v1097, %v1100
        %v1119 = vsel %vm1113, %v1106, 920167782
        %v1120 = vsel %vm1112, %v1103, %v1119
        %v1121 = vsel %vm1111, %v1118, %v1120
        %v1122 = vsel %vm1110, %v1100, %v1103
        %v1123 = vsel %vm1113, %v1109, 1326507024
        %v1124 = vsel %vm1112, %v1106, %v1123
        %v1125 = vsel %vm1111, %v1122, %v1124
        %v1126 = vshll.u32 %v1086, 8
        %v1127 = vmul.u32.u64.compose %v1126, %v1125
        %v1128 = vextract.low.u32 %v1127
        %v1129 = vextract.high.u32 %v1127
        %v1130 = vmul.u32.u64.compose %v1126, %v1121
        %v1131 = vextract.low.u32 %v1130
        %v1132 = vextract.high.u32 %v1130
        %v1133 = vmul.u32 %v1126, %v1117
        %v1134 = vadd.s32 %v1129, %v1131
        %vm1135 = vc.u32 %v1129, %v1131
        %v1136 = vadd.s32 %v1132, 1
        %v1137 = vsel %vm1135, %v1136, %v1132
        %v1138 = vadd.s32 %v1133, %v1137
        %v1139 = vadd.s32 %v1138, 536870912
        %v1140 = vshrl.u32 %v1139, 30
        %v1141 = vshll.u32 %v1140, 30
        %v1142 = vsub.s32 %v1138, %v1141
        %vm1143 = vcmp.lt.s32.totalorder %v1142, 0
        %v1144 = vsub.s32 0, %v1142
        %v1145 = vsel %vm1143, %v1144, %v1142
        %v1146 = vclz %v1145
        %v1147 = vsub.s32 %v1146, 2
        %vm1148 = vcmp.gt.s32.totalorder 0, %v1147
        %v1149 = vsel %vm1148, 0, %v1147
        %v1150 = vsub.s32 32, %v1149
        %v1151 = vshll.u32 %v1142, %v1149
        %v1152 = vshrl.u32 %v1134, %v1150
        %v1153 = vor.u32 %v1151, %v1152
        %v1154 = vsub.s32 4294967266, %v1149
        %v1155 = vadd.s32 %v1154, 127
        %v1156 = vshll.u32 %v1155, 23
        %v1157 = vor.u32 4788187, %v1156
        %v1158 = vand.u32 2147483647, %v1157
        %v1160 = vcvt.s32.f32 %v1153
        %v1161 = vmul.f32 %v1160, %v1158
        %v1162 = vxor.u32 %v1161, 2147483648
        %v1163 = vsel %vm1080, %v1162, %v1161
        %v1164 = vsub.s32 4, %v1140
        %v1165 = vsel %vm1080, %v1164, %v1140
        %v1166 = vsel %vm1079, %v844, %v1163
        %v1167 = vsel %vm1079, 0, %v1165
        %v1168 = vcosq.f32.pop %v1166
        %v1169 = vsinq.f32.pop %v1166
        %vm1170 = vweird.f32 %v844
        %v1171 = vadd.s32 %v1167, 3
        %v1172 = vand.u32 %v1171, 3
        %vm1173 = vcmp.lt.s32.totalorder %v1172, 2
        %vm1174 = vcmp.eq.s32.totalorder %v1172, 0
        %v1175 = vxor.u32 %v1169, 2147483648
        %v1176 = vsel %vm1174, %v1168, %v1175
        %vm1177 = vcmp.eq.s32.totalorder %v1172, 2
        %v1178 = vxor.u32 %v1168, 2147483648
        %v1179 = vsel %vm1177, %v1178, %v1169
        %v1180 = vsel %vm1173, %v1176, %v1179
        %v1181 = vsel %vm1170, nan, %v1180
        %v1182 = vand.u32 2147483647, %v846
        %vm1183 = vcmp.le.f32.partialorder %v1182, 0.7853982
        %vm1184 = vcmp.lt.s32.totalorder %v846, 0
        %v1185 = vand.u32 %v846, 2139095040
        %v1186 = vshrl.u32 %v1185, 23
        %v1187 = vsub.s32 %v1186, 127
        %v1188 = vand.u32 2147483647, %v846
        %v1189 = vand.u32 %v1188, 8388607
        %v1190 = vor.u32 %v1189, 8388608
        %v1191 = vsub.s32 0, %v1190
        %v1192 = vadd.s32 %v1187, 1
        %vm1193 = vcmp.gt.s32.totalorder %v1192, 0
        %v1194 = vsel %vm1193, %v1192, 0
        %v1195 = vshrl.u32 %v1194, 5
        %v1196 = vand.u32 %v1194, 31
        %v1197 = vsub.s32 32, %v1196
        %v1198 = vshrl.u32 683565275, %v1197
        %v1199 = vshll.u32 683565275, %v1196
        %v1200 = vshrl.u32 2475754826, %v1197
        %v1201 = vor.u32 %v1199, %v1200
        %v1202 = vshll.u32 2475754826, %v1196
        %v1203 = vshrl.u32 2131351028, %v1197
        %v1204 = vor.u32 %v1202, %v1203
        %v1205 = vshll.u32 2131351028, %v1196
        %v1206 = vshrl.u32 2102212464, %v1197
        %v1207 = vor.u32 %v1205, %v1206
        %v1208 = vshll.u32 2102212464, %v1196
        %v1209 = vshrl.u32 920167782, %v1197
        %v1210 = vor.u32 %v1208, %v1209
        %v1211 = vshll.u32 920167782, %v1196
        %v1212 = vshrl.u32 1326507024, %v1197
        %v1213 = vor.u32 %v1211, %v1212
        %vm1214 = vcmp.lt.s32.totalorder %v1195, 1
        %vm1215 = vcmp.lt.s32.totalorder %v1195, 2
        %vm1216 = vcmp.lt.s32.totalorder %v1195, 3
        %vm1217 = vcmp.lt.s32.totalorder %v1195, 4
        %v1218 = vsel %vm1214, %v1198, %v1201
        %v1219 = vsel %vm1217, %v1207, 2102212464
        %v1220 = vsel %vm1216, %v1204, %v1219
        %v1221 = vsel %vm1215, %v1218, %v1220
        %v1222 = vsel %vm1214, %v1201, %v1204
        %v1223 = vsel %vm1217, %v1210, 920167782
        %v1224 = vsel %vm1216, %v1207, %v1223
        %v1225 = vsel %vm1215, %v1222, %v1224
        %v1226 = vsel %vm1214, %v1204, %v1207
        %v1227 = vsel %vm1217, %v1213, 1326507024
        %v1228 = vsel %vm1216, %v1210, %v1227
        %v1229 = vsel %vm1215, %v1226, %v1228
        %v1230 = vshll.u32 %v1190, 8
        %v1231 = vmul.u32.u64.compose %v1230, %v1229
        %v1232 = vextract.low.u32 %v1231
        %v1233 = vextract.high.u32 %v1231
        %v1234 = vmul.u32.u64.compose %v1230, %v1225
        %v1235 = vextract.low.u32 %v1234
        %v1236 = vextract.high.u32 %v1234
        %v1237 = vmul.u32 %v1230, %v1221
        %v1238 = vadd.s32 %v1233, %v1235
        %vm1239 = vc.u32 %v1233, %v1235
        %v1240 = vadd.s32 %v1236, 1
        %v1241 = vsel %vm1239, %v1240, %v1236
        %v1242 = vadd.s32 %v1237, %v1241
        %v1243 = vadd.s32 %v1242, 536870912
        %v1244 = vshrl.u32 %v1243, 30
        %v1245 = vshll.u32 %v1244, 30
        %v1246 = vsub.s32 %v1242, %v1245
        %vm1247 = vcmp.lt.s32.totalorder %v1246, 0
        %v1248 = vsub.s32 0, %v1246
        %v1249 = vsel %vm1247, %v1248, %v1246
        %v1250 = vclz %v1249
        %v1251 = vsub.s32 %v1250, 2
        %vm1252 = vcmp.gt.s32.totalorder 0, %v1251
        %v1253 = vsel %vm1252, 0, %v1251
        %v1254 = vsub.s32 32, %v1253
        %v1255 = vshll.u32 %v1246, %v1253
        %v1256 = vshrl.u32 %v1238, %v1254
        %v1257 = vor.u32 %v1255, %v1256
        %v1258 = vsub.s32 4294967266, %v1253
        %v1259 = vadd.s32 %v1258, 127
        %v1260 = vshll.u32 %v1259, 23
        %v1261 = vor.u32 4788187, %v1260
        %v1262 = vand.u32 2147483647, %v1261
        %v1264 = vcvt.s32.f32 %v1257
        %v1265 = vmul.f32 %v1264, %v1262
        %v1266 = vxor.u32 %v1265, 2147483648
        %v1267 = vsel %vm1184, %v1266, %v1265
        %v1268 = vsub.s32 4, %v1244
        %v1269 = vsel %vm1184, %v1268, %v1244
        %v1270 = vsel %vm1183, %v846, %v1267
        %v1271 = vsel %vm1183, 0, %v1269
        %v1272 = vcosq.f32.pop %v1270
        %v1273 = vsinq.f32.pop %v1270
        %vm1274 = vweird.f32 %v846
        %v1275 = vadd.s32 %v1271, 3
        %v1276 = vand.u32 %v1275, 3
        %vm1277 = vcmp.lt.s32.totalorder %v1276, 2
        %vm1278 = vcmp.eq.s32.totalorder %v1276, 0
        %v1279 = vxor.u32 %v1273, 2147483648
        %v1280 = vsel %vm1278, %v1272, %v1279
        %vm1281 = vcmp.eq.s32.totalorder %v1276, 2
        %v1282 = vxor.u32 %v1272, 2147483648
        %v1283 = vsel %vm1281, %v1282, %v1273
        %v1284 = vsel %vm1277, %v1280, %v1283
        %v1285 = vsel %vm1274, nan, %v1284
        %v1286 = vand.u32 2147483647, %v773
        %vm1287 = vcmp.le.f32.partialorder %v1286, 0.7853982
        %vm1288 = vcmp.lt.s32.totalorder %v773, 0
        %v1289 = vand.u32 %v773, 2139095040
        %v1290 = vshrl.u32 %v1289, 23
        %v1291 = vsub.s32 %v1290, 127
        %v1292 = vand.u32 2147483647, %v773
        %v1293 = vand.u32 %v1292, 8388607
        %v1294 = vor.u32 %v1293, 8388608
        %v1295 = vsub.s32 0, %v1294
        %v1296 = vadd.s32 %v1291, 1
        %vm1297 = vcmp.gt.s32.totalorder %v1296, 0
        %v1298 = vsel %vm1297, %v1296, 0
        %v1299 = vshrl.u32 %v1298, 5
        %v1300 = vand.u32 %v1298, 31
        %v1301 = vsub.s32 32, %v1300
        %v1302 = vshrl.u32 683565275, %v1301
        %v1303 = vshll.u32 683565275, %v1300
        %v1304 = vshrl.u32 2475754826, %v1301
        %v1305 = vor.u32 %v1303, %v1304
        %v1306 = vshll.u32 2475754826, %v1300
        %v1307 = vshrl.u32 2131351028, %v1301
        %v1308 = vor.u32 %v1306, %v1307
        %v1309 = vshll.u32 2131351028, %v1300
        %v1310 = vshrl.u32 2102212464, %v1301
        %v1311 = vor.u32 %v1309, %v1310
        %v1312 = vshll.u32 2102212464, %v1300
        %v1313 = vshrl.u32 920167782, %v1301
        %v1314 = vor.u32 %v1312, %v1313
        %v1315 = vshll.u32 920167782, %v1300
        %v1316 = vshrl.u32 1326507024, %v1301
        %v1317 = vor.u32 %v1315, %v1316
        %vm1318 = vcmp.lt.s32.totalorder %v1299, 1
        %vm1319 = vcmp.lt.s32.totalorder %v1299, 2
        %vm1320 = vcmp.lt.s32.totalorder %v1299, 3
        %vm1321 = vcmp.lt.s32.totalorder %v1299, 4
        %v1322 = vsel %vm1318, %v1302, %v1305
        %v1323 = vsel %vm1321, %v1311, 2102212464
        %v1324 = vsel %vm1320, %v1308, %v1323
        %v1325 = vsel %vm1319, %v1322, %v1324
        %v1326 = vsel %vm1318, %v1305, %v1308
        %v1327 = vsel %vm1321, %v1314, 920167782
        %v1328 = vsel %vm1320, %v1311, %v1327
        %v1329 = vsel %vm1319, %v1326, %v1328
        %v1330 = vsel %vm1318, %v1308, %v1311
        %v1331 = vsel %vm1321, %v1317, 1326507024
        %v1332 = vsel %vm1320, %v1314, %v1331
        %v1333 = vsel %vm1319, %v1330, %v1332
        %v1334 = vshll.u32 %v1294, 8
        %v1335 = vmul.u32.u64.compose %v1334, %v1333
        %v1336 = vextract.low.u32 %v1335
        %v1337 = vextract.high.u32 %v1335
        %v1338 = vmul.u32.u64.compose %v1334, %v1329
        %v1339 = vextract.low.u32 %v1338
        %v1340 = vextract.high.u32 %v1338
        %v1341 = vmul.u32 %v1334, %v1325
        %v1342 = vadd.s32 %v1337, %v1339
        %vm1343 = vc.u32 %v1337, %v1339
        %v1344 = vadd.s32 %v1340, 1
        %v1345 = vsel %vm1343, %v1344, %v1340
        %v1346 = vadd.s32 %v1341, %v1345
        %v1347 = vadd.s32 %v1346, 536870912
        %v1348 = vshrl.u32 %v1347, 30
        %v1349 = vshll.u32 %v1348, 30
        %v1350 = vsub.s32 %v1346, %v1349
        %vm1351 = vcmp.lt.s32.totalorder %v1350, 0
        %v1352 = vsub.s32 0, %v1350
        %v1353 = vsel %vm1351, %v1352, %v1350
        %v1354 = vclz %v1353
        %v1355 = vsub.s32 %v1354, 2
        %vm1356 = vcmp.gt.s32.totalorder 0, %v1355
        %v1357 = vsel %vm1356, 0, %v1355
        %v1358 = vsub.s32 32, %v1357
        %v1359 = vshll.u32 %v1350, %v1357
        %v1360 = vshrl.u32 %v1342, %v1358
        %v1361 = vor.u32 %v1359, %v1360
        %v1362 = vsub.s32 4294967266, %v1357
        %v1363 = vadd.s32 %v1362, 127
        %v1364 = vshll.u32 %v1363, 23
        %v1365 = vor.u32 4788187, %v1364
        %v1366 = vand.u32 2147483647, %v1365
        %v1368 = vcvt.s32.f32 %v1361
        %v1369 = vmul.f32 %v1368, %v1366
        %v1370 = vxor.u32 %v1369, 2147483648
        %v1371 = vsel %vm1288, %v1370, %v1369
        %v1372 = vsub.s32 4, %v1348
        %v1373 = vsel %vm1288, %v1372, %v1348
        %v1374 = vsel %vm1287, %v773, %v1371
        %v1375 = vsel %vm1287, 0, %v1373
        %v1376 = vcosq.f32.pop %v1374
        %v1377 = vsinq.f32.pop %v1374
        %vm1378 = vweird.f32 %v773
        %v1379 = vadd.s32 %v1375, 3
        %v1380 = vand.u32 %v1379, 3
        %vm1381 = vcmp.lt.s32.totalorder %v1380, 2
        %vm1382 = vcmp.eq.s32.totalorder %v1380, 0
        %v1383 = vxor.u32 %v1377, 2147483648
        %v1384 = vsel %vm1382, %v1376, %v1383
        %vm1385 = vcmp.eq.s32.totalorder %v1380, 2
        %v1386 = vxor.u32 %v1376, 2147483648
        %v1387 = vsel %vm1385, %v1386, %v1377
        %v1388 = vsel %vm1381, %v1384, %v1387
        %v1389 = vsel %vm1378, nan, %v1388
        %v1390 = vand.u32 2147483647, %v775
        %vm1391 = vcmp.le.f32.partialorder %v1390, 0.7853982
        %vm1392 = vcmp.lt.s32.totalorder %v775, 0
        %v1393 = vand.u32 %v775, 2139095040
        %v1394 = vshrl.u32 %v1393, 23
        %v1395 = vsub.s32 %v1394, 127
        %v1396 = vand.u32 2147483647, %v775
        %v1397 = vand.u32 %v1396, 8388607
        %v1398 = vor.u32 %v1397, 8388608
        %v1399 = vsub.s32 0, %v1398
        %v1400 = vadd.s32 %v1395, 1
        %vm1401 = vcmp.gt.s32.totalorder %v1400, 0
        %v1402 = vsel %vm1401, %v1400, 0
        %v1403 = vshrl.u32 %v1402, 5
        %v1404 = vand.u32 %v1402, 31
        %v1405 = vsub.s32 32, %v1404
        %v1406 = vshrl.u32 683565275, %v1405
        %v1407 = vshll.u32 683565275, %v1404
        %v1408 = vshrl.u32 2475754826, %v1405
        %v1409 = vor.u32 %v1407, %v1408
        %v1410 = vshll.u32 2475754826, %v1404
        %v1411 = vshrl.u32 2131351028, %v1405
        %v1412 = vor.u32 %v1410, %v1411
        %v1413 = vshll.u32 2131351028, %v1404
        %v1414 = vshrl.u32 2102212464, %v1405
        %v1415 = vor.u32 %v1413, %v1414
        %v1416 = vshll.u32 2102212464, %v1404
        %v1417 = vshrl.u32 920167782, %v1405
        %v1418 = vor.u32 %v1416, %v1417
        %v1419 = vshll.u32 920167782, %v1404
        %v1420 = vshrl.u32 1326507024, %v1405
        %v1421 = vor.u32 %v1419, %v1420
        %vm1422 = vcmp.lt.s32.totalorder %v1403, 1
        %vm1423 = vcmp.lt.s32.totalorder %v1403, 2
        %vm1424 = vcmp.lt.s32.totalorder %v1403, 3
        %vm1425 = vcmp.lt.s32.totalorder %v1403, 4
        %v1426 = vsel %vm1422, %v1406, %v1409
        %v1427 = vsel %vm1425, %v1415, 2102212464
        %v1428 = vsel %vm1424, %v1412, %v1427
        %v1429 = vsel %vm1423, %v1426, %v1428
        %v1430 = vsel %vm1422, %v1409, %v1412
        %v1431 = vsel %vm1425, %v1418, 920167782
        %v1432 = vsel %vm1424, %v1415, %v1431
        %v1433 = vsel %vm1423, %v1430, %v1432
        %v1434 = vsel %vm1422, %v1412, %v1415
        %v1435 = vsel %vm1425, %v1421, 1326507024
        %v1436 = vsel %vm1424, %v1418, %v1435
        %v1437 = vsel %vm1423, %v1434, %v1436
        %v1438 = vshll.u32 %v1398, 8
        %v1439 = vmul.u32.u64.compose %v1438, %v1437
        %v1440 = vextract.low.u32 %v1439
        %v1441 = vextract.high.u32 %v1439
        %v1442 = vmul.u32.u64.compose %v1438, %v1433
        %v1443 = vextract.low.u32 %v1442
        %v1444 = vextract.high.u32 %v1442
        %v1445 = vmul.u32 %v1438, %v1429
        %v1446 = vadd.s32 %v1441, %v1443
        %vm1447 = vc.u32 %v1441, %v1443
        %v1448 = vadd.s32 %v1444, 1
        %v1449 = vsel %vm1447, %v1448, %v1444
        %v1450 = vadd.s32 %v1445, %v1449
        %v1451 = vadd.s32 %v1450, 536870912
        %v1452 = vshrl.u32 %v1451, 30
        %v1453 = vshll.u32 %v1452, 30
        %v1454 = vsub.s32 %v1450, %v1453
        %vm1455 = vcmp.lt.s32.totalorder %v1454, 0
        %v1456 = vsub.s32 0, %v1454
        %v1457 = vsel %vm1455, %v1456, %v1454
        %v1458 = vclz %v1457
        %v1459 = vsub.s32 %v1458, 2
        %vm1460 = vcmp.gt.s32.totalorder 0, %v1459
        %v1461 = vsel %vm1460, 0, %v1459
        %v1462 = vsub.s32 32, %v1461
        %v1463 = vshll.u32 %v1454, %v1461
        %v1464 = vshrl.u32 %v1446, %v1462
        %v1465 = vor.u32 %v1463, %v1464
        %v1466 = vsub.s32 4294967266, %v1461
        %v1467 = vadd.s32 %v1466, 127
        %v1468 = vshll.u32 %v1467, 23
        %v1469 = vor.u32 4788187, %v1468
        %v1470 = vand.u32 2147483647, %v1469
        %v1472 = vcvt.s32.f32 %v1465
        %v1473 = vmul.f32 %v1472, %v1470
        %v1474 = vxor.u32 %v1473, 2147483648
        %v1475 = vsel %vm1392, %v1474, %v1473
        %v1476 = vsub.s32 4, %v1452
        %v1477 = vsel %vm1392, %v1476, %v1452
        %v1478 = vsel %vm1391, %v775, %v1475
        %v1479 = vsel %vm1391, 0, %v1477
        %v1480 = vcosq.f32.pop %v1478
        %v1481 = vsinq.f32.pop %v1478
        %vm1482 = vweird.f32 %v775
        %v1483 = vadd.s32 %v1479, 3
        %v1484 = vand.u32 %v1483, 3
        %vm1485 = vcmp.lt.s32.totalorder %v1484, 2
        %vm1486 = vcmp.eq.s32.totalorder %v1484, 0
        %v1487 = vxor.u32 %v1481, 2147483648
        %v1488 = vsel %vm1486, %v1480, %v1487
        %vm1489 = vcmp.eq.s32.totalorder %v1484, 2
        %v1490 = vxor.u32 %v1480, 2147483648
        %v1491 = vsel %vm1489, %v1490, %v1481
        %v1492 = vsel %vm1485, %v1488, %v1491
        %v1493 = vsel %vm1482, nan, %v1492
        %v1494 = vand.u32 2147483647, %v850
        %vm1495 = vcmp.le.f32.partialorder %v1494, 0.7853982
        %vm1496 = vcmp.lt.s32.totalorder %v850, 0
        %v1497 = vand.u32 %v850, 2139095040
        %v1498 = vshrl.u32 %v1497, 23
        %v1499 = vsub.s32 %v1498, 127
        %v1500 = vand.u32 2147483647, %v850
        %v1501 = vand.u32 %v1500, 8388607
        %v1502 = vor.u32 %v1501, 8388608
        %v1503 = vsub.s32 0, %v1502
        %v1504 = vadd.s32 %v1499, 1
        %vm1505 = vcmp.gt.s32.totalorder %v1504, 0
        %v1506 = vsel %vm1505, %v1504, 0
        %v1507 = vshrl.u32 %v1506, 5
        %v1508 = vand.u32 %v1506, 31
        %v1509 = vsub.s32 32, %v1508
        %v1510 = vshrl.u32 683565275, %v1509
        %v1511 = vshll.u32 683565275, %v1508
        %v1512 = vshrl.u32 2475754826, %v1509
        %v1513 = vor.u32 %v1511, %v1512
        %v1514 = vshll.u32 2475754826, %v1508
        %v1515 = vshrl.u32 2131351028, %v1509
        %v1516 = vor.u32 %v1514, %v1515
        %v1517 = vshll.u32 2131351028, %v1508
        %v1518 = vshrl.u32 2102212464, %v1509
        %v1519 = vor.u32 %v1517, %v1518
        %v1520 = vshll.u32 2102212464, %v1508
        %v1521 = vshrl.u32 920167782, %v1509
        %v1522 = vor.u32 %v1520, %v1521
        %v1523 = vshll.u32 920167782, %v1508
        %v1524 = vshrl.u32 1326507024, %v1509
        %v1525 = vor.u32 %v1523, %v1524
        %vm1526 = vcmp.lt.s32.totalorder %v1507, 1
        %vm1527 = vcmp.lt.s32.totalorder %v1507, 2
        %vm1528 = vcmp.lt.s32.totalorder %v1507, 3
        %vm1529 = vcmp.lt.s32.totalorder %v1507, 4
        %v1530 = vsel %vm1526, %v1510, %v1513
        %v1531 = vsel %vm1529, %v1519, 2102212464
        %v1532 = vsel %vm1528, %v1516, %v1531
        %v1533 = vsel %vm1527, %v1530, %v1532
        %v1534 = vsel %vm1526, %v1513, %v1516
        %v1535 = vsel %vm1529, %v1522, 920167782
        %v1536 = vsel %vm1528, %v1519, %v1535
        %v1537 = vsel %vm1527, %v1534, %v1536
        %v1538 = vsel %vm1526, %v1516, %v1519
        %v1539 = vsel %vm1529, %v1525, 1326507024
        %v1540 = vsel %vm1528, %v1522, %v1539
        %v1541 = vsel %vm1527, %v1538, %v1540
        %v1542 = vshll.u32 %v1502, 8
        %v1543 = vmul.u32.u64.compose %v1542, %v1541
        %v1544 = vextract.low.u32 %v1543
        %v1545 = vextract.high.u32 %v1543
        %v1546 = vmul.u32.u64.compose %v1542, %v1537
        %v1547 = vextract.low.u32 %v1546
        %v1548 = vextract.high.u32 %v1546
        %v1549 = vmul.u32 %v1542, %v1533
        %v1550 = vadd.s32 %v1545, %v1547
        %vm1551 = vc.u32 %v1545, %v1547
        %v1552 = vadd.s32 %v1548, 1
        %v1553 = vsel %vm1551, %v1552, %v1548
        %v1554 = vadd.s32 %v1549, %v1553
        %v1555 = vadd.s32 %v1554, 536870912
        %v1556 = vshrl.u32 %v1555, 30
        %v1557 = vshll.u32 %v1556, 30
        %v1558 = vsub.s32 %v1554, %v1557
        %vm1559 = vcmp.lt.s32.totalorder %v1558, 0
        %v1560 = vsub.s32 0, %v1558
        %v1561 = vsel %vm1559, %v1560, %v1558
        %v1562 = vclz %v1561
        %v1563 = vsub.s32 %v1562, 2
        %vm1564 = vcmp.gt.s32.totalorder 0, %v1563
        %v1565 = vsel %vm1564, 0, %v1563
        %v1566 = vsub.s32 32, %v1565
        %v1567 = vshll.u32 %v1558, %v1565
        %v1568 = vshrl.u32 %v1550, %v1566
        %v1569 = vor.u32 %v1567, %v1568
        %v1570 = vsub.s32 4294967266, %v1565
        %v1571 = vadd.s32 %v1570, 127
        %v1572 = vshll.u32 %v1571, 23
        %v1573 = vor.u32 4788187, %v1572
        %v1574 = vand.u32 2147483647, %v1573
        %v1576 = vcvt.s32.f32 %v1569
        %v1577 = vmul.f32 %v1576, %v1574
        %v1578 = vxor.u32 %v1577, 2147483648
        %v1579 = vsel %vm1496, %v1578, %v1577
        %v1580 = vsub.s32 4, %v1556
        %v1581 = vsel %vm1496, %v1580, %v1556
        %v1582 = vsel %vm1495, %v850, %v1579
        %v1583 = vsel %vm1495, 0, %v1581
        %v1584 = vcosq.f32.pop %v1582
        %v1585 = vsinq.f32.pop %v1582
        %vm1586 = vweird.f32 %v850
        %v1587 = vadd.s32 %v1583, 3
        %v1588 = vand.u32 %v1587, 3
        %vm1589 = vcmp.lt.s32.totalorder %v1588, 2
        %vm1590 = vcmp.eq.s32.totalorder %v1588, 0
        %v1591 = vxor.u32 %v1585, 2147483648
        %v1592 = vsel %vm1590, %v1584, %v1591
        %vm1593 = vcmp.eq.s32.totalorder %v1588, 2
        %v1594 = vxor.u32 %v1584, 2147483648
        %v1595 = vsel %vm1593, %v1594, %v1585
        %v1596 = vsel %vm1589, %v1592, %v1595
        %v1597 = vsel %vm1586, nan, %v1596
        %v1598 = vand.u32 2147483647, %v852
        %vm1599 = vcmp.le.f32.partialorder %v1598, 0.7853982
        %vm1600 = vcmp.lt.s32.totalorder %v852, 0
        %v1601 = vand.u32 %v852, 2139095040
        %v1602 = vshrl.u32 %v1601, 23
        %v1603 = vsub.s32 %v1602, 127
        %v1604 = vand.u32 2147483647, %v852
        %v1605 = vand.u32 %v1604, 8388607
        %v1606 = vor.u32 %v1605, 8388608
        %v1607 = vsub.s32 0, %v1606
        %v1608 = vadd.s32 %v1603, 1
        %vm1609 = vcmp.gt.s32.totalorder %v1608, 0
        %v1610 = vsel %vm1609, %v1608, 0
        %v1611 = vshrl.u32 %v1610, 5
        %v1612 = vand.u32 %v1610, 31
        %v1613 = vsub.s32 32, %v1612
        %v1614 = vshrl.u32 683565275, %v1613
        %v1615 = vshll.u32 683565275, %v1612
        %v1616 = vshrl.u32 2475754826, %v1613
        %v1617 = vor.u32 %v1615, %v1616
        %v1618 = vshll.u32 2475754826, %v1612
        %v1619 = vshrl.u32 2131351028, %v1613
        %v1620 = vor.u32 %v1618, %v1619
        %v1621 = vshll.u32 2131351028, %v1612
        %v1622 = vshrl.u32 2102212464, %v1613
        %v1623 = vor.u32 %v1621, %v1622
        %v1624 = vshll.u32 2102212464, %v1612
        %v1625 = vshrl.u32 920167782, %v1613
        %v1626 = vor.u32 %v1624, %v1625
        %v1627 = vshll.u32 920167782, %v1612
        %v1628 = vshrl.u32 1326507024, %v1613
        %v1629 = vor.u32 %v1627, %v1628
        %vm1630 = vcmp.lt.s32.totalorder %v1611, 1
        %vm1631 = vcmp.lt.s32.totalorder %v1611, 2
        %vm1632 = vcmp.lt.s32.totalorder %v1611, 3
        %vm1633 = vcmp.lt.s32.totalorder %v1611, 4
        %v1634 = vsel %vm1630, %v1614, %v1617
        %v1635 = vsel %vm1633, %v1623, 2102212464
        %v1636 = vsel %vm1632, %v1620, %v1635
        %v1637 = vsel %vm1631, %v1634, %v1636
        %v1638 = vsel %vm1630, %v1617, %v1620
        %v1639 = vsel %vm1633, %v1626, 920167782
        %v1640 = vsel %vm1632, %v1623, %v1639
        %v1641 = vsel %vm1631, %v1638, %v1640
        %v1642 = vsel %vm1630, %v1620, %v1623
        %v1643 = vsel %vm1633, %v1629, 1326507024
        %v1644 = vsel %vm1632, %v1626, %v1643
        %v1645 = vsel %vm1631, %v1642, %v1644
        %v1646 = vshll.u32 %v1606, 8
        %v1647 = vmul.u32.u64.compose %v1646, %v1645
        %v1648 = vextract.low.u32 %v1647
        %v1649 = vextract.high.u32 %v1647
        %v1650 = vmul.u32.u64.compose %v1646, %v1641
        %v1651 = vextract.low.u32 %v1650
        %v1652 = vextract.high.u32 %v1650
        %v1653 = vmul.u32 %v1646, %v1637
        %v1654 = vadd.s32 %v1649, %v1651
        %vm1655 = vc.u32 %v1649, %v1651
        %v1656 = vadd.s32 %v1652, 1
        %v1657 = vsel %vm1655, %v1656, %v1652
        %v1658 = vadd.s32 %v1653, %v1657
        %v1659 = vadd.s32 %v1658, 536870912
        %v1660 = vshrl.u32 %v1659, 30
        %v1661 = vshll.u32 %v1660, 30
        %v1662 = vsub.s32 %v1658, %v1661
        %vm1663 = vcmp.lt.s32.totalorder %v1662, 0
        %v1664 = vsub.s32 0, %v1662
        %v1665 = vsel %vm1663, %v1664, %v1662
        %v1666 = vclz %v1665
        %v1667 = vsub.s32 %v1666, 2
        %vm1668 = vcmp.gt.s32.totalorder 0, %v1667
        %v1669 = vsel %vm1668, 0, %v1667
        %v1670 = vsub.s32 32, %v1669
        %v1671 = vshll.u32 %v1662, %v1669
        %v1672 = vshrl.u32 %v1654, %v1670
        %v1673 = vor.u32 %v1671, %v1672
        %v1674 = vsub.s32 4294967266, %v1669
        %v1675 = vadd.s32 %v1674, 127
        %v1676 = vshll.u32 %v1675, 23
        %v1677 = vor.u32 4788187, %v1676
        %v1678 = vand.u32 2147483647, %v1677
        %v1680 = vcvt.s32.f32 %v1673
        %v1681 = vmul.f32 %v1680, %v1678
        %v1682 = vxor.u32 %v1681, 2147483648
        %v1683 = vsel %vm1600, %v1682, %v1681
        %v1684 = vsub.s32 4, %v1660
        %v1685 = vsel %vm1600, %v1684, %v1660
        %v1686 = vsel %vm1599, %v852, %v1683
        %v1687 = vsel %vm1599, 0, %v1685
        %v1688 = vcosq.f32.pop %v1686
        %v1689 = vsinq.f32.pop %v1686
        %vm1690 = vweird.f32 %v852
        %v1691 = vadd.s32 %v1687, 3
        %v1692 = vand.u32 %v1691, 3
        %vm1693 = vcmp.lt.s32.totalorder %v1692, 2
        %vm1694 = vcmp.eq.s32.totalorder %v1692, 0
        %v1695 = vxor.u32 %v1689, 2147483648
        %v1696 = vsel %vm1694, %v1688, %v1695
        %vm1697 = vcmp.eq.s32.totalorder %v1692, 2
        %v1698 = vxor.u32 %v1688, 2147483648
        %v1699 = vsel %vm1697, %v1698, %v1689
        %v1700 = vsel %vm1693, %v1696, %v1699
        %v1701 = vsel %vm1690, nan, %v1700
        %v1702 = vmul.f32 %v862, %v973
        %v1703 = vmul.f32 %v863, %v1077
        %v1704 = vmul.f32 %v864, %v1181
        %v1705 = vmul.f32 %v865, %v1285
        %v1706 = vmul.f32 %v866, %v1389
        %v1707 = vmul.f32 %v867, %v1493
        %v1708 = vmul.f32 %v868, %v1597
        %v1709 = vmul.f32 %v869, %v1701
        %v1710 = vadd.f32 %v1702, %v1706
        %v1711 = vrot.slane %v1710, 4
        %v1712 = vadd.f32 %v1710, %v1711
        %v1713 = vrot.slane %v1712, 2
        %v1714 = vadd.f32 %v1712, %v1713
        %v1715 = vrot.slane %v1714, 1
        %v1716 = vadd.f32 %v1714, %v1715
        %v1717 = vadd.f32 %v1703, %v1707
        %v1718 = vrot.slane %v1717, 4
        %v1719 = vadd.f32 %v1717, %v1718
        %v1720 = vrot.slane %v1719, 2
        %v1721 = vadd.f32 %v1719, %v1720
        %v1722 = vrot.slane %v1721, 1
        %v1723 = vadd.f32 %v1721, %v1722
        %v1724 = vadd.f32 %v1704, %v1708
        %v1725 = vrot.slane %v1724, 4
        %v1726 = vadd.f32 %v1724, %v1725
        %v1727 = vrot.slane %v1726, 2
        %v1728 = vadd.f32 %v1726, %v1727
        %v1729 = vrot.slane %v1728, 1
        %v1730 = vadd.f32 %v1728, %v1729
        %v1731 = vadd.f32 %v1705, %v1709
        %v1732 = vrot.slane %v1731, 4
        %v1733 = vadd.f32 %v1731, %v1732
        %v1734 = vrot.slane %v1733, 2
        %v1735 = vadd.f32 %v1733, %v1734
        %v1736 = vrot.slane %v1735, 1
        %v1737 = vadd.f32 %v1735, %v1736
        %v1742 = vcombine.low %v1716, %v1723
        %v1743 = vcombine.low %v1730, %v1737
        %v1745 = vunpack.c.l.s4 1966171168
        %v1746 = vunpack.c.0.s8 %v1745
        %v1747 = vlaneseq
        %v1748 = vshrl.u32 %v1747, 7
        %v1749 = vsub.s32 %v1746, %v1748
        %v1750 = vrot.slane %v1742, %v1749
        %v1752 = vunpack.c.l.s4 1966171168
        %v1753 = vunpack.c.0.s8 %v1752
        %v1754 = vlaneseq
        %v1755 = vshrl.u32 %v1754, 7
        %v1756 = vsub.s32 %v1753, %v1755
        %v1757 = vrot.slane %v1743, %v1756
        %v1758 = vcombine.low %v1750, %v1757
        %v1760 = vunpack.c.l.s4 1966171168
        %v1761 = vunpack.c.0.s8 %v1760
        %v1762 = vlaneseq
        %v1763 = vshrl.u32 %v1762, 7
        %v1764 = vsub.s32 %v1761, %v1763
        %v1765 = vrot.slane %v1758, %v1764
        %v1767 = vlaneseq
        %vm1768 = vcmp.ge.s32.totalorder %v1767, 0
        %vm1769 = vcmp.lt.s32.totalorder %v1767, 512
        %vm1770 = vmand %vm1768, %vm1769
        %1771 = vst.msk [vmem:[%s326] sm:$0xf] %vm1770, %v1765
        %s1772 = scalar_lea.vmem %s270, 32 [#allocation3]
        %v1773 = vld [vmem:[%s1772] sm:$0xff]
        %v1774 = vld [vmem:[%s1772 + $0x8] sm:$0xff]
        %v1775 = vld [vmem:[%s1772 + $0x10] sm:$0xff]
        %v1776 = vld [vmem:[%s1772 + $0x18] sm:$0xff]
        %s1777 = scalar_lea.vmem %s279, 32 [#allocation6]
        %v1778 = vld [vmem:[%s1777] sm:$0xff]
        %v1779 = vld [vmem:[%s1777 + $0x8] sm:$0xff]
        %v1780 = vld [vmem:[%s1777 + $0x10] sm:$0xff]
        %v1781 = vld [vmem:[%s1777 + $0x18] sm:$0xff]
        %1782 = vmatprep.subr.mxu0 0.0
        %1783 = vmatpush1.msra.mxu0 0.0
        %1784 = vmatprep.subr.mxu0 0.0
        %1785 = vmatpush1.msra.mxu0 0.0
        %1786 = vmatprep.subr.mxu0 0.0
        %1787 = vmatpush1.msra.mxu0 0.0
        %1788 = vmatprep.subr.mxu0 0.0
        %1789 = vmatpush1.msra.mxu0 0.0
        %1790 = vmatprep.subr.mxu0 0.0
        %1791 = vmatpush1.msra.mxu0 0.0
        %1792 = vmatprep.subr.mxu0 0.0
        %1793 = vmatpush1.msra.mxu0 0.0
        %1794 = vmatprep.subr.mxu0 0.0
        %1795 = vmatpush1.msra.mxu0 0.0
        %1796 = vmatprep.subr.mxu0 0.0
        %1797 = vmatpush1.msra.mxu0 0.0
        %1798 = vmatprep.subr.mxu0 0.0
        %1799 = vmatpush1.msra.mxu0 0.0
        %1800 = vmatprep.subr.mxu0 0.0
        %1801 = vmatpush1.msra.mxu0 0.0
        %1802 = vmatprep.subr.mxu0 0.0
        %1803 = vmatpush1.msra.mxu0 0.0
        %1804 = vmatprep.subr.mxu0 0.0
        %1805 = vmatpush1.msra.mxu0 0.0
        %1806 = vmatprep.subr.mxu0 0.0
        %1807 = vmatpush1.msra.mxu0 0.0
        %1808 = vmatprep.subr.mxu0 0.0
        %1809 = vmatpush1.msra.mxu0 0.0
        %1810 = vmatprep.subr.mxu0 0.0
        %1811 = vmatpush1.msra.mxu0 0.0
        %1812 = vmatprep.subr.mxu0 %v1774
        %1813 = vmatpush1.msra.mxu0 %v1773
        %1814 = vmatprep.subr.mxu0 0.0
        %1815 = vmatpush2.msra.mxu0 0.0
        %1816 = vmatprep.subr.mxu0 0.0
        %1817 = vmatpush2.msra.mxu0 0.0
        %1818 = vmatprep.subr.mxu0 0.0
        %1819 = vmatpush2.msra.mxu0 0.0
        %1820 = vmatprep.subr.mxu0 0.0
        %1821 = vmatpush2.msra.mxu0 0.0
        %1822 = vmatprep.subr.mxu0 0.0
        %1823 = vmatpush2.msra.mxu0 0.0
        %1824 = vmatprep.subr.mxu0 0.0
        %1825 = vmatpush2.msra.mxu0 0.0
        %1826 = vmatprep.subr.mxu0 0.0
        %1827 = vmatpush2.msra.mxu0 0.0
        %1828 = vmatprep.subr.mxu0 0.0
        %1829 = vmatpush2.msra.mxu0 0.0
        %1830 = vmatprep.subr.mxu0 0.0
        %1831 = vmatpush2.msra.mxu0 0.0
        %1832 = vmatprep.subr.mxu0 0.0
        %1833 = vmatpush2.msra.mxu0 0.0
        %1834 = vmatprep.subr.mxu0 0.0
        %1835 = vmatpush2.msra.mxu0 0.0
        %1836 = vmatprep.subr.mxu0 0.0
        %1837 = vmatpush2.msra.mxu0 0.0
        %1838 = vmatprep.subr.mxu0 0.0
        %1839 = vmatpush2.msra.mxu0 0.0
        %1840 = vmatprep.subr.mxu0 0.0
        %1841 = vmatpush2.msra.mxu0 0.0
        %1842 = vmatprep.subr.mxu0 0.0
        %1843 = vmatpush2.msra.mxu0 0.0
        %1844 = vmatprep.subr.mxu0 0.0
        %1845 = vmatpush2.msra.mxu0 0.0
        %1846 = vmatprep.mubr.f32.mxu0 0.0
        %1847 = vmatmul.mubr.f32.gmra.mxu0 %v371
        %v1848 = vpop.f32.mrf.mxu0
        %v1849 = vadd.f32 0.0, %v1848
        %v1850 = vpop.f32.mrf.mxu0
        %v1851 = vadd.f32 0.0, %v1850
        %1852 = vmatprep.mubr.f32.mxu0 0.0
        %1853 = vmatmul.mubr.f32.gmra.mxu0 %v374
        %v1854 = vpop.f32.mrf.mxu0
        %v1855 = vadd.f32 0.0, %v1854
        %v1856 = vpop.f32.mrf.mxu0
        %v1857 = vadd.f32 0.0, %v1856
        %1858 = vdwg.mxu0
        %1859 = vmatprep.subr.mxu0 0.0
        %1860 = vmatpush1.msra.mxu0 0.0
        %1861 = vmatprep.subr.mxu0 0.0
        %1862 = vmatpush1.msra.mxu0 0.0
        %1863 = vmatprep.subr.mxu0 0.0
        %1864 = vmatpush1.msra.mxu0 0.0
        %1865 = vmatprep.subr.mxu0 0.0
        %1866 = vmatpush1.msra.mxu0 0.0
        %1867 = vmatprep.subr.mxu0 0.0
        %1868 = vmatpush1.msra.mxu0 0.0
        %1869 = vmatprep.subr.mxu0 0.0
        %1870 = vmatpush1.msra.mxu0 0.0
        %1871 = vmatprep.subr.mxu0 0.0
        %1872 = vmatpush1.msra.mxu0 0.0
        %1873 = vmatprep.subr.mxu0 0.0
        %1874 = vmatpush1.msra.mxu0 0.0
        %1875 = vmatprep.subr.mxu0 0.0
        %1876 = vmatpush1.msra.mxu0 0.0
        %1877 = vmatprep.subr.mxu0 0.0
        %1878 = vmatpush1.msra.mxu0 0.0
        %1879 = vmatprep.subr.mxu0 0.0
        %1880 = vmatpush1.msra.mxu0 0.0
        %1881 = vmatprep.subr.mxu0 0.0
        %1882 = vmatpush1.msra.mxu0 0.0
        %1883 = vmatprep.subr.mxu0 0.0
        %1884 = vmatpush1.msra.mxu0 0.0
        %1885 = vmatprep.subr.mxu0 0.0
        %1886 = vmatpush1.msra.mxu0 0.0
        %1887 = vmatprep.subr.mxu0 0.0
        %1888 = vmatpush1.msra.mxu0 0.0
        %1889 = vmatprep.subr.mxu0 %v1776
        %1890 = vmatpush1.msra.mxu0 %v1775
        %1891 = vmatprep.subr.mxu0 0.0
        %1892 = vmatpush2.msra.mxu0 0.0
        %1893 = vmatprep.subr.mxu0 0.0
        %1894 = vmatpush2.msra.mxu0 0.0
        %1895 = vmatprep.subr.mxu0 0.0
        %1896 = vmatpush2.msra.mxu0 0.0
        %1897 = vmatprep.subr.mxu0 0.0
        %1898 = vmatpush2.msra.mxu0 0.0
        %1899 = vmatprep.subr.mxu0 0.0
        %1900 = vmatpush2.msra.mxu0 0.0
        %1901 = vmatprep.subr.mxu0 0.0
        %1902 = vmatpush2.msra.mxu0 0.0
        %1903 = vmatprep.subr.mxu0 0.0
        %1904 = vmatpush2.msra.mxu0 0.0
        %1905 = vmatprep.subr.mxu0 0.0
        %1906 = vmatpush2.msra.mxu0 0.0
        %1907 = vmatprep.subr.mxu0 0.0
        %1908 = vmatpush2.msra.mxu0 0.0
        %1909 = vmatprep.subr.mxu0 0.0
        %1910 = vmatpush2.msra.mxu0 0.0
        %1911 = vmatprep.subr.mxu0 0.0
        %1912 = vmatpush2.msra.mxu0 0.0
        %1913 = vmatprep.subr.mxu0 0.0
        %1914 = vmatpush2.msra.mxu0 0.0
        %1915 = vmatprep.subr.mxu0 0.0
        %1916 = vmatpush2.msra.mxu0 0.0
        %1917 = vmatprep.subr.mxu0 0.0
        %1918 = vmatpush2.msra.mxu0 0.0
        %1919 = vmatprep.subr.mxu0 0.0
        %1920 = vmatpush2.msra.mxu0 0.0
        %1921 = vmatprep.subr.mxu0 0.0
        %1922 = vmatpush2.msra.mxu0 0.0
        %1923 = vmatprep.mubr.f32.mxu0 0.0
        %1924 = vmatmul.mubr.f32.gmra.mxu0 %v371
        %v1925 = vpop.f32.mrf.mxu0
        %v1926 = vadd.f32 0.0, %v1925
        %v1927 = vpop.f32.mrf.mxu0
        %v1928 = vadd.f32 0.0, %v1927
        %1929 = vmatprep.mubr.f32.mxu0 0.0
        %1930 = vmatmul.mubr.f32.gmra.mxu0 %v374
        %v1931 = vpop.f32.mrf.mxu0
        %v1932 = vadd.f32 0.0, %v1931
        %v1933 = vpop.f32.mrf.mxu0
        %v1934 = vadd.f32 0.0, %v1933
        %1935 = vdwg.mxu0
        %1936 = vmatprep.subr.mxu0 0.0
        %1937 = vmatpush1.msra.mxu0 0.0
        %1938 = vmatprep.subr.mxu0 0.0
        %1939 = vmatpush1.msra.mxu0 0.0
        %1940 = vmatprep.subr.mxu0 0.0
        %1941 = vmatpush1.msra.mxu0 0.0
        %1942 = vmatprep.subr.mxu0 0.0
        %1943 = vmatpush1.msra.mxu0 0.0
        %1944 = vmatprep.subr.mxu0 0.0
        %1945 = vmatpush1.msra.mxu0 0.0
        %1946 = vmatprep.subr.mxu0 0.0
        %1947 = vmatpush1.msra.mxu0 0.0
        %1948 = vmatprep.subr.mxu0 0.0
        %1949 = vmatpush1.msra.mxu0 0.0
        %1950 = vmatprep.subr.mxu0 0.0
        %1951 = vmatpush1.msra.mxu0 0.0
        %1952 = vmatprep.subr.mxu0 0.0
        %1953 = vmatpush1.msra.mxu0 0.0
        %1954 = vmatprep.subr.mxu0 0.0
        %1955 = vmatpush1.msra.mxu0 0.0
        %1956 = vmatprep.subr.mxu0 0.0
        %1957 = vmatpush1.msra.mxu0 0.0
        %1958 = vmatprep.subr.mxu0 0.0
        %1959 = vmatpush1.msra.mxu0 0.0
        %1960 = vmatprep.subr.mxu0 0.0
        %1961 = vmatpush1.msra.mxu0 0.0
        %1962 = vmatprep.subr.mxu0 0.0
        %1963 = vmatpush1.msra.mxu0 0.0
        %1964 = vmatprep.subr.mxu0 0.0
        %1965 = vmatpush1.msra.mxu0 0.0
        %1966 = vmatprep.subr.mxu0 %v1774
        %1967 = vmatpush1.msra.mxu0 %v1773
        %1968 = vmatprep.subr.mxu0 0.0
        %1969 = vmatpush2.msra.mxu0 0.0
        %1970 = vmatprep.subr.mxu0 0.0
        %1971 = vmatpush2.msra.mxu0 0.0
        %1972 = vmatprep.subr.mxu0 0.0
        %1973 = vmatpush2.msra.mxu0 0.0
        %1974 = vmatprep.subr.mxu0 0.0
        %1975 = vmatpush2.msra.mxu0 0.0
        %1976 = vmatprep.subr.mxu0 0.0
        %1977 = vmatpush2.msra.mxu0 0.0
        %1978 = vmatprep.subr.mxu0 0.0
        %1979 = vmatpush2.msra.mxu0 0.0
        %1980 = vmatprep.subr.mxu0 0.0
        %1981 = vmatpush2.msra.mxu0 0.0
        %1982 = vmatprep.subr.mxu0 0.0
        %1983 = vmatpush2.msra.mxu0 0.0
        %1984 = vmatprep.subr.mxu0 0.0
        %1985 = vmatpush2.msra.mxu0 0.0
        %1986 = vmatprep.subr.mxu0 0.0
        %1987 = vmatpush2.msra.mxu0 0.0
        %1988 = vmatprep.subr.mxu0 0.0
        %1989 = vmatpush2.msra.mxu0 0.0
        %1990 = vmatprep.subr.mxu0 0.0
        %1991 = vmatpush2.msra.mxu0 0.0
        %1992 = vmatprep.subr.mxu0 0.0
        %1993 = vmatpush2.msra.mxu0 0.0
        %1994 = vmatprep.subr.mxu0 0.0
        %1995 = vmatpush2.msra.mxu0 0.0
        %1996 = vmatprep.subr.mxu0 0.0
        %1997 = vmatpush2.msra.mxu0 0.0
        %1998 = vmatprep.subr.mxu0 0.0
        %1999 = vmatpush2.msra.mxu0 0.0
        %2000 = vmatprep.mubr.f32.mxu0 0.0
        %2001 = vmatmul.mubr.f32.gmra.mxu0 %v531
        %v2002 = vpop.f32.mrf.mxu0
        %v2003 = vadd.f32 0.0, %v2002
        %v2004 = vpop.f32.mrf.mxu0
        %v2005 = vadd.f32 0.0, %v2004
        %2006 = vmatprep.mubr.f32.mxu0 0.0
        %2007 = vmatmul.mubr.f32.gmra.mxu0 %v534
        %v2008 = vpop.f32.mrf.mxu0
        %v2009 = vadd.f32 0.0, %v2008
        %v2010 = vpop.f32.mrf.mxu0
        %v2011 = vadd.f32 0.0, %v2010
        %2012 = vdwg.mxu0
        %2013 = vmatprep.subr.mxu0 0.0
        %2014 = vmatpush1.msra.mxu0 0.0
        %2015 = vmatprep.subr.mxu0 0.0
        %2016 = vmatpush1.msra.mxu0 0.0
        %2017 = vmatprep.subr.mxu0 0.0
        %2018 = vmatpush1.msra.mxu0 0.0
        %2019 = vmatprep.subr.mxu0 0.0
        %2020 = vmatpush1.msra.mxu0 0.0
        %2021 = vmatprep.subr.mxu0 0.0
        %2022 = vmatpush1.msra.mxu0 0.0
        %2023 = vmatprep.subr.mxu0 0.0
        %2024 = vmatpush1.msra.mxu0 0.0
        %2025 = vmatprep.subr.mxu0 0.0
        %2026 = vmatpush1.msra.mxu0 0.0
        %2027 = vmatprep.subr.mxu0 0.0
        %2028 = vmatpush1.msra.mxu0 0.0
        %2029 = vmatprep.subr.mxu0 0.0
        %2030 = vmatpush1.msra.mxu0 0.0
        %2031 = vmatprep.subr.mxu0 0.0
        %2032 = vmatpush1.msra.mxu0 0.0
        %2033 = vmatprep.subr.mxu0 0.0
        %2034 = vmatpush1.msra.mxu0 0.0
        %2035 = vmatprep.subr.mxu0 0.0
        %2036 = vmatpush1.msra.mxu0 0.0
        %2037 = vmatprep.subr.mxu0 0.0
        %2038 = vmatpush1.msra.mxu0 0.0
        %2039 = vmatprep.subr.mxu0 0.0
        %2040 = vmatpush1.msra.mxu0 0.0
        %2041 = vmatprep.subr.mxu0 0.0
        %2042 = vmatpush1.msra.mxu0 0.0
        %2043 = vmatprep.subr.mxu0 %v1776
        %2044 = vmatpush1.msra.mxu0 %v1775
        %2045 = vmatprep.subr.mxu0 0.0
        %2046 = vmatpush2.msra.mxu0 0.0
        %2047 = vmatprep.subr.mxu0 0.0
        %2048 = vmatpush2.msra.mxu0 0.0
        %2049 = vmatprep.subr.mxu0 0.0
        %2050 = vmatpush2.msra.mxu0 0.0
        %2051 = vmatprep.subr.mxu0 0.0
        %2052 = vmatpush2.msra.mxu0 0.0
        %2053 = vmatprep.subr.mxu0 0.0
        %2054 = vmatpush2.msra.mxu0 0.0
        %2055 = vmatprep.subr.mxu0 0.0
        %2056 = vmatpush2.msra.mxu0 0.0
        %2057 = vmatprep.subr.mxu0 0.0
        %2058 = vmatpush2.msra.mxu0 0.0
        %2059 = vmatprep.subr.mxu0 0.0
        %2060 = vmatpush2.msra.mxu0 0.0
        %2061 = vmatprep.subr.mxu0 0.0
        %2062 = vmatpush2.msra.mxu0 0.0
        %2063 = vmatprep.subr.mxu0 0.0
        %2064 = vmatpush2.msra.mxu0 0.0
        %2065 = vmatprep.subr.mxu0 0.0
        %2066 = vmatpush2.msra.mxu0 0.0
        %2067 = vmatprep.subr.mxu0 0.0
        %2068 = vmatpush2.msra.mxu0 0.0
        %2069 = vmatprep.subr.mxu0 0.0
        %2070 = vmatpush2.msra.mxu0 0.0
        %2071 = vmatprep.subr.mxu0 0.0
        %2072 = vmatpush2.msra.mxu0 0.0
        %2073 = vmatprep.subr.mxu0 0.0
        %2074 = vmatpush2.msra.mxu0 0.0
        %2075 = vmatprep.subr.mxu0 0.0
        %2076 = vmatpush2.msra.mxu0 0.0
        %2077 = vmatprep.mubr.f32.mxu0 0.0
        %2078 = vmatmul.mubr.f32.gmra.mxu0 %v531
        %v2079 = vpop.f32.mrf.mxu0
        %v2080 = vadd.f32 0.0, %v2079
        %v2081 = vpop.f32.mrf.mxu0
        %v2082 = vadd.f32 0.0, %v2081
        %2083 = vmatprep.mubr.f32.mxu0 0.0
        %2084 = vmatmul.mubr.f32.gmra.mxu0 %v534
        %v2085 = vpop.f32.mrf.mxu0
        %v2086 = vadd.f32 0.0, %v2085
        %v2087 = vpop.f32.mrf.mxu0
        %v2088 = vadd.f32 0.0, %v2087
        %2089 = vdwg.mxu0
        %2090 = vmatprep.subr.mxu0 0.0
        %2091 = vmatpush1.msra.mxu0 0.0
        %2092 = vmatprep.subr.mxu0 0.0
        %2093 = vmatpush1.msra.mxu0 0.0
        %2094 = vmatprep.subr.mxu0 0.0
        %2095 = vmatpush1.msra.mxu0 0.0
        %2096 = vmatprep.subr.mxu0 0.0
        %2097 = vmatpush1.msra.mxu0 0.0
        %2098 = vmatprep.subr.mxu0 0.0
        %2099 = vmatpush1.msra.mxu0 0.0
        %2100 = vmatprep.subr.mxu0 0.0
        %2101 = vmatpush1.msra.mxu0 0.0
        %2102 = vmatprep.subr.mxu0 0.0
        %2103 = vmatpush1.msra.mxu0 0.0
        %2104 = vmatprep.subr.mxu0 0.0
        %2105 = vmatpush1.msra.mxu0 0.0
        %2106 = vmatprep.subr.mxu0 0.0
        %2107 = vmatpush1.msra.mxu0 0.0
        %2108 = vmatprep.subr.mxu0 0.0
        %2109 = vmatpush1.msra.mxu0 0.0
        %2110 = vmatprep.subr.mxu0 0.0
        %2111 = vmatpush1.msra.mxu0 0.0
        %2112 = vmatprep.subr.mxu0 0.0
        %2113 = vmatpush1.msra.mxu0 0.0
        %2114 = vmatprep.subr.mxu0 0.0
        %2115 = vmatpush1.msra.mxu0 0.0
        %2116 = vmatprep.subr.mxu0 0.0
        %2117 = vmatpush1.msra.mxu0 0.0
        %2118 = vmatprep.subr.mxu0 0.0
        %2119 = vmatpush1.msra.mxu0 0.0
        %2120 = vmatprep.subr.mxu0 %v1779
        %2121 = vmatpush1.msra.mxu0 %v1778
        %2122 = vmatprep.subr.mxu0 0.0
        %2123 = vmatpush2.msra.mxu0 0.0
        %2124 = vmatprep.subr.mxu0 0.0
        %2125 = vmatpush2.msra.mxu0 0.0
        %2126 = vmatprep.subr.mxu0 0.0
        %2127 = vmatpush2.msra.mxu0 0.0
        %2128 = vmatprep.subr.mxu0 0.0
        %2129 = vmatpush2.msra.mxu0 0.0
        %2130 = vmatprep.subr.mxu0 0.0
        %2131 = vmatpush2.msra.mxu0 0.0
        %2132 = vmatprep.subr.mxu0 0.0
        %2133 = vmatpush2.msra.mxu0 0.0
        %2134 = vmatprep.subr.mxu0 0.0
        %2135 = vmatpush2.msra.mxu0 0.0
        %2136 = vmatprep.subr.mxu0 0.0
        %2137 = vmatpush2.msra.mxu0 0.0
        %2138 = vmatprep.subr.mxu0 0.0
        %2139 = vmatpush2.msra.mxu0 0.0
        %2140 = vmatprep.subr.mxu0 0.0
        %2141 = vmatpush2.msra.mxu0 0.0
        %2142 = vmatprep.subr.mxu0 0.0
        %2143 = vmatpush2.msra.mxu0 0.0
        %2144 = vmatprep.subr.mxu0 0.0
        %2145 = vmatpush2.msra.mxu0 0.0
        %2146 = vmatprep.subr.mxu0 0.0
        %2147 = vmatpush2.msra.mxu0 0.0
        %2148 = vmatprep.subr.mxu0 0.0
        %2149 = vmatpush2.msra.mxu0 0.0
        %2150 = vmatprep.subr.mxu0 0.0
        %2151 = vmatpush2.msra.mxu0 0.0
        %2152 = vmatprep.subr.mxu0 0.0
        %2153 = vmatpush2.msra.mxu0 0.0
        %2154 = vmatprep.mubr.f32.mxu0 0.0
        %2155 = vmatmul.mubr.f32.gmra.mxu0 %v371
        %v2156 = vpop.f32.mrf.mxu0
        %v2157 = vadd.f32 %v693, %v2156
        %v2158 = vpop.f32.mrf.mxu0
        %v2159 = vadd.f32 %v693, %v2158
        %2160 = vmatprep.mubr.f32.mxu0 0.0
        %2161 = vmatmul.mubr.f32.gmra.mxu0 %v374
        %v2162 = vpop.f32.mrf.mxu0
        %v2163 = vadd.f32 %v698, %v2162
        %v2164 = vpop.f32.mrf.mxu0
        %v2165 = vadd.f32 %v698, %v2164
        %2166 = vdwg.mxu0
        %2167 = vmatprep.subr.mxu0 0.0
        %2168 = vmatpush1.msra.mxu0 0.0
        %2169 = vmatprep.subr.mxu0 0.0
        %2170 = vmatpush1.msra.mxu0 0.0
        %2171 = vmatprep.subr.mxu0 0.0
        %2172 = vmatpush1.msra.mxu0 0.0
        %2173 = vmatprep.subr.mxu0 0.0
        %2174 = vmatpush1.msra.mxu0 0.0
        %2175 = vmatprep.subr.mxu0 0.0
        %2176 = vmatpush1.msra.mxu0 0.0
        %2177 = vmatprep.subr.mxu0 0.0
        %2178 = vmatpush1.msra.mxu0 0.0
        %2179 = vmatprep.subr.mxu0 0.0
        %2180 = vmatpush1.msra.mxu0 0.0
        %2181 = vmatprep.subr.mxu0 0.0
        %2182 = vmatpush1.msra.mxu0 0.0
        %2183 = vmatprep.subr.mxu0 0.0
        %2184 = vmatpush1.msra.mxu0 0.0
        %2185 = vmatprep.subr.mxu0 0.0
        %2186 = vmatpush1.msra.mxu0 0.0
        %2187 = vmatprep.subr.mxu0 0.0
        %2188 = vmatpush1.msra.mxu0 0.0
        %2189 = vmatprep.subr.mxu0 0.0
        %2190 = vmatpush1.msra.mxu0 0.0
        %2191 = vmatprep.subr.mxu0 0.0
        %2192 = vmatpush1.msra.mxu0 0.0
        %2193 = vmatprep.subr.mxu0 0.0
        %2194 = vmatpush1.msra.mxu0 0.0
        %2195 = vmatprep.subr.mxu0 0.0
        %2196 = vmatpush1.msra.mxu0 0.0
        %2197 = vmatprep.subr.mxu0 %v1781
        %2198 = vmatpush1.msra.mxu0 %v1780
        %2199 = vmatprep.subr.mxu0 0.0
        %2200 = vmatpush2.msra.mxu0 0.0
        %2201 = vmatprep.subr.mxu0 0.0
        %2202 = vmatpush2.msra.mxu0 0.0
        %2203 = vmatprep.subr.mxu0 0.0
        %2204 = vmatpush2.msra.mxu0 0.0
        %2205 = vmatprep.subr.mxu0 0.0
        %2206 = vmatpush2.msra.mxu0 0.0
        %2207 = vmatprep.subr.mxu0 0.0
        %2208 = vmatpush2.msra.mxu0 0.0
        %2209 = vmatprep.subr.mxu0 0.0
        %2210 = vmatpush2.msra.mxu0 0.0
        %2211 = vmatprep.subr.mxu0 0.0
        %2212 = vmatpush2.msra.mxu0 0.0
        %2213 = vmatprep.subr.mxu0 0.0
        %2214 = vmatpush2.msra.mxu0 0.0
        %2215 = vmatprep.subr.mxu0 0.0
        %2216 = vmatpush2.msra.mxu0 0.0
        %2217 = vmatprep.subr.mxu0 0.0
        %2218 = vmatpush2.msra.mxu0 0.0
        %2219 = vmatprep.subr.mxu0 0.0
        %2220 = vmatpush2.msra.mxu0 0.0
        %2221 = vmatprep.subr.mxu0 0.0
        %2222 = vmatpush2.msra.mxu0 0.0
        %2223 = vmatprep.subr.mxu0 0.0
        %2224 = vmatpush2.msra.mxu0 0.0
        %2225 = vmatprep.subr.mxu0 0.0
        %2226 = vmatpush2.msra.mxu0 0.0
        %2227 = vmatprep.subr.mxu0 0.0
        %2228 = vmatpush2.msra.mxu0 0.0
        %2229 = vmatprep.subr.mxu0 0.0
        %2230 = vmatpush2.msra.mxu0 0.0
        %2231 = vmatprep.mubr.f32.mxu0 0.0
        %2232 = vmatmul.mubr.f32.gmra.mxu0 %v371
        %v2233 = vpop.f32.mrf.mxu0
        %v2234 = vadd.f32 %v693, %v2233
        %v2235 = vpop.f32.mrf.mxu0
        %v2236 = vadd.f32 %v693, %v2235
        %2237 = vmatprep.mubr.f32.mxu0 0.0
        %2238 = vmatmul.mubr.f32.gmra.mxu0 %v374
        %v2239 = vpop.f32.mrf.mxu0
        %v2240 = vadd.f32 %v698, %v2239
        %v2241 = vpop.f32.mrf.mxu0
        %v2242 = vadd.f32 %v698, %v2241
        %2243 = vdwg.mxu0
        %vm2244 = vcmp.lt.f32.partialorder %v1849, 8000.0
        %vm2245 = vcmp.lt.f32.partialorder %v1851, 8000.0
        %vm2246 = vcmp.lt.f32.partialorder %v1926, 8000.0
        %vm2247 = vcmp.lt.f32.partialorder %v1928, 8000.0
        %vm2248 = vcmp.lt.f32.partialorder %v1855, 8000.0
        %vm2249 = vcmp.lt.f32.partialorder %v1857, 8000.0
        %vm2250 = vcmp.lt.f32.partialorder %v1932, 8000.0
        %vm2251 = vcmp.lt.f32.partialorder %v1934, 8000.0
        %v2252 = vsel %vm2244, %v2003, 0.0
        %v2253 = vsel %vm2245, %v2005, 0.0
        %v2254 = vsel %vm2246, %v2080, 0.0
        %v2255 = vsel %vm2247, %v2082, 0.0
        %v2256 = vsel %vm2248, %v2009, 0.0
        %v2257 = vsel %vm2249, %v2011, 0.0
        %v2258 = vsel %vm2250, %v2086, 0.0
        %v2259 = vsel %vm2251, %v2088, 0.0
        %v2260 = vand.u32 2147483647, %v2157
        %vm2261 = vcmp.le.f32.partialorder %v2260, 0.7853982
        %vm2262 = vcmp.lt.s32.totalorder %v2157, 0
        %v2263 = vand.u32 %v2157, 2139095040
        %v2264 = vshrl.u32 %v2263, 23
        %v2265 = vsub.s32 %v2264, 127
        %v2266 = vand.u32 2147483647, %v2157
        %v2267 = vand.u32 %v2266, 8388607
        %v2268 = vor.u32 %v2267, 8388608
        %v2269 = vsub.s32 0, %v2268
        %v2270 = vadd.s32 %v2265, 1
        %vm2271 = vcmp.gt.s32.totalorder %v2270, 0
        %v2272 = vsel %vm2271, %v2270, 0
        %v2273 = vshrl.u32 %v2272, 5
        %v2274 = vand.u32 %v2272, 31
        %v2275 = vsub.s32 32, %v2274
        %v2276 = vshrl.u32 683565275, %v2275
        %v2277 = vshll.u32 683565275, %v2274
        %v2278 = vshrl.u32 2475754826, %v2275
        %v2279 = vor.u32 %v2277, %v2278
        %v2280 = vshll.u32 2475754826, %v2274
        %v2281 = vshrl.u32 2131351028, %v2275
        %v2282 = vor.u32 %v2280, %v2281
        %v2283 = vshll.u32 2131351028, %v2274
        %v2284 = vshrl.u32 2102212464, %v2275
        %v2285 = vor.u32 %v2283, %v2284
        %v2286 = vshll.u32 2102212464, %v2274
        %v2287 = vshrl.u32 920167782, %v2275
        %v2288 = vor.u32 %v2286, %v2287
        %v2289 = vshll.u32 920167782, %v2274
        %v2290 = vshrl.u32 1326507024, %v2275
        %v2291 = vor.u32 %v2289, %v2290
        %vm2292 = vcmp.lt.s32.totalorder %v2273, 1
        %vm2293 = vcmp.lt.s32.totalorder %v2273, 2
        %vm2294 = vcmp.lt.s32.totalorder %v2273, 3
        %vm2295 = vcmp.lt.s32.totalorder %v2273, 4
        %v2296 = vsel %vm2292, %v2276, %v2279
        %v2297 = vsel %vm2295, %v2285, 2102212464
        %v2298 = vsel %vm2294, %v2282, %v2297
        %v2299 = vsel %vm2293, %v2296, %v2298
        %v2300 = vsel %vm2292, %v2279, %v2282
        %v2301 = vsel %vm2295, %v2288, 920167782
        %v2302 = vsel %vm2294, %v2285, %v2301
        %v2303 = vsel %vm2293, %v2300, %v2302
        %v2304 = vsel %vm2292, %v2282, %v2285
        %v2305 = vsel %vm2295, %v2291, 1326507024
        %v2306 = vsel %vm2294, %v2288, %v2305
        %v2307 = vsel %vm2293, %v2304, %v2306
        %v2308 = vshll.u32 %v2268, 8
        %v2309 = vmul.u32.u64.compose %v2308, %v2307
        %v2310 = vextract.low.u32 %v2309
        %v2311 = vextract.high.u32 %v2309
        %v2312 = vmul.u32.u64.compose %v2308, %v2303
        %v2313 = vextract.low.u32 %v2312
        %v2314 = vextract.high.u32 %v2312
        %v2315 = vmul.u32 %v2308, %v2299
        %v2316 = vadd.s32 %v2311, %v2313
        %vm2317 = vc.u32 %v2311, %v2313
        %v2318 = vadd.s32 %v2314, 1
        %v2319 = vsel %vm2317, %v2318, %v2314
        %v2320 = vadd.s32 %v2315, %v2319
        %v2321 = vadd.s32 %v2320, 536870912
        %v2322 = vshrl.u32 %v2321, 30
        %v2323 = vshll.u32 %v2322, 30
        %v2324 = vsub.s32 %v2320, %v2323
        %vm2325 = vcmp.lt.s32.totalorder %v2324, 0
        %v2326 = vsub.s32 0, %v2324
        %v2327 = vsel %vm2325, %v2326, %v2324
        %v2328 = vclz %v2327
        %v2329 = vsub.s32 %v2328, 2
        %vm2330 = vcmp.gt.s32.totalorder 0, %v2329
        %v2331 = vsel %vm2330, 0, %v2329
        %v2332 = vsub.s32 32, %v2331
        %v2333 = vshll.u32 %v2324, %v2331
        %v2334 = vshrl.u32 %v2316, %v2332
        %v2335 = vor.u32 %v2333, %v2334
        %v2336 = vsub.s32 4294967266, %v2331
        %v2337 = vadd.s32 %v2336, 127
        %v2338 = vshll.u32 %v2337, 23
        %v2339 = vor.u32 4788187, %v2338
        %v2340 = vand.u32 2147483647, %v2339
        %v2342 = vcvt.s32.f32 %v2335
        %v2343 = vmul.f32 %v2342, %v2340
        %v2344 = vxor.u32 %v2343, 2147483648
        %v2345 = vsel %vm2262, %v2344, %v2343
        %v2346 = vsub.s32 4, %v2322
        %v2347 = vsel %vm2262, %v2346, %v2322
        %v2348 = vsel %vm2261, %v2157, %v2345
        %v2349 = vsel %vm2261, 0, %v2347
        %v2350 = vcosq.f32.pop %v2348
        %v2351 = vsinq.f32.pop %v2348
        %vm2352 = vweird.f32 %v2157
        %v2353 = vadd.s32 %v2349, 3
        %v2354 = vand.u32 %v2353, 3
        %vm2355 = vcmp.lt.s32.totalorder %v2354, 2
        %vm2356 = vcmp.eq.s32.totalorder %v2354, 0
        %v2357 = vxor.u32 %v2351, 2147483648
        %v2358 = vsel %vm2356, %v2350, %v2357
        %vm2359 = vcmp.eq.s32.totalorder %v2354, 2
        %v2360 = vxor.u32 %v2350, 2147483648
        %v2361 = vsel %vm2359, %v2360, %v2351
        %v2362 = vsel %vm2355, %v2358, %v2361
        %v2363 = vsel %vm2352, nan, %v2362
        %v2364 = vand.u32 2147483647, %v2159
        %vm2365 = vcmp.le.f32.partialorder %v2364, 0.7853982
        %vm2366 = vcmp.lt.s32.totalorder %v2159, 0
        %v2367 = vand.u32 %v2159, 2139095040
        %v2368 = vshrl.u32 %v2367, 23
        %v2369 = vsub.s32 %v2368, 127
        %v2370 = vand.u32 2147483647, %v2159
        %v2371 = vand.u32 %v2370, 8388607
        %v2372 = vor.u32 %v2371, 8388608
        %v2373 = vsub.s32 0, %v2372
        %v2374 = vadd.s32 %v2369, 1
        %vm2375 = vcmp.gt.s32.totalorder %v2374, 0
        %v2376 = vsel %vm2375, %v2374, 0
        %v2377 = vshrl.u32 %v2376, 5
        %v2378 = vand.u32 %v2376, 31
        %v2379 = vsub.s32 32, %v2378
        %v2380 = vshrl.u32 683565275, %v2379
        %v2381 = vshll.u32 683565275, %v2378
        %v2382 = vshrl.u32 2475754826, %v2379
        %v2383 = vor.u32 %v2381, %v2382
        %v2384 = vshll.u32 2475754826, %v2378
        %v2385 = vshrl.u32 2131351028, %v2379
        %v2386 = vor.u32 %v2384, %v2385
        %v2387 = vshll.u32 2131351028, %v2378
        %v2388 = vshrl.u32 2102212464, %v2379
        %v2389 = vor.u32 %v2387, %v2388
        %v2390 = vshll.u32 2102212464, %v2378
        %v2391 = vshrl.u32 920167782, %v2379
        %v2392 = vor.u32 %v2390, %v2391
        %v2393 = vshll.u32 920167782, %v2378
        %v2394 = vshrl.u32 1326507024, %v2379
        %v2395 = vor.u32 %v2393, %v2394
        %vm2396 = vcmp.lt.s32.totalorder %v2377, 1
        %vm2397 = vcmp.lt.s32.totalorder %v2377, 2
        %vm2398 = vcmp.lt.s32.totalorder %v2377, 3
        %vm2399 = vcmp.lt.s32.totalorder %v2377, 4
        %v2400 = vsel %vm2396, %v2380, %v2383
        %v2401 = vsel %vm2399, %v2389, 2102212464
        %v2402 = vsel %vm2398, %v2386, %v2401
        %v2403 = vsel %vm2397, %v2400, %v2402
        %v2404 = vsel %vm2396, %v2383, %v2386
        %v2405 = vsel %vm2399, %v2392, 920167782
        %v2406 = vsel %vm2398, %v2389, %v2405
        %v2407 = vsel %vm2397, %v2404, %v2406
        %v2408 = vsel %vm2396, %v2386, %v2389
        %v2409 = vsel %vm2399, %v2395, 1326507024
        %v2410 = vsel %vm2398, %v2392, %v2409
        %v2411 = vsel %vm2397, %v2408, %v2410
        %v2412 = vshll.u32 %v2372, 8
        %v2413 = vmul.u32.u64.compose %v2412, %v2411
        %v2414 = vextract.low.u32 %v2413
        %v2415 = vextract.high.u32 %v2413
        %v2416 = vmul.u32.u64.compose %v2412, %v2407
        %v2417 = vextract.low.u32 %v2416
        %v2418 = vextract.high.u32 %v2416
        %v2419 = vmul.u32 %v2412, %v2403
        %v2420 = vadd.s32 %v2415, %v2417
        %vm2421 = vc.u32 %v2415, %v2417
        %v2422 = vadd.s32 %v2418, 1
        %v2423 = vsel %vm2421, %v2422, %v2418
        %v2424 = vadd.s32 %v2419, %v2423
        %v2425 = vadd.s32 %v2424, 536870912
        %v2426 = vshrl.u32 %v2425, 30
        %v2427 = vshll.u32 %v2426, 30
        %v2428 = vsub.s32 %v2424, %v2427
        %vm2429 = vcmp.lt.s32.totalorder %v2428, 0
        %v2430 = vsub.s32 0, %v2428
        %v2431 = vsel %vm2429, %v2430, %v2428
        %v2432 = vclz %v2431
        %v2433 = vsub.s32 %v2432, 2
        %vm2434 = vcmp.gt.s32.totalorder 0, %v2433
        %v2435 = vsel %vm2434, 0, %v2433
        %v2436 = vsub.s32 32, %v2435
        %v2437 = vshll.u32 %v2428, %v2435
        %v2438 = vshrl.u32 %v2420, %v2436
        %v2439 = vor.u32 %v2437, %v2438
        %v2440 = vsub.s32 4294967266, %v2435
        %v2441 = vadd.s32 %v2440, 127
        %v2442 = vshll.u32 %v2441, 23
        %v2443 = vor.u32 4788187, %v2442
        %v2444 = vand.u32 2147483647, %v2443
        %v2446 = vcvt.s32.f32 %v2439
        %v2447 = vmul.f32 %v2446, %v2444
        %v2448 = vxor.u32 %v2447, 2147483648
        %v2449 = vsel %vm2366, %v2448, %v2447
        %v2450 = vsub.s32 4, %v2426
        %v2451 = vsel %vm2366, %v2450, %v2426
        %v2452 = vsel %vm2365, %v2159, %v2449
        %v2453 = vsel %vm2365, 0, %v2451
        %v2454 = vcosq.f32.pop %v2452
        %v2455 = vsinq.f32.pop %v2452
        %vm2456 = vweird.f32 %v2159
        %v2457 = vadd.s32 %v2453, 3
        %v2458 = vand.u32 %v2457, 3
        %vm2459 = vcmp.lt.s32.totalorder %v2458, 2
        %vm2460 = vcmp.eq.s32.totalorder %v2458, 0
        %v2461 = vxor.u32 %v2455, 2147483648
        %v2462 = vsel %vm2460, %v2454, %v2461
        %vm2463 = vcmp.eq.s32.totalorder %v2458, 2
        %v2464 = vxor.u32 %v2454, 2147483648
        %v2465 = vsel %vm2463, %v2464, %v2455
        %v2466 = vsel %vm2459, %v2462, %v2465
        %v2467 = vsel %vm2456, nan, %v2466
        %v2468 = vand.u32 2147483647, %v2234
        %vm2469 = vcmp.le.f32.partialorder %v2468, 0.7853982
        %vm2470 = vcmp.lt.s32.totalorder %v2234, 0
        %v2471 = vand.u32 %v2234, 2139095040
        %v2472 = vshrl.u32 %v2471, 23
        %v2473 = vsub.s32 %v2472, 127
        %v2474 = vand.u32 2147483647, %v2234
        %v2475 = vand.u32 %v2474, 8388607
        %v2476 = vor.u32 %v2475, 8388608
        %v2477 = vsub.s32 0, %v2476
        %v2478 = vadd.s32 %v2473, 1
        %vm2479 = vcmp.gt.s32.totalorder %v2478, 0
        %v2480 = vsel %vm2479, %v2478, 0
        %v2481 = vshrl.u32 %v2480, 5
        %v2482 = vand.u32 %v2480, 31
        %v2483 = vsub.s32 32, %v2482
        %v2484 = vshrl.u32 683565275, %v2483
        %v2485 = vshll.u32 683565275, %v2482
        %v2486 = vshrl.u32 2475754826, %v2483
        %v2487 = vor.u32 %v2485, %v2486
        %v2488 = vshll.u32 2475754826, %v2482
        %v2489 = vshrl.u32 2131351028, %v2483
        %v2490 = vor.u32 %v2488, %v2489
        %v2491 = vshll.u32 2131351028, %v2482
        %v2492 = vshrl.u32 2102212464, %v2483
        %v2493 = vor.u32 %v2491, %v2492
        %v2494 = vshll.u32 2102212464, %v2482
        %v2495 = vshrl.u32 920167782, %v2483
        %v2496 = vor.u32 %v2494, %v2495
        %v2497 = vshll.u32 920167782, %v2482
        %v2498 = vshrl.u32 1326507024, %v2483
        %v2499 = vor.u32 %v2497, %v2498
        %vm2500 = vcmp.lt.s32.totalorder %v2481, 1
        %vm2501 = vcmp.lt.s32.totalorder %v2481, 2
        %vm2502 = vcmp.lt.s32.totalorder %v2481, 3
        %vm2503 = vcmp.lt.s32.totalorder %v2481, 4
        %v2504 = vsel %vm2500, %v2484, %v2487
        %v2505 = vsel %vm2503, %v2493, 2102212464
        %v2506 = vsel %vm2502, %v2490, %v2505
        %v2507 = vsel %vm2501, %v2504, %v2506
        %v2508 = vsel %vm2500, %v2487, %v2490
        %v2509 = vsel %vm2503, %v2496, 920167782
        %v2510 = vsel %vm2502, %v2493, %v2509
        %v2511 = vsel %vm2501, %v2508, %v2510
        %v2512 = vsel %vm2500, %v2490, %v2493
        %v2513 = vsel %vm2503, %v2499, 1326507024
        %v2514 = vsel %vm2502, %v2496, %v2513
        %v2515 = vsel %vm2501, %v2512, %v2514
        %v2516 = vshll.u32 %v2476, 8
        %v2517 = vmul.u32.u64.compose %v2516, %v2515
        %v2518 = vextract.low.u32 %v2517
        %v2519 = vextract.high.u32 %v2517
        %v2520 = vmul.u32.u64.compose %v2516, %v2511
        %v2521 = vextract.low.u32 %v2520
        %v2522 = vextract.high.u32 %v2520
        %v2523 = vmul.u32 %v2516, %v2507
        %v2524 = vadd.s32 %v2519, %v2521
        %vm2525 = vc.u32 %v2519, %v2521
        %v2526 = vadd.s32 %v2522, 1
        %v2527 = vsel %vm2525, %v2526, %v2522
        %v2528 = vadd.s32 %v2523, %v2527
        %v2529 = vadd.s32 %v2528, 536870912
        %v2530 = vshrl.u32 %v2529, 30
        %v2531 = vshll.u32 %v2530, 30
        %v2532 = vsub.s32 %v2528, %v2531
        %vm2533 = vcmp.lt.s32.totalorder %v2532, 0
        %v2534 = vsub.s32 0, %v2532
        %v2535 = vsel %vm2533, %v2534, %v2532
        %v2536 = vclz %v2535
        %v2537 = vsub.s32 %v2536, 2
        %vm2538 = vcmp.gt.s32.totalorder 0, %v2537
        %v2539 = vsel %vm2538, 0, %v2537
        %v2540 = vsub.s32 32, %v2539
        %v2541 = vshll.u32 %v2532, %v2539
        %v2542 = vshrl.u32 %v2524, %v2540
        %v2543 = vor.u32 %v2541, %v2542
        %v2544 = vsub.s32 4294967266, %v2539
        %v2545 = vadd.s32 %v2544, 127
        %v2546 = vshll.u32 %v2545, 23
        %v2547 = vor.u32 4788187, %v2546
        %v2548 = vand.u32 2147483647, %v2547
        %v2550 = vcvt.s32.f32 %v2543
        %v2551 = vmul.f32 %v2550, %v2548
        %v2552 = vxor.u32 %v2551, 2147483648
        %v2553 = vsel %vm2470, %v2552, %v2551
        %v2554 = vsub.s32 4, %v2530
        %v2555 = vsel %vm2470, %v2554, %v2530
        %v2556 = vsel %vm2469, %v2234, %v2553
        %v2557 = vsel %vm2469, 0, %v2555
        %v2558 = vcosq.f32.pop %v2556
        %v2559 = vsinq.f32.pop %v2556
        %vm2560 = vweird.f32 %v2234
        %v2561 = vadd.s32 %v2557, 3
        %v2562 = vand.u32 %v2561, 3
        %vm2563 = vcmp.lt.s32.totalorder %v2562, 2
        %vm2564 = vcmp.eq.s32.totalorder %v2562, 0
        %v2565 = vxor.u32 %v2559, 2147483648
        %v2566 = vsel %vm2564, %v2558, %v2565
        %vm2567 = vcmp.eq.s32.totalorder %v2562, 2
        %v2568 = vxor.u32 %v2558, 2147483648
        %v2569 = vsel %vm2567, %v2568, %v2559
        %v2570 = vsel %vm2563, %v2566, %v2569
        %v2571 = vsel %vm2560, nan, %v2570
        %v2572 = vand.u32 2147483647, %v2236
        %vm2573 = vcmp.le.f32.partialorder %v2572, 0.7853982
        %vm2574 = vcmp.lt.s32.totalorder %v2236, 0
        %v2575 = vand.u32 %v2236, 2139095040
        %v2576 = vshrl.u32 %v2575, 23
        %v2577 = vsub.s32 %v2576, 127
        %v2578 = vand.u32 2147483647, %v2236
        %v2579 = vand.u32 %v2578, 8388607
        %v2580 = vor.u32 %v2579, 8388608
        %v2581 = vsub.s32 0, %v2580
        %v2582 = vadd.s32 %v2577, 1
        %vm2583 = vcmp.gt.s32.totalorder %v2582, 0
        %v2584 = vsel %vm2583, %v2582, 0
        %v2585 = vshrl.u32 %v2584, 5
        %v2586 = vand.u32 %v2584, 31
        %v2587 = vsub.s32 32, %v2586
        %v2588 = vshrl.u32 683565275, %v2587
        %v2589 = vshll.u32 683565275, %v2586
        %v2590 = vshrl.u32 2475754826, %v2587
        %v2591 = vor.u32 %v2589, %v2590
        %v2592 = vshll.u32 2475754826, %v2586
        %v2593 = vshrl.u32 2131351028, %v2587
        %v2594 = vor.u32 %v2592, %v2593
        %v2595 = vshll.u32 2131351028, %v2586
        %v2596 = vshrl.u32 2102212464, %v2587
        %v2597 = vor.u32 %v2595, %v2596
        %v2598 = vshll.u32 2102212464, %v2586
        %v2599 = vshrl.u32 920167782, %v2587
        %v2600 = vor.u32 %v2598, %v2599
        %v2601 = vshll.u32 920167782, %v2586
        %v2602 = vshrl.u32 1326507024, %v2587
        %v2603 = vor.u32 %v2601, %v2602
        %vm2604 = vcmp.lt.s32.totalorder %v2585, 1
        %vm2605 = vcmp.lt.s32.totalorder %v2585, 2
        %vm2606 = vcmp.lt.s32.totalorder %v2585, 3
        %vm2607 = vcmp.lt.s32.totalorder %v2585, 4
        %v2608 = vsel %vm2604, %v2588, %v2591
        %v2609 = vsel %vm2607, %v2597, 2102212464
        %v2610 = vsel %vm2606, %v2594, %v2609
        %v2611 = vsel %vm2605, %v2608, %v2610
        %v2612 = vsel %vm2604, %v2591, %v2594
        %v2613 = vsel %vm2607, %v2600, 920167782
        %v2614 = vsel %vm2606, %v2597, %v2613
        %v2615 = vsel %vm2605, %v2612, %v2614
        %v2616 = vsel %vm2604, %v2594, %v2597
        %v2617 = vsel %vm2607, %v2603, 1326507024
        %v2618 = vsel %vm2606, %v2600, %v2617
        %v2619 = vsel %vm2605, %v2616, %v2618
        %v2620 = vshll.u32 %v2580, 8
        %v2621 = vmul.u32.u64.compose %v2620, %v2619
        %v2622 = vextract.low.u32 %v2621
        %v2623 = vextract.high.u32 %v2621
        %v2624 = vmul.u32.u64.compose %v2620, %v2615
        %v2625 = vextract.low.u32 %v2624
        %v2626 = vextract.high.u32 %v2624
        %v2627 = vmul.u32 %v2620, %v2611
        %v2628 = vadd.s32 %v2623, %v2625
        %vm2629 = vc.u32 %v2623, %v2625
        %v2630 = vadd.s32 %v2626, 1
        %v2631 = vsel %vm2629, %v2630, %v2626
        %v2632 = vadd.s32 %v2627, %v2631
        %v2633 = vadd.s32 %v2632, 536870912
        %v2634 = vshrl.u32 %v2633, 30
        %v2635 = vshll.u32 %v2634, 30
        %v2636 = vsub.s32 %v2632, %v2635
        %vm2637 = vcmp.lt.s32.totalorder %v2636, 0
        %v2638 = vsub.s32 0, %v2636
        %v2639 = vsel %vm2637, %v2638, %v2636
        %v2640 = vclz %v2639
        %v2641 = vsub.s32 %v2640, 2
        %vm2642 = vcmp.gt.s32.totalorder 0, %v2641
        %v2643 = vsel %vm2642, 0, %v2641
        %v2644 = vsub.s32 32, %v2643
        %v2645 = vshll.u32 %v2636, %v2643
        %v2646 = vshrl.u32 %v2628, %v2644
        %v2647 = vor.u32 %v2645, %v2646
        %v2648 = vsub.s32 4294967266, %v2643
        %v2649 = vadd.s32 %v2648, 127
        %v2650 = vshll.u32 %v2649, 23
        %v2651 = vor.u32 4788187, %v2650
        %v2652 = vand.u32 2147483647, %v2651
        %v2654 = vcvt.s32.f32 %v2647
        %v2655 = vmul.f32 %v2654, %v2652
        %v2656 = vxor.u32 %v2655, 2147483648
        %v2657 = vsel %vm2574, %v2656, %v2655
        %v2658 = vsub.s32 4, %v2634
        %v2659 = vsel %vm2574, %v2658, %v2634
        %v2660 = vsel %vm2573, %v2236, %v2657
        %v2661 = vsel %vm2573, 0, %v2659
        %v2662 = vcosq.f32.pop %v2660
        %v2663 = vsinq.f32.pop %v2660
        %vm2664 = vweird.f32 %v2236
        %v2665 = vadd.s32 %v2661, 3
        %v2666 = vand.u32 %v2665, 3
        %vm2667 = vcmp.lt.s32.totalorder %v2666, 2
        %vm2668 = vcmp.eq.s32.totalorder %v2666, 0
        %v2669 = vxor.u32 %v2663, 2147483648
        %v2670 = vsel %vm2668, %v2662, %v2669
        %vm2671 = vcmp.eq.s32.totalorder %v2666, 2
        %v2672 = vxor.u32 %v2662, 2147483648
        %v2673 = vsel %vm2671, %v2672, %v2663
        %v2674 = vsel %vm2667, %v2670, %v2673
        %v2675 = vsel %vm2664, nan, %v2674
        %v2676 = vand.u32 2147483647, %v2163
        %vm2677 = vcmp.le.f32.partialorder %v2676, 0.7853982
        %vm2678 = vcmp.lt.s32.totalorder %v2163, 0
        %v2679 = vand.u32 %v2163, 2139095040
        %v2680 = vshrl.u32 %v2679, 23
        %v2681 = vsub.s32 %v2680, 127
        %v2682 = vand.u32 2147483647, %v2163
        %v2683 = vand.u32 %v2682, 8388607
        %v2684 = vor.u32 %v2683, 8388608
        %v2685 = vsub.s32 0, %v2684
        %v2686 = vadd.s32 %v2681, 1
        %vm2687 = vcmp.gt.s32.totalorder %v2686, 0
        %v2688 = vsel %vm2687, %v2686, 0
        %v2689 = vshrl.u32 %v2688, 5
        %v2690 = vand.u32 %v2688, 31
        %v2691 = vsub.s32 32, %v2690
        %v2692 = vshrl.u32 683565275, %v2691
        %v2693 = vshll.u32 683565275, %v2690
        %v2694 = vshrl.u32 2475754826, %v2691
        %v2695 = vor.u32 %v2693, %v2694
        %v2696 = vshll.u32 2475754826, %v2690
        %v2697 = vshrl.u32 2131351028, %v2691
        %v2698 = vor.u32 %v2696, %v2697
        %v2699 = vshll.u32 2131351028, %v2690
        %v2700 = vshrl.u32 2102212464, %v2691
        %v2701 = vor.u32 %v2699, %v2700
        %v2702 = vshll.u32 2102212464, %v2690
        %v2703 = vshrl.u32 920167782, %v2691
        %v2704 = vor.u32 %v2702, %v2703
        %v2705 = vshll.u32 920167782, %v2690
        %v2706 = vshrl.u32 1326507024, %v2691
        %v2707 = vor.u32 %v2705, %v2706
        %vm2708 = vcmp.lt.s32.totalorder %v2689, 1
        %vm2709 = vcmp.lt.s32.totalorder %v2689, 2
        %vm2710 = vcmp.lt.s32.totalorder %v2689, 3
        %vm2711 = vcmp.lt.s32.totalorder %v2689, 4
        %v2712 = vsel %vm2708, %v2692, %v2695
        %v2713 = vsel %vm2711, %v2701, 2102212464
        %v2714 = vsel %vm2710, %v2698, %v2713
        %v2715 = vsel %vm2709, %v2712, %v2714
        %v2716 = vsel %vm2708, %v2695, %v2698
        %v2717 = vsel %vm2711, %v2704, 920167782
        %v2718 = vsel %vm2710, %v2701, %v2717
        %v2719 = vsel %vm2709, %v2716, %v2718
        %v2720 = vsel %vm2708, %v2698, %v2701
        %v2721 = vsel %vm2711, %v2707, 1326507024
        %v2722 = vsel %vm2710, %v2704, %v2721
        %v2723 = vsel %vm2709, %v2720, %v2722
        %v2724 = vshll.u32 %v2684, 8
        %v2725 = vmul.u32.u64.compose %v2724, %v2723
        %v2726 = vextract.low.u32 %v2725
        %v2727 = vextract.high.u32 %v2725
        %v2728 = vmul.u32.u64.compose %v2724, %v2719
        %v2729 = vextract.low.u32 %v2728
        %v2730 = vextract.high.u32 %v2728
        %v2731 = vmul.u32 %v2724, %v2715
        %v2732 = vadd.s32 %v2727, %v2729
        %vm2733 = vc.u32 %v2727, %v2729
        %v2734 = vadd.s32 %v2730, 1
        %v2735 = vsel %vm2733, %v2734, %v2730
        %v2736 = vadd.s32 %v2731, %v2735
        %v2737 = vadd.s32 %v2736, 536870912
        %v2738 = vshrl.u32 %v2737, 30
        %v2739 = vshll.u32 %v2738, 30
        %v2740 = vsub.s32 %v2736, %v2739
        %vm2741 = vcmp.lt.s32.totalorder %v2740, 0
        %v2742 = vsub.s32 0, %v2740
        %v2743 = vsel %vm2741, %v2742, %v2740
        %v2744 = vclz %v2743
        %v2745 = vsub.s32 %v2744, 2
        %vm2746 = vcmp.gt.s32.totalorder 0, %v2745
        %v2747 = vsel %vm2746, 0, %v2745
        %v2748 = vsub.s32 32, %v2747
        %v2749 = vshll.u32 %v2740, %v2747
        %v2750 = vshrl.u32 %v2732, %v2748
        %v2751 = vor.u32 %v2749, %v2750
        %v2752 = vsub.s32 4294967266, %v2747
        %v2753 = vadd.s32 %v2752, 127
        %v2754 = vshll.u32 %v2753, 23
        %v2755 = vor.u32 4788187, %v2754
        %v2756 = vand.u32 2147483647, %v2755
        %v2758 = vcvt.s32.f32 %v2751
        %v2759 = vmul.f32 %v2758, %v2756
        %v2760 = vxor.u32 %v2759, 2147483648
        %v2761 = vsel %vm2678, %v2760, %v2759
        %v2762 = vsub.s32 4, %v2738
        %v2763 = vsel %vm2678, %v2762, %v2738
        %v2764 = vsel %vm2677, %v2163, %v2761
        %v2765 = vsel %vm2677, 0, %v2763
        %v2766 = vcosq.f32.pop %v2764
        %v2767 = vsinq.f32.pop %v2764
        %vm2768 = vweird.f32 %v2163
        %v2769 = vadd.s32 %v2765, 3
        %v2770 = vand.u32 %v2769, 3
        %vm2771 = vcmp.lt.s32.totalorder %v2770, 2
        %vm2772 = vcmp.eq.s32.totalorder %v2770, 0
        %v2773 = vxor.u32 %v2767, 2147483648
        %v2774 = vsel %vm2772, %v2766, %v2773
        %vm2775 = vcmp.eq.s32.totalorder %v2770, 2
        %v2776 = vxor.u32 %v2766, 2147483648
        %v2777 = vsel %vm2775, %v2776, %v2767
        %v2778 = vsel %vm2771, %v2774, %v2777
        %v2779 = vsel %vm2768, nan, %v2778
        %v2780 = vand.u32 2147483647, %v2165
        %vm2781 = vcmp.le.f32.partialorder %v2780, 0.7853982
        %vm2782 = vcmp.lt.s32.totalorder %v2165, 0
        %v2783 = vand.u32 %v2165, 2139095040
        %v2784 = vshrl.u32 %v2783, 23
        %v2785 = vsub.s32 %v2784, 127
        %v2786 = vand.u32 2147483647, %v2165
        %v2787 = vand.u32 %v2786, 8388607
        %v2788 = vor.u32 %v2787, 8388608
        %v2789 = vsub.s32 0, %v2788
        %v2790 = vadd.s32 %v2785, 1
        %vm2791 = vcmp.gt.s32.totalorder %v2790, 0
        %v2792 = vsel %vm2791, %v2790, 0
        %v2793 = vshrl.u32 %v2792, 5
        %v2794 = vand.u32 %v2792, 31
        %v2795 = vsub.s32 32, %v2794
        %v2796 = vshrl.u32 683565275, %v2795
        %v2797 = vshll.u32 683565275, %v2794
        %v2798 = vshrl.u32 2475754826, %v2795
        %v2799 = vor.u32 %v2797, %v2798
        %v2800 = vshll.u32 2475754826, %v2794
        %v2801 = vshrl.u32 2131351028, %v2795
        %v2802 = vor.u32 %v2800, %v2801
        %v2803 = vshll.u32 2131351028, %v2794
        %v2804 = vshrl.u32 2102212464, %v2795
        %v2805 = vor.u32 %v2803, %v2804
        %v2806 = vshll.u32 2102212464, %v2794
        %v2807 = vshrl.u32 920167782, %v2795
        %v2808 = vor.u32 %v2806, %v2807
        %v2809 = vshll.u32 920167782, %v2794
        %v2810 = vshrl.u32 1326507024, %v2795
        %v2811 = vor.u32 %v2809, %v2810
        %vm2812 = vcmp.lt.s32.totalorder %v2793, 1
        %vm2813 = vcmp.lt.s32.totalorder %v2793, 2
        %vm2814 = vcmp.lt.s32.totalorder %v2793, 3
        %vm2815 = vcmp.lt.s32.totalorder %v2793, 4
        %v2816 = vsel %vm2812, %v2796, %v2799
        %v2817 = vsel %vm2815, %v2805, 2102212464
        %v2818 = vsel %vm2814, %v2802, %v2817
        %v2819 = vsel %vm2813, %v2816, %v2818
        %v2820 = vsel %vm2812, %v2799, %v2802
        %v2821 = vsel %vm2815, %v2808, 920167782
        %v2822 = vsel %vm2814, %v2805, %v2821
        %v2823 = vsel %vm2813, %v2820, %v2822
        %v2824 = vsel %vm2812, %v2802, %v2805
        %v2825 = vsel %vm2815, %v2811, 1326507024
        %v2826 = vsel %vm2814, %v2808, %v2825
        %v2827 = vsel %vm2813, %v2824, %v2826
        %v2828 = vshll.u32 %v2788, 8
        %v2829 = vmul.u32.u64.compose %v2828, %v2827
        %v2830 = vextract.low.u32 %v2829
        %v2831 = vextract.high.u32 %v2829
        %v2832 = vmul.u32.u64.compose %v2828, %v2823
        %v2833 = vextract.low.u32 %v2832
        %v2834 = vextract.high.u32 %v2832
        %v2835 = vmul.u32 %v2828, %v2819
        %v2836 = vadd.s32 %v2831, %v2833
        %vm2837 = vc.u32 %v2831, %v2833
        %v2838 = vadd.s32 %v2834, 1
        %v2839 = vsel %vm2837, %v2838, %v2834
        %v2840 = vadd.s32 %v2835, %v2839
        %v2841 = vadd.s32 %v2840, 536870912
        %v2842 = vshrl.u32 %v2841, 30
        %v2843 = vshll.u32 %v2842, 30
        %v2844 = vsub.s32 %v2840, %v2843
        %vm2845 = vcmp.lt.s32.totalorder %v2844, 0
        %v2846 = vsub.s32 0, %v2844
        %v2847 = vsel %vm2845, %v2846, %v2844
        %v2848 = vclz %v2847
        %v2849 = vsub.s32 %v2848, 2
        %vm2850 = vcmp.gt.s32.totalorder 0, %v2849
        %v2851 = vsel %vm2850, 0, %v2849
        %v2852 = vsub.s32 32, %v2851
        %v2853 = vshll.u32 %v2844, %v2851
        %v2854 = vshrl.u32 %v2836, %v2852
        %v2855 = vor.u32 %v2853, %v2854
        %v2856 = vsub.s32 4294967266, %v2851
        %v2857 = vadd.s32 %v2856, 127
        %v2858 = vshll.u32 %v2857, 23
        %v2859 = vor.u32 4788187, %v2858
        %v2860 = vand.u32 2147483647, %v2859
        %v2862 = vcvt.s32.f32 %v2855
        %v2863 = vmul.f32 %v2862, %v2860
        %v2864 = vxor.u32 %v2863, 2147483648
        %v2865 = vsel %vm2782, %v2864, %v2863
        %v2866 = vsub.s32 4, %v2842
        %v2867 = vsel %vm2782, %v2866, %v2842
        %v2868 = vsel %vm2781, %v2165, %v2865
        %v2869 = vsel %vm2781, 0, %v2867
        %v2870 = vcosq.f32.pop %v2868
        %v2871 = vsinq.f32.pop %v2868
        %vm2872 = vweird.f32 %v2165
        %v2873 = vadd.s32 %v2869, 3
        %v2874 = vand.u32 %v2873, 3
        %vm2875 = vcmp.lt.s32.totalorder %v2874, 2
        %vm2876 = vcmp.eq.s32.totalorder %v2874, 0
        %v2877 = vxor.u32 %v2871, 2147483648
        %v2878 = vsel %vm2876, %v2870, %v2877
        %vm2879 = vcmp.eq.s32.totalorder %v2874, 2
        %v2880 = vxor.u32 %v2870, 2147483648
        %v2881 = vsel %vm2879, %v2880, %v2871
        %v2882 = vsel %vm2875, %v2878, %v2881
        %v2883 = vsel %vm2872, nan, %v2882
        %v2884 = vand.u32 2147483647, %v2240
        %vm2885 = vcmp.le.f32.partialorder %v2884, 0.7853982
        %vm2886 = vcmp.lt.s32.totalorder %v2240, 0
        %v2887 = vand.u32 %v2240, 2139095040
        %v2888 = vshrl.u32 %v2887, 23
        %v2889 = vsub.s32 %v2888, 127
        %v2890 = vand.u32 2147483647, %v2240
        %v2891 = vand.u32 %v2890, 8388607
        %v2892 = vor.u32 %v2891, 8388608
        %v2893 = vsub.s32 0, %v2892
        %v2894 = vadd.s32 %v2889, 1
        %vm2895 = vcmp.gt.s32.totalorder %v2894, 0
        %v2896 = vsel %vm2895, %v2894, 0
        %v2897 = vshrl.u32 %v2896, 5
        %v2898 = vand.u32 %v2896, 31
        %v2899 = vsub.s32 32, %v2898
        %v2900 = vshrl.u32 683565275, %v2899
        %v2901 = vshll.u32 683565275, %v2898
        %v2902 = vshrl.u32 2475754826, %v2899
        %v2903 = vor.u32 %v2901, %v2902
        %v2904 = vshll.u32 2475754826, %v2898
        %v2905 = vshrl.u32 2131351028, %v2899
        %v2906 = vor.u32 %v2904, %v2905
        %v2907 = vshll.u32 2131351028, %v2898
        %v2908 = vshrl.u32 2102212464, %v2899
        %v2909 = vor.u32 %v2907, %v2908
        %v2910 = vshll.u32 2102212464, %v2898
        %v2911 = vshrl.u32 920167782, %v2899
        %v2912 = vor.u32 %v2910, %v2911
        %v2913 = vshll.u32 920167782, %v2898
        %v2914 = vshrl.u32 1326507024, %v2899
        %v2915 = vor.u32 %v2913, %v2914
        %vm2916 = vcmp.lt.s32.totalorder %v2897, 1
        %vm2917 = vcmp.lt.s32.totalorder %v2897, 2
        %vm2918 = vcmp.lt.s32.totalorder %v2897, 3
        %vm2919 = vcmp.lt.s32.totalorder %v2897, 4
        %v2920 = vsel %vm2916, %v2900, %v2903
        %v2921 = vsel %vm2919, %v2909, 2102212464
        %v2922 = vsel %vm2918, %v2906, %v2921
        %v2923 = vsel %vm2917, %v2920, %v2922
        %v2924 = vsel %vm2916, %v2903, %v2906
        %v2925 = vsel %vm2919, %v2912, 920167782
        %v2926 = vsel %vm2918, %v2909, %v2925
        %v2927 = vsel %vm2917, %v2924, %v2926
        %v2928 = vsel %vm2916, %v2906, %v2909
        %v2929 = vsel %vm2919, %v2915, 1326507024
        %v2930 = vsel %vm2918, %v2912, %v2929
        %v2931 = vsel %vm2917, %v2928, %v2930
        %v2932 = vshll.u32 %v2892, 8
        %v2933 = vmul.u32.u64.compose %v2932, %v2931
        %v2934 = vextract.low.u32 %v2933
        %v2935 = vextract.high.u32 %v2933
        %v2936 = vmul.u32.u64.compose %v2932, %v2927
        %v2937 = vextract.low.u32 %v2936
        %v2938 = vextract.high.u32 %v2936
        %v2939 = vmul.u32 %v2932, %v2923
        %v2940 = vadd.s32 %v2935, %v2937
        %vm2941 = vc.u32 %v2935, %v2937
        %v2942 = vadd.s32 %v2938, 1
        %v2943 = vsel %vm2941, %v2942, %v2938
        %v2944 = vadd.s32 %v2939, %v2943
        %v2945 = vadd.s32 %v2944, 536870912
        %v2946 = vshrl.u32 %v2945, 30
        %v2947 = vshll.u32 %v2946, 30
        %v2948 = vsub.s32 %v2944, %v2947
        %vm2949 = vcmp.lt.s32.totalorder %v2948, 0
        %v2950 = vsub.s32 0, %v2948
        %v2951 = vsel %vm2949, %v2950, %v2948
        %v2952 = vclz %v2951
        %v2953 = vsub.s32 %v2952, 2
        %vm2954 = vcmp.gt.s32.totalorder 0, %v2953
        %v2955 = vsel %vm2954, 0, %v2953
        %v2956 = vsub.s32 32, %v2955
        %v2957 = vshll.u32 %v2948, %v2955
        %v2958 = vshrl.u32 %v2940, %v2956
        %v2959 = vor.u32 %v2957, %v2958
        %v2960 = vsub.s32 4294967266, %v2955
        %v2961 = vadd.s32 %v2960, 127
        %v2962 = vshll.u32 %v2961, 23
        %v2963 = vor.u32 4788187, %v2962
        %v2964 = vand.u32 2147483647, %v2963
        %v2966 = vcvt.s32.f32 %v2959
        %v2967 = vmul.f32 %v2966, %v2964
        %v2968 = vxor.u32 %v2967, 2147483648
        %v2969 = vsel %vm2886, %v2968, %v2967
        %v2970 = vsub.s32 4, %v2946
        %v2971 = vsel %vm2886, %v2970, %v2946
        %v2972 = vsel %vm2885, %v2240, %v2969
        %v2973 = vsel %vm2885, 0, %v2971
        %v2974 = vcosq.f32.pop %v2972
        %v2975 = vsinq.f32.pop %v2972
        %vm2976 = vweird.f32 %v2240
        %v2977 = vadd.s32 %v2973, 3
        %v2978 = vand.u32 %v2977, 3
        %vm2979 = vcmp.lt.s32.totalorder %v2978, 2
        %vm2980 = vcmp.eq.s32.totalorder %v2978, 0
        %v2981 = vxor.u32 %v2975, 2147483648
        %v2982 = vsel %vm2980, %v2974, %v2981
        %vm2983 = vcmp.eq.s32.totalorder %v2978, 2
        %v2984 = vxor.u32 %v2974, 2147483648
        %v2985 = vsel %vm2983, %v2984, %v2975
        %v2986 = vsel %vm2979, %v2982, %v2985
        %v2987 = vsel %vm2976, nan, %v2986
        %v2988 = vand.u32 2147483647, %v2242
        %vm2989 = vcmp.le.f32.partialorder %v2988, 0.7853982
        %vm2990 = vcmp.lt.s32.totalorder %v2242, 0
        %v2991 = vand.u32 %v2242, 2139095040
        %v2992 = vshrl.u32 %v2991, 23
        %v2993 = vsub.s32 %v2992, 127
        %v2994 = vand.u32 2147483647, %v2242
        %v2995 = vand.u32 %v2994, 8388607
        %v2996 = vor.u32 %v2995, 8388608
        %v2997 = vsub.s32 0, %v2996
        %v2998 = vadd.s32 %v2993, 1
        %vm2999 = vcmp.gt.s32.totalorder %v2998, 0
        %v3000 = vsel %vm2999, %v2998, 0
        %v3001 = vshrl.u32 %v3000, 5
        %v3002 = vand.u32 %v3000, 31
        %v3003 = vsub.s32 32, %v3002
        %v3004 = vshrl.u32 683565275, %v3003
        %v3005 = vshll.u32 683565275, %v3002
        %v3006 = vshrl.u32 2475754826, %v3003
        %v3007 = vor.u32 %v3005, %v3006
        %v3008 = vshll.u32 2475754826, %v3002
        %v3009 = vshrl.u32 2131351028, %v3003
        %v3010 = vor.u32 %v3008, %v3009
        %v3011 = vshll.u32 2131351028, %v3002
        %v3012 = vshrl.u32 2102212464, %v3003
        %v3013 = vor.u32 %v3011, %v3012
        %v3014 = vshll.u32 2102212464, %v3002
        %v3015 = vshrl.u32 920167782, %v3003
        %v3016 = vor.u32 %v3014, %v3015
        %v3017 = vshll.u32 920167782, %v3002
        %v3018 = vshrl.u32 1326507024, %v3003
        %v3019 = vor.u32 %v3017, %v3018
        %vm3020 = vcmp.lt.s32.totalorder %v3001, 1
        %vm3021 = vcmp.lt.s32.totalorder %v3001, 2
        %vm3022 = vcmp.lt.s32.totalorder %v3001, 3
        %vm3023 = vcmp.lt.s32.totalorder %v3001, 4
        %v3024 = vsel %vm3020, %v3004, %v3007
        %v3025 = vsel %vm3023, %v3013, 2102212464
        %v3026 = vsel %vm3022, %v3010, %v3025
        %v3027 = vsel %vm3021, %v3024, %v3026
        %v3028 = vsel %vm3020, %v3007, %v3010
        %v3029 = vsel %vm3023, %v3016, 920167782
        %v3030 = vsel %vm3022, %v3013, %v3029
        %v3031 = vsel %vm3021, %v3028, %v3030
        %v3032 = vsel %vm3020, %v3010, %v3013
        %v3033 = vsel %vm3023, %v3019, 1326507024
        %v3034 = vsel %vm3022, %v3016, %v3033
        %v3035 = vsel %vm3021, %v3032, %v3034
        %v3036 = vshll.u32 %v2996, 8
        %v3037 = vmul.u32.u64.compose %v3036, %v3035
        %v3038 = vextract.low.u32 %v3037
        %v3039 = vextract.high.u32 %v3037
        %v3040 = vmul.u32.u64.compose %v3036, %v3031
        %v3041 = vextract.low.u32 %v3040
        %v3042 = vextract.high.u32 %v3040
        %v3043 = vmul.u32 %v3036, %v3027
        %v3044 = vadd.s32 %v3039, %v3041
        %vm3045 = vc.u32 %v3039, %v3041
        %v3046 = vadd.s32 %v3042, 1
        %v3047 = vsel %vm3045, %v3046, %v3042
        %v3048 = vadd.s32 %v3043, %v3047
        %v3049 = vadd.s32 %v3048, 536870912
        %v3050 = vshrl.u32 %v3049, 30
        %v3051 = vshll.u32 %v3050, 30
        %v3052 = vsub.s32 %v3048, %v3051
        %vm3053 = vcmp.lt.s32.totalorder %v3052, 0
        %v3054 = vsub.s32 0, %v3052
        %v3055 = vsel %vm3053, %v3054, %v3052
        %v3056 = vclz %v3055
        %v3057 = vsub.s32 %v3056, 2
        %vm3058 = vcmp.gt.s32.totalorder 0, %v3057
        %v3059 = vsel %vm3058, 0, %v3057
        %v3060 = vsub.s32 32, %v3059
        %v3061 = vshll.u32 %v3052, %v3059
        %v3062 = vshrl.u32 %v3044, %v3060
        %v3063 = vor.u32 %v3061, %v3062
        %v3064 = vsub.s32 4294967266, %v3059
        %v3065 = vadd.s32 %v3064, 127
        %v3066 = vshll.u32 %v3065, 23
        %v3067 = vor.u32 4788187, %v3066
        %v3068 = vand.u32 2147483647, %v3067
        %v3070 = vcvt.s32.f32 %v3063
        %v3071 = vmul.f32 %v3070, %v3068
        %v3072 = vxor.u32 %v3071, 2147483648
        %v3073 = vsel %vm2990, %v3072, %v3071
        %v3074 = vsub.s32 4, %v3050
        %v3075 = vsel %vm2990, %v3074, %v3050
        %v3076 = vsel %vm2989, %v2242, %v3073
        %v3077 = vsel %vm2989, 0, %v3075
        %v3078 = vcosq.f32.pop %v3076
        %v3079 = vsinq.f32.pop %v3076
        %vm3080 = vweird.f32 %v2242
        %v3081 = vadd.s32 %v3077, 3
        %v3082 = vand.u32 %v3081, 3
        %vm3083 = vcmp.lt.s32.totalorder %v3082, 2
        %vm3084 = vcmp.eq.s32.totalorder %v3082, 0
        %v3085 = vxor.u32 %v3079, 2147483648
        %v3086 = vsel %vm3084, %v3078, %v3085
        %vm3087 = vcmp.eq.s32.totalorder %v3082, 2
        %v3088 = vxor.u32 %v3078, 2147483648
        %v3089 = vsel %vm3087, %v3088, %v3079
        %v3090 = vsel %vm3083, %v3086, %v3089
        %v3091 = vsel %vm3080, nan, %v3090
        %v3092 = vmul.f32 %v2252, %v2363
        %v3093 = vmul.f32 %v2253, %v2467
        %v3094 = vmul.f32 %v2254, %v2571
        %v3095 = vmul.f32 %v2255, %v2675
        %v3096 = vmul.f32 %v2256, %v2779
        %v3097 = vmul.f32 %v2257, %v2883
        %v3098 = vmul.f32 %v2258, %v2987
        %v3099 = vmul.f32 %v2259, %v3091
        %v3100 = vadd.f32 %v3092, %v3096
        %v3101 = vrot.slane %v3100, 4
        %v3102 = vadd.f32 %v3100, %v3101
        %v3103 = vrot.slane %v3102, 2
        %v3104 = vadd.f32 %v3102, %v3103
        %v3105 = vrot.slane %v3104, 1
        %v3106 = vadd.f32 %v3104, %v3105
        %v3107 = vadd.f32 %v3093, %v3097
        %v3108 = vrot.slane %v3107, 4
        %v3109 = vadd.f32 %v3107, %v3108
        %v3110 = vrot.slane %v3109, 2
        %v3111 = vadd.f32 %v3109, %v3110
        %v3112 = vrot.slane %v3111, 1
        %v3113 = vadd.f32 %v3111, %v3112
        %v3114 = vadd.f32 %v3094, %v3098
        %v3115 = vrot.slane %v3114, 4
        %v3116 = vadd.f32 %v3114, %v3115
        %v3117 = vrot.slane %v3116, 2
        %v3118 = vadd.f32 %v3116, %v3117
        %v3119 = vrot.slane %v3118, 1
        %v3120 = vadd.f32 %v3118, %v3119
        %v3121 = vadd.f32 %v3095, %v3099
        %v3122 = vrot.slane %v3121, 4
        %v3123 = vadd.f32 %v3121, %v3122
        %v3124 = vrot.slane %v3123, 2
        %v3125 = vadd.f32 %v3123, %v3124
        %v3126 = vrot.slane %v3125, 1
        %v3127 = vadd.f32 %v3125, %v3126
        %v3132 = vcombine.low %v3106, %v3113
        %v3133 = vcombine.low %v3120, %v3127
        %v3135 = vunpack.c.l.s4 1966171168
        %v3136 = vunpack.c.0.s8 %v3135
        %v3137 = vlaneseq
        %v3138 = vshrl.u32 %v3137, 7
        %v3139 = vsub.s32 %v3136, %v3138
        %v3140 = vrot.slane %v3132, %v3139
        %v3142 = vunpack.c.l.s4 1966171168
        %v3143 = vunpack.c.0.s8 %v3142
        %v3144 = vlaneseq
        %v3145 = vshrl.u32 %v3144, 7
        %v3146 = vsub.s32 %v3143, %v3145
        %v3147 = vrot.slane %v3133, %v3146
        %v3148 = vcombine.low %v3140, %v3147
        %v3150 = vunpack.c.l.s4 1966171168
        %v3151 = vunpack.c.0.s8 %v3150
        %v3152 = vlaneseq
        %v3153 = vshrl.u32 %v3152, 7
        %v3154 = vsub.s32 %v3151, %v3153
        %v3155 = vrot.slane %v3148, %v3154
        %s3157 = scalar_lea.vmem %s326, 4 [#allocation8]
        %3158 = vst.msk [vmem:[%s3157] sm:$0xf] %vm1770, %v3155
        %v3159 = vrcp.pop 6.2831855
        %v3160 = vmul.f32 %v2236, %v3159
        %v3161 = vmul.f32 %v2242, %v3159
        %v3162 = vfloor.f32 %v3160
        %v3163 = vfloor.f32 %v3161
        %v3164 = vmul.f32 %v3162, 6.2831855
        %v3165 = vmul.f32 %v3163, 6.2831855
        %v3166 = vsub.f32 %v2236, %v3164
        %v3167 = vsub.f32 %v2242, %v3165
        %3170 = vrot.lane.b32.xlu0 %v3166, 1
        %v3171 = vpop.permute.xlu0 %3170
        %3172 = vrot.lane.b32.xlu0 %v3167, 1
        %v3173 = vpop.permute.xlu0 %3172
        %vm3176 = vcmask 7168
        %3177 = vst.msk [vmem:[#allocation2] sm:$0xff] %vm3176, %v3171
        %3178 = vst.msk [vmem:[#allocation2 + $0x8] sm:$0xff] %vm3176, %v3173
        %s3179 = sand.u32 %s163, 1
        %s3180 = scalar_lea.sflag [#allocation5], %s3179
        %s3181 = sand.u32 %s163, 1
        %s3182 = smul.addr %s3181, 8
        %s3183 = scalar_lea.vmem [#allocation8], %s3182
        // Predicated region
        $region49: #{tpu_custom_call.1} parent=35 // pred_check
          %p3184 = pneg %p173
        $region50: #{tpu_custom_call.1} parent=35 // pred_check_branch
          %3186 = sbr.rel (%p3184) target = $region52
        $region51: #{tpu_custom_call.1} parent=35 // pred_region
          %s3187 = smul.u32 8, %s31
          %s3189 = ssub.s32 128, 128
          %3190 = vsyncadd %s3180, %s3189
          %s3191 = smul.addr %s30, 16
          %s3192 = sadd.s32 %s3187, %s3191
          %s3193 = smul.addr %s29, 32
          %s3194 = sadd.s32 %s3192, %s3193
          %s3195 = smul.addr %s3194, 16
          %s3196 = scalar_lea.hbm %s4, %s3195
          %s3198 = sshll.u32 %s3183, 4
          %s3199 = int_to_ptr.vmem [resolvable:$true] %s3198
          %3201 = dma.vmem_to_hbm [thread:$0]  %s3199, 128, %s3196, %s3180
        $region52: #{tpu_custom_call.1} parent=35 // pred_fallthru
          _
      $region36: #{tpu_custom_call.1} parent=5 // pred_fallthru
        _
      %p3202 = scmp.le.s32.totalorder 2, %s19
      // Predicated region
      $region53: #{tpu_custom_call.1} parent=5 // pred_check
        %p3203 = pneg %p3202
      $region54: #{tpu_custom_call.1} parent=5 // pred_check_branch
        %3205 = sbr.rel (%p3203) target = $region56
      $region55: #{tpu_custom_call.1} parent=5 // pred_region
        %s3206 = ssub.s32 %s19, 2
        // Predicated region
        $region57: #{tpu_custom_call.1} parent=55 // pred_check
          %p3207 = pneg %p179
        $region58: #{tpu_custom_call.1} parent=55 // pred_check_branch
          %3209 = sbr.rel (%p3207) target = $region60
        $region59: #{tpu_custom_call.1} parent=55 // pred_region
          %s3210 = sand.u32 %s164, 1
          %s3211 = scalar_lea.sflag [#allocation5], %s3210
          %s3212 = sand.u32 %s164, 1
          %s3213 = smul.addr %s3212, 8
          %s3214 = scalar_lea.vmem [#allocation8], %s3213
          %3215 = dma.done %s3211, 128
        $region60: #{tpu_custom_call.1} parent=55 // pred_fallthru
          _
      $region56: #{tpu_custom_call.1} parent=5 // pred_fallthru
        _
    $region6: #{tpu_custom_call.1} parent=1 // loop_footer
      %s23 = sadd.s32 1, %s19
    $region7: #{tpu_custom_call.1} parent=1 // loop_footer_branch
      %18 = sbr.rel target = $region3
    $region8: #{tpu_custom_call.1} parent=1 // loop_exit
      _
    %3216 = vsyncpa [#allocation4], 1
    %s3217 = scalar_lea.sflag [#allocation4], 1
    %3218 = vsyncpa %s3217, 1
    %3219 = vsyncpa [#allocation7], 1
    %s3220 = scalar_lea.sflag [#allocation7], 1
    %3221 = vsyncpa %s3220, 1
    %3222 = vsyncpa [#allocation5], 1
    %s3223 = scalar_lea.sflag [#allocation5], 1
    %3224 = vsyncpa %s3223, 1

</llo_original>
